<compile_context>
chip_gen: v7x
topology: tpu7x:2x2x1
jax: 0.10.0
libtpu: 0.0.40
codegen_flags: <defaults>
</compile_context>

<pallas_src>
import functools

import jax
import jax.numpy as jnp
import numpy as np
from jax.experimental import pallas as pl
from jax.experimental.pallas import tpu as pltpu

CP = 128  # lane-padded channel width


def _ceil_to(x, m):
    return (x + m - 1) // m * m


# ------------------------------ fused kernel ------------------------------- #

def _down_block_kernel(xd_ref, wd_ref, bd_ref, w1_ref, b1_ref, w2_ref, b2_ref,
                       mask_ref, out_ref, dpad_ref, o1pad_ref, *, wp, mb):
    """One batch element.  Spatial maps are row-flattened over the zero-padded
    (Ho+2, Wo+2) grid ("anchor" layout): flat row q = pi*wp + pj.

    xd_ref   : (PR, KD)  bf16  downconv patches at interior rows, 0 on halo
    wd_ref   : (KD, CP)  bf16  downconv GEMM weight (lane-padded out channels)
    w1/w2    : (9, CP, CP) bf16  3x3 taps, zero-padded in/out channels
    b*_ref   : (1, CP)   f32
    mask_ref : (PR, 1)   f32   1.0 at interior rows, 0.0 on the halo
    out_ref  : (MB, CP)  f32   conv2+residual+ReLU at band rows r = i*wp + j
    dpad_ref / o1pad_ref : (PR, CP) bf16 VMEM scratch (padded down / out1)
    """
    start = wp + 1                                   # flat offset of pixel (0,0)
    offs = [kh * wp + kw for kh in range(3) for kw in range(3)]
    cp = out_ref.shape[-1]

    # ---- downconv (k=2, s=2) as one GEMM + bias + ReLU (activation1) ----
    d = jnp.dot(xd_ref[...], wd_ref[...], preferred_element_type=jnp.float32)
    d = jnp.maximum(d + bd_ref[...], 0.0) * mask_ref[...]    # halo rows -> 0
    dpad_ref[...] = d.astype(dpad_ref.dtype)                 # bf16 for the MXU
    d_res = d[start:start + mb, :]                           # f32 residual (band)
    band_mask = mask_ref[pl.ds(start, mb), :]

    # ---- conv1 (3x3) as 9 shifted matmuls + bias + ReLU (activation2) ----
    acc = jnp.zeros((mb, cp), jnp.float32)
    for t, off in enumerate(offs):
        acc += jnp.dot(dpad_ref[pl.ds(off, mb), :], w1_ref[t],
                       preferred_element_type=jnp.float32)
    o1 = jnp.maximum(acc + b1_ref[...], 0.0) * band_mask
    o1pad_ref[...] = jnp.zeros(o1pad_ref.shape, o1pad_ref.dtype)
    o1pad_ref[pl.ds(start, mb), :] = o1.astype(o1pad_ref.dtype)

    # ---- conv2 (3x3) + residual + ReLU (activation3) ----
    acc = jnp.zeros((mb, cp), jnp.float32)
    for t, off in enumerate(offs):
        acc += jnp.dot(o1pad_ref[pl.ds(off, mb), :], w2_ref[t],
                       preferred_element_type=jnp.float32)
    out_ref[...] = jnp.maximum(acc + b2_ref[...] + d_res, 0.0)


# --------------------------------- wrapper ---------------------------------- #

def down_block_forward(x_nchw, params, compute_dtype=jnp.bfloat16):
    """DownBlock.forward (batchnorm=False, squeeze=False, residual=True)."""
    n, c_in, h, w = x_nchw.shape
    c = params["b_down"].shape[0]
    assert c <= CP and 4 * c_in <= CP

    # Output spatial size of Conv2d(k=2, s=2, p=1).
    ho = (h + 2 - 2) // 2 + 1
    wo = (w + 2 - 2) // 2 + 1
    hp, wp = ho + 2, wo + 2                  # zero-padded grid for the 3x3 convs
    start = wp + 1                           # flat index of padded pixel (1, 1)
    mb = _ceil_to((ho - 1) * wp + wo, 8)     # band rows covering all outputs
    pr = _ceil_to(max(hp * wp, 2 * wp + 2 + mb, start + mb), 8)
    kd = 4 * c_in

    # ---- tiny XLA-side layout glue: NCHW -> NHWC, downconv patch packing ----
    # TODO(synk): keep activations NHWC end-to-end in the surrounding model to
    # drop these boundary transposes.
    x = jnp.transpose(x_nchw, (0, 2, 3, 1)).astype(compute_dtype)
    xp = jnp.pad(x, ((0, 0), (1, 1), (1, 1), (0, 0)))
    taps = [xp[:, kh::2, kw::2, :][:, :ho, :wo, :]
            for kh in (0, 1) for kw in (0, 1)]
    patches = jnp.concatenate(taps, axis=-1)                  # (N, Ho, Wo, 4*Cin)
    patches = jnp.pad(patches, ((0, 0), (1, 1), (1, 1), (0, 0)))
    xd = patches.reshape(n, hp * wp, kd)
    xd = jnp.pad(xd, ((0, 0), (0, pr - hp * wp), (0, 0)))     # (N, PR, KD)

    # ---- weights / biases: lane-pad out (and 3x3 in) channels to CP; bf16 ----
    wd = jnp.pad(params["w_down"].reshape(kd, c),
                 ((0, 0), (0, CP - c))).astype(compute_dtype)             # (KD, CP)
    w1 = jnp.pad(params["w1"].reshape(9, c, c),
                 ((0, 0), (0, CP - c), (0, CP - c))).astype(compute_dtype)
    w2 = jnp.pad(params["w2"].reshape(9, c, c),
                 ((0, 0), (0, CP - c), (0, CP - c))).astype(compute_dtype)
    bias = lambda b: jnp.pad(b, (0, CP - c)).reshape(1, CP).astype(jnp.float32)
    bd, b1, b2 = bias(params["b_down"]), bias(params["b1"]), bias(params["b2"])

    # Interior mask over the padded flat grid (trace-time numpy constant).
    q = np.arange(pr)
    pi, pj = q // wp, q % wp
    interior = (q < hp * wp) & (pi >= 1) & (pi <= ho) & (pj >= 1) & (pj <= wo)
    mask = jnp.asarray(interior.astype(np.float32).reshape(pr, 1))

    kernel = functools.partial(_down_block_kernel, wp=wp, mb=mb)
    out_raw = pl.pallas_call(
        kernel,
        out_shape=jax.ShapeDtypeStruct((n, mb, CP), jnp.float32),
        grid=(n,),
        in_specs=[
            pl.BlockSpec((None, pr, kd), lambda i: (i, 0, 0)),      # xd
            pl.BlockSpec((kd, CP), lambda i: (0, 0)),               # wd
            pl.BlockSpec((1, CP), lambda i: (0, 0)),                # bd
            pl.BlockSpec((9, CP, CP), lambda i: (0, 0, 0)),         # w1
            pl.BlockSpec((1, CP), lambda i: (0, 0)),                # b1
            pl.BlockSpec((9, CP, CP), lambda i: (0, 0, 0)),         # w2
            pl.BlockSpec((1, CP), lambda i: (0, 0)),                # b2
            pl.BlockSpec((pr, 1), lambda i: (0, 0)),                # mask
        ],
        out_specs=pl.BlockSpec((None, mb, CP), lambda i: (i, 0, 0)),
        scratch_shapes=[pltpu.VMEM((pr, CP), compute_dtype),        # padded down
                        pltpu.VMEM((pr, CP), compute_dtype)],       # padded out1
        compiler_params=pltpu.CompilerParams(
            dimension_semantics=("parallel",),      # v7x: shard batch over 2 TCs
            vmem_limit_bytes=32 * 1024 * 1024),
    )(xd, wd, bd, w1, b1, w2, b2, mask)

    # Unpack band rows r = i*wp + j -> (N, Ho, Wo, C) -> NCHW.
    out = out_raw[:, :ho * wp, :c].reshape(n, ho, wp, c)[:, :, :wo, :]
    return jnp.transpose(out, (0, 3, 1, 2))

# TODO(synk): batchnorm / SqueezeExcitation branches are disabled in the default
# module config (batchnorm=False, squeeze=False) and are not implemented here.
# TODO(synk): for large H*W, add a second grid axis tiling output rows (with a
# 1-row halo) instead of holding the whole per-batch image in VMEM.


# ------------------------- pure-JAX reference check ------------------------- #

def _ref_forward(x_nchw, params, compute_dtype=jnp.bfloat16):
    """Reference with the same bf16-input / f32-accumulate contract as the kernel."""
    def conv(a, w_hwio, stride, pad):
        return jax.lax.conv_general_dilated(
            a.astype(compute_dtype), w_hwio.astype(compute_dtype),
            window_strides=(stride, stride),
            padding=((pad, pad), (pad, pad)),
            dimension_numbers=("NHWC", "HWIO", "NHWC"),
            preferred_element_type=jnp.float32)

    x = jnp.transpose(x_nchw, (0, 2, 3, 1))
    down = jax.nn.relu(conv(x, params["w_down"], 2, 1)
                       + params["b_down"].reshape(1, 1, 1, -1))
    o1 = jax.nn.relu(conv(down, params["w1"], 1, 1)
                     + params["b1"].reshape(1, 1, 1, -1))
    o2 = conv(o1, params["w2"], 1, 1) + params["b2"].reshape(1, 1, 1, -1) + down
    return jnp.transpose(jax.nn.relu(o2), (0, 3, 1, 2))


# ---------------------------------- main ------------------------------------ #

if __name__ == "__main__":
    N, C_IN, H, W = 2, 4, 16, 16
    C = 8  # `channels`

    key = jax.random.PRNGKey(0)
    kx, kd_, kbd, k1, kb1, k2, kb2 = jax.random.split(key, 7)

    x = jax.random.normal(kx, (N, C_IN, H, W), dtype=jnp.float32)

    # Weights in HWIO layout; biases as (C,).
    params = {
        "w_down": 0.2 * jax.random.normal(kd_, (2, 2, C_IN, C), jnp.float32),
        "b_down": 0.1 * jax.random.normal(kbd, (C,), jnp.float32),
        "w1": 0.1 * jax.random.normal(k1, (3, 3, C, C), jnp.float32),
        "b1": 0.1 * jax.random.normal(kb1, (C,), jnp.float32),
        "w2": 0.1 * jax.random.normal(k2, (3, 3, C, C), jnp.float32),
        "b2": 0.1 * jax.random.normal(kb2, (C,), jnp.float32),
    }

    out = jax.block_until_ready(jax.jit(down_block_forward)(x, params))
    ref = jax.block_until_ready(_ref_forward(x, params))

    assert out.shape == (N, C, H // 2 + 1, W // 2 + 1), out.shape
    max_err = float(jnp.max(jnp.abs(out - ref)))
    assert jnp.allclose(out, ref, atol=2e-3, rtol=2e-3), max_err

    print("KERNEL_OK")
</pallas_src>

<mosaic_0001>
module attributes {stable_mosaic.version = 11 : i64} {
  func.func @_down_block_kernel(%arg0: i32, %arg1: memref<1x128x16xbf16, #tpu.memory_space<vmem>>, %arg2: memref<16x128xbf16, #tpu.memory_space<vmem>>, %arg3: memref<1x128xf32, #tpu.memory_space<vmem>>, %arg4: memref<9x128x128xbf16, #tpu.memory_space<vmem>>, %arg5: memref<1x128xf32, #tpu.memory_space<vmem>>, %arg6: memref<9x128x128xbf16, #tpu.memory_space<vmem>>, %arg7: memref<1x128xf32, #tpu.memory_space<vmem>>, %arg8: memref<128x1xf32, #tpu.memory_space<vmem>>, %arg9: memref<1x104x128xf32, #tpu.memory_space<vmem>>, %arg10: memref<128x128xbf16, #tpu.memory_space<vmem>>, %arg11: memref<128x128xbf16, #tpu.memory_space<vmem>>) attributes {dimension_semantics = [#tpu.dimension_semantics<parallel>], iteration_bounds = array<i64: 2>, scalar_prefetch = 0 : i64, scratch_operands = 2 : i64, tpu.core_type = #tpu.core_type<tc>, window_params = [{transform_indices = @transform_0, window_bounds = array<i64: 1, 128, 16>}, {pipeline_mode = #tpu.pipeline_mode<synchronous>, transform_indices = @transform_1, window_bounds = array<i64: 16, 128>}, {pipeline_mode = #tpu.pipeline_mode<synchronous>, transform_indices = @transform_2, window_bounds = array<i64: 1, 128>}, {pipeline_mode = #tpu.pipeline_mode<synchronous>, transform_indices = @transform_3, window_bounds = array<i64: 9, 128, 128>}, {pipeline_mode = #tpu.pipeline_mode<synchronous>, transform_indices = @transform_4, window_bounds = array<i64: 1, 128>}, {pipeline_mode = #tpu.pipeline_mode<synchronous>, transform_indices = @transform_5, window_bounds = array<i64: 9, 128, 128>}, {pipeline_mode = #tpu.pipeline_mode<synchronous>, transform_indices = @transform_6, window_bounds = array<i64: 1, 128>}, {pipeline_mode = #tpu.pipeline_mode<synchronous>, transform_indices = @transform_7, window_bounds = array<i64: 128, 1>}, {transform_indices = @transform_8, window_bounds = array<i64: 1, 104, 128>}]} {
    %c0 = arith.constant 0 : index
    %c0_0 = arith.constant 0 : index
    %c0_1 = arith.constant 0 : index
    %0 = vector.load %arg1[%c0, %c0_0, %c0_1] : memref<1x128x16xbf16, #tpu.memory_space<vmem>>, vector<1x128x16xbf16>
    %1 = vector.shape_cast %0 : vector<1x128x16xbf16> to vector<128x16xbf16>
    %c0_2 = arith.constant 0 : index
    %c0_3 = arith.constant 0 : index
    %2 = vector.load %arg2[%c0_2, %c0_3] : memref<16x128xbf16, #tpu.memory_space<vmem>>, vector<16x128xbf16>
    %cst = arith.constant dense<0.000000e+00> : vector<128x128xf32>
    %3 = tpu.matmul %1, %2, %cst {dimension_numbers = #tpu.dot_dimension_numbers<[1], [0], [0], [1], [0, 0, 1, 1], [], []>} : vector<128x16xbf16>, vector<16x128xbf16>, vector<128x128xf32> -> vector<128x128xf32>
    %c0_4 = arith.constant 0 : index
    %c0_5 = arith.constant 0 : index
    %4 = vector.load %arg3[%c0_4, %c0_5] : memref<1x128xf32, #tpu.memory_space<vmem>>, vector<1x128xf32>
    %5 = vector.broadcast %4 : vector<1x128xf32> to vector<128x128xf32>
    %6 = arith.addf %3, %5 : vector<128x128xf32>
    %cst_6 = arith.constant 0.000000e+00 : f32
    %7 = vector.broadcast %cst_6 : f32 to vector<128x128xf32>
    %8 = arith.maximumf %6, %7 : vector<128x128xf32>
    %c0_7 = arith.constant 0 : index
    %c0_8 = arith.constant 0 : index
    %9 = vector.load %arg8[%c0_7, %c0_8] : memref<128x1xf32, #tpu.memory_space<vmem>>, vector<128x1xf32>
    %10 = vector.broadcast %9 : vector<128x1xf32> to vector<128x128xf32>
    %11 = arith.mulf %8, %10 : vector<128x128xf32>
    %12 = arith.truncf %11 : vector<128x128xf32> to vector<128x128xbf16>
    %c0_9 = arith.constant 0 : index
    %c0_10 = arith.constant 0 : index
    %13 = vector.load %arg10[%c0_9, %c0_10] : memref<128x128xbf16, #tpu.memory_space<vmem>>, vector<128x128xbf16>
    tpu.vector_store %arg10[%c0_9, %c0_10], %12 {strides = array<i32>} : memref<128x128xbf16, #tpu.memory_space<vmem>>, vector<128x128xbf16>,
    %14 = vector.extract_strided_slice %11 {offsets = [12, 0], sizes = [104, 128], strides = [1, 1]} : vector<128x128xf32> to vector<104x128xf32>
    %c12 = arith.constant 12 : index
    %c0_11 = arith.constant 0 : index
    %15 = vector.load %arg8[%c12, %c0_11] : memref<128x1xf32, #tpu.memory_space<vmem>>, vector<104x1xf32>
    %cst_12 = arith.constant 0.000000e+00 : f32
    %16 = vector.broadcast %cst_12 : f32 to vector<104x128xf32>
    %c0_13 = arith.constant 0 : index
    %c0_14 = arith.constant 0 : index
    %17 = vector.load %arg10[%c0_13, %c0_14] : memref<128x128xbf16, #tpu.memory_space<vmem>>, vector<104x128xbf16>
    %c0_15 = arith.constant 0 : index
    %c0_16 = arith.constant 0 : index
    %c0_17 = arith.constant 0 : index
    %18 = vector.load %arg4[%c0_15, %c0_16, %c0_17] : memref<9x128x128xbf16, #tpu.memory_space<vmem>>, vector<1x128x128xbf16>
    %19 = vector.shape_cast %18 : vector<1x128x128xbf16> to vector<128x128xbf16>
    %cst_18 = arith.constant dense<0.000000e+00> : vector<104x128xf32>
    %20 = tpu.matmul %17, %19, %cst_18 {dimension_numbers = #tpu.dot_dimension_numbers<[1], [0], [0], [1], [0, 0, 1, 1], [], []>} : vector<104x128xbf16>, vector<128x128xbf16>, vector<104x128xf32> -> vector<104x128xf32>
    %21 = arith.addf %16, %20 : vector<104x128xf32>
    %c1 = arith.constant 1 : index
    %c0_19 = arith.constant 0 : index
    %22 = vector.load %arg10[%c1, %c0_19] : memref<128x128xbf16, #tpu.memory_space<vmem>>, vector<104x128xbf16>
    %c1_20 = arith.constant 1 : index
    %c0_21 = arith.constant 0 : index
    %c0_22 = arith.constant 0 : index
    %23 = vector.load %arg4[%c1_20, %c0_21, %c0_22] : memref<9x128x128xbf16, #tpu.memory_space<vmem>>, vector<1x128x128xbf16>
    %24 = vector.shape_cast %23 : vector<1x128x128xbf16> to vector<128x128xbf16>
    %cst_23 = arith.constant dense<0.000000e+00> : vector<104x128xf32>
    %25 = tpu.matmul %22, %24, %cst_23 {dimension_numbers = #tpu.dot_dimension_numbers<[1], [0], [0], [1], [0, 0, 1, 1], [], []>} : vector<104x128xbf16>, vector<128x128xbf16>, vector<104x128xf32> -> vector<104x128xf32>
    %26 = arith.addf %21, %25 : vector<104x128xf32>
    %c2 = arith.constant 2 : index
    %c0_24 = arith.constant 0 : index
    %27 = vector.load %arg10[%c2, %c0_24] : memref<128x128xbf16, #tpu.memory_space<vmem>>, vector<104x128xbf16>
    %c2_25 = arith.constant 2 : index
    %c0_26 = arith.constant 0 : index
    %c0_27 = arith.constant 0 : index
    %28 = vector.load %arg4[%c2_25, %c0_26, %c0_27] : memref<9x128x128xbf16, #tpu.memory_space<vmem>>, vector<1x128x128xbf16>
    %29 = vector.shape_cast %28 : vector<1x128x128xbf16> to vector<128x128xbf16>
    %cst_28 = arith.constant dense<0.000000e+00> : vector<104x128xf32>
    %30 = tpu.matmul %27, %29, %cst_28 {dimension_numbers = #tpu.dot_dimension_numbers<[1], [0], [0], [1], [0, 0, 1, 1], [], []>} : vector<104x128xbf16>, vector<128x128xbf16>, vector<104x128xf32> -> vector<104x128xf32>
    %31 = arith.addf %26, %30 : vector<104x128xf32>
    %c11 = arith.constant 11 : index
    %c0_29 = arith.constant 0 : index
    %32 = vector.load %arg10[%c11, %c0_29] : memref<128x128xbf16, #tpu.memory_space<vmem>>, vector<104x128xbf16>
    %c3 = arith.constant 3 : index
    %c0_30 = arith.constant 0 : index
    %c0_31 = arith.constant 0 : index
    %33 = vector.load %arg4[%c3, %c0_30, %c0_31] : memref<9x128x128xbf16, #tpu.memory_space<vmem>>, vector<1x128x128xbf16>
    %34 = vector.shape_cast %33 : vector<1x128x128xbf16> to vector<128x128xbf16>
    %cst_32 = arith.constant dense<0.000000e+00> : vector<104x128xf32>
    %35 = tpu.matmul %32, %34, %cst_32 {dimension_numbers = #tpu.dot_dimension_numbers<[1], [0], [0], [1], [0, 0, 1, 1], [], []>} : vector<104x128xbf16>, vector<128x128xbf16>, vector<104x128xf32> -> vector<104x128xf32>
    %36 = arith.addf %31, %35 : vector<104x128xf32>
    %c12_33 = arith.constant 12 : index
    %c0_34 = arith.constant 0 : index
    %37 = vector.load %arg10[%c12_33, %c0_34] : memref<128x128xbf16, #tpu.memory_space<vmem>>, vector<104x128xbf16>
    %c4 = arith.constant 4 : index
    %c0_35 = arith.constant 0 : index
    %c0_36 = arith.constant 0 : index
    %38 = vector.load %arg4[%c4, %c0_35, %c0_36] : memref<9x128x128xbf16, #tpu.memory_space<vmem>>, vector<1x128x128xbf16>
    %39 = vector.shape_cast %38 : vector<1x128x128xbf16> to vector<128x128xbf16>
    %cst_37 = arith.constant dense<0.000000e+00> : vector<104x128xf32>
    %40 = tpu.matmul %37, %39, %cst_37 {dimension_numbers = #tpu.dot_dimension_numbers<[1], [0], [0], [1], [0, 0, 1, 1], [], []>} : vector<104x128xbf16>, vector<128x128xbf16>, vector<104x128xf32> -> vector<104x128xf32>
    %41 = arith.addf %36, %40 : vector<104x128xf32>
    %c13 = arith.constant 13 : index
    %c0_38 = arith.constant 0 : index
    %42 = vector.load %arg10[%c13, %c0_38] : memref<128x128xbf16, #tpu.memory_space<vmem>>, vector<104x128xbf16>
    %c5 = arith.constant 5 : index
    %c0_39 = arith.constant 0 : index
    %c0_40 = arith.constant 0 : index
    %43 = vector.load %arg4[%c5, %c0_39, %c0_40] : memref<9x128x128xbf16, #tpu.memory_space<vmem>>, vector<1x128x128xbf16>
    %44 = vector.shape_cast %43 : vector<1x128x128xbf16> to vector<128x128xbf16>
    %cst_41 = arith.constant dense<0.000000e+00> : vector<104x128xf32>
    %45 = tpu.matmul %42, %44, %cst_41 {dimension_numbers = #tpu.dot_dimension_numbers<[1], [0], [0], [1], [0, 0, 1, 1], [], []>} : vector<104x128xbf16>, vector<128x128xbf16>, vector<104x128xf32> -> vector<104x128xf32>
    %46 = arith.addf %41, %45 : vector<104x128xf32>
    %c22 = arith.constant 22 : index
    %c0_42 = arith.constant 0 : index
    %47 = vector.load %arg10[%c22, %c0_42] : memref<128x128xbf16, #tpu.memory_space<vmem>>, vector<104x128xbf16>
    %c6 = arith.constant 6 : index
    %c0_43 = arith.constant 0 : index
    %c0_44 = arith.constant 0 : index
    %48 = vector.load %arg4[%c6, %c0_43, %c0_44] : memref<9x128x128xbf16, #tpu.memory_space<vmem>>, vector<1x128x128xbf16>
    %49 = vector.shape_cast %48 : vector<1x128x128xbf16> to vector<128x128xbf16>
    %cst_45 = arith.constant dense<0.000000e+00> : vector<104x128xf32>
    %50 = tpu.matmul %47, %49, %cst_45 {dimension_numbers = #tpu.dot_dimension_numbers<[1], [0], [0], [1], [0, 0, 1, 1], [], []>} : vector<104x128xbf16>, vector<128x128xbf16>, vector<104x128xf32> -> vector<104x128xf32>
    %51 = arith.addf %46, %50 : vector<104x128xf32>
    %c23 = arith.constant 23 : index
    %c0_46 = arith.constant 0 : index
    %52 = vector.load %arg10[%c23, %c0_46] : memref<128x128xbf16, #tpu.memory_space<vmem>>, vector<104x128xbf16>
    %c7 = arith.constant 7 : index
    %c0_47 = arith.constant 0 : index
    %c0_48 = arith.constant 0 : index
    %53 = vector.load %arg4[%c7, %c0_47, %c0_48] : memref<9x128x128xbf16, #tpu.memory_space<vmem>>, vector<1x128x128xbf16>
    %54 = vector.shape_cast %53 : vector<1x128x128xbf16> to vector<128x128xbf16>
    %cst_49 = arith.constant dense<0.000000e+00> : vector<104x128xf32>
    %55 = tpu.matmul %52, %54, %cst_49 {dimension_numbers = #tpu.dot_dimension_numbers<[1], [0], [0], [1], [0, 0, 1, 1], [], []>} : vector<104x128xbf16>, vector<128x128xbf16>, vector<104x128xf32> -> vector<104x128xf32>
    %56 = arith.addf %51, %55 : vector<104x128xf32>
    %c24 = arith.constant 24 : index
    %c0_50 = arith.constant 0 : index
    %57 = vector.load %arg10[%c24, %c0_50] : memref<128x128xbf16, #tpu.memory_space<vmem>>, vector<104x128xbf16>
    %c8 = arith.constant 8 : index
    %c0_51 = arith.constant 0 : index
    %c0_52 = arith.constant 0 : index
    %58 = vector.load %arg4[%c8, %c0_51, %c0_52] : memref<9x128x128xbf16, #tpu.memory_space<vmem>>, vector<1x128x128xbf16>
    %59 = vector.shape_cast %58 : vector<1x128x128xbf16> to vector<128x128xbf16>
    %cst_53 = arith.constant dense<0.000000e+00> : vector<104x128xf32>
    %60 = tpu.matmul %57, %59, %cst_53 {dimension_numbers = #tpu.dot_dimension_numbers<[1], [0], [0], [1], [0, 0, 1, 1], [], []>} : vector<104x128xbf16>, vector<128x128xbf16>, vector<104x128xf32> -> vector<104x128xf32>
    %61 = arith.addf %56, %60 : vector<104x128xf32>
    %c0_54 = arith.constant 0 : index
    %c0_55 = arith.constant 0 : index
    %62 = vector.load %arg5[%c0_54, %c0_55] : memref<1x128xf32, #tpu.memory_space<vmem>>, vector<1x128xf32>
    %63 = vector.broadcast %62 : vector<1x128xf32> to vector<104x128xf32>
    %64 = arith.addf %61, %63 : vector<104x128xf32>
    %cst_56 = arith.constant 0.000000e+00 : f32
    %65 = vector.broadcast %cst_56 : f32 to vector<104x128xf32>
    %66 = arith.maximumf %64, %65 : vector<104x128xf32>
    %67 = vector.broadcast %15 : vector<104x1xf32> to vector<104x128xf32>
    %68 = arith.mulf %66, %67 : vector<104x128xf32>
    %cst_57 = arith.constant 0.000000e+00 : bf16
    %69 = vector.broadcast %cst_57 : bf16 to vector<128x128xbf16>
    %c0_58 = arith.constant 0 : index
    %c0_59 = arith.constant 0 : index
    %70 = vector.load %arg11[%c0_58, %c0_59] : memref<128x128xbf16, #tpu.memory_space<vmem>>, vector<128x128xbf16>
    tpu.vector_store %arg11[%c0_58, %c0_59], %69 {strides = array<i32>} : memref<128x128xbf16, #tpu.memory_space<vmem>>, vector<128x128xbf16>,
    %71 = arith.truncf %68 : vector<104x128xf32> to vector<104x128xbf16>
    %c12_60 = arith.constant 12 : index
    %c0_61 = arith.constant 0 : index
    %72 = vector.load %arg11[%c12_60, %c0_61] : memref<128x128xbf16, #tpu.memory_space<vmem>>, vector<104x128xbf16>
    tpu.vector_store %arg11[%c12_60, %c0_61], %71 {strides = array<i32>} : memref<128x128xbf16, #tpu.memory_space<vmem>>, vector<104x128xbf16>,
    %cst_62 = arith.constant 0.000000e+00 : f32
    %73 = vector.broadcast %cst_62 : f32 to vector<104x128xf32>
    %c0_63 = arith.constant 0 : index
    %c0_64 = arith.constant 0 : index
    %74 = vector.load %arg11[%c0_63, %c0_64] : memref<128x128xbf16, #tpu.memory_space<vmem>>, vector<104x128xbf16>
    %c0_65 = arith.constant 0 : index
    %c0_66 = arith.constant 0 : index
    %c0_67 = arith.constant 0 : index
    %75 = vector.load %arg6[%c0_65, %c0_66, %c0_67] : memref<9x128x128xbf16, #tpu.memory_space<vmem>>, vector<1x128x128xbf16>
    %76 = vector.shape_cast %75 : vector<1x128x128xbf16> to vector<128x128xbf16>
    %cst_68 = arith.constant dense<0.000000e+00> : vector<104x128xf32>
    %77 = tpu.matmul %74, %76, %cst_68 {dimension_numbers = #tpu.dot_dimension_numbers<[1], [0], [0], [1], [0, 0, 1, 1], [], []>} : vector<104x128xbf16>, vector<128x128xbf16>, vector<104x128xf32> -> vector<104x128xf32>
    %78 = arith.addf %73, %77 : vector<104x128xf32>
    %c1_69 = arith.constant 1 : index
    %c0_70 = arith.constant 0 : index
    %79 = vector.load %arg11[%c1_69, %c0_70] : memref<128x128xbf16, #tpu.memory_space<vmem>>, vector<104x128xbf16>
    %c1_71 = arith.constant 1 : index
    %c0_72 = arith.constant 0 : index
    %c0_73 = arith.constant 0 : index
    %80 = vector.load %arg6[%c1_71, %c0_72, %c0_73] : memref<9x128x128xbf16, #tpu.memory_space<vmem>>, vector<1x128x128xbf16>
    %81 = vector.shape_cast %80 : vector<1x128x128xbf16> to vector<128x128xbf16>
    %cst_74 = arith.constant dense<0.000000e+00> : vector<104x128xf32>
    %82 = tpu.matmul %79, %81, %cst_74 {dimension_numbers = #tpu.dot_dimension_numbers<[1], [0], [0], [1], [0, 0, 1, 1], [], []>} : vector<104x128xbf16>, vector<128x128xbf16>, vector<104x128xf32> -> vector<104x128xf32>
    %83 = arith.addf %78, %82 : vector<104x128xf32>
    %c2_75 = arith.constant 2 : index
    %c0_76 = arith.constant 0 : index
    %84 = vector.load %arg11[%c2_75, %c0_76] : memref<128x128xbf16, #tpu.memory_space<vmem>>, vector<104x128xbf16>
    %c2_77 = arith.constant 2 : index
    %c0_78 = arith.constant 0 : index
    %c0_79 = arith.constant 0 : index
    %85 = vector.load %arg6[%c2_77, %c0_78, %c0_79] : memref<9x128x128xbf16, #tpu.memory_space<vmem>>, vector<1x128x128xbf16>
    %86 = vector.shape_cast %85 : vector<1x128x128xbf16> to vector<128x128xbf16>
    %cst_80 = arith.constant dense<0.000000e+00> : vector<104x128xf32>
    %87 = tpu.matmul %84, %86, %cst_80 {dimension_numbers = #tpu.dot_dimension_numbers<[1], [0], [0], [1], [0, 0, 1, 1], [], []>} : vector<104x128xbf16>, vector<128x128xbf16>, vector<104x128xf32> -> vector<104x128xf32>
    %88 = arith.addf %83, %87 : vector<104x128xf32>
    %c11_81 = arith.constant 11 : index
    %c0_82 = arith.constant 0 : index
    %89 = vector.load %arg11[%c11_81, %c0_82] : memref<128x128xbf16, #tpu.memory_space<vmem>>, vector<104x128xbf16>
    %c3_83 = arith.constant 3 : index
    %c0_84 = arith.constant 0 : index
    %c0_85 = arith.constant 0 : index
    %90 = vector.load %arg6[%c3_83, %c0_84, %c0_85] : memref<9x128x128xbf16, #tpu.memory_space<vmem>>, vector<1x128x128xbf16>
    %91 = vector.shape_cast %90 : vector<1x128x128xbf16> to vector<128x128xbf16>
    %cst_86 = arith.constant dense<0.000000e+00> : vector<104x128xf32>
    %92 = tpu.matmul %89, %91, %cst_86 {dimension_numbers = #tpu.dot_dimension_numbers<[1], [0], [0], [1], [0, 0, 1, 1], [], []>} : vector<104x128xbf16>, vector<128x128xbf16>, vector<104x128xf32> -> vector<104x128xf32>
    %93 = arith.addf %88, %92 : vector<104x128xf32>
    %c12_87 = arith.constant 12 : index
    %c0_88 = arith.constant 0 : index
    %94 = vector.load %arg11[%c12_87, %c0_88] : memref<128x128xbf16, #tpu.memory_space<vmem>>, vector<104x128xbf16>
    %c4_89 = arith.constant 4 : index
    %c0_90 = arith.constant 0 : index
    %c0_91 = arith.constant 0 : index
    %95 = vector.load %arg6[%c4_89, %c0_90, %c0_91] : memref<9x128x128xbf16, #tpu.memory_space<vmem>>, vector<1x128x128xbf16>
    %96 = vector.shape_cast %95 : vector<1x128x128xbf16> to vector<128x128xbf16>
    %cst_92 = arith.constant dense<0.000000e+00> : vector<104x128xf32>
    %97 = tpu.matmul %94, %96, %cst_92 {dimension_numbers = #tpu.dot_dimension_numbers<[1], [0], [0], [1], [0, 0, 1, 1], [], []>} : vector<104x128xbf16>, vector<128x128xbf16>, vector<104x128xf32> -> vector<104x128xf32>
    %98 = arith.addf %93, %97 : vector<104x128xf32>
    %c13_93 = arith.constant 13 : index
    %c0_94 = arith.constant 0 : index
    %99 = vector.load %arg11[%c13_93, %c0_94] : memref<128x128xbf16, #tpu.memory_space<vmem>>, vector<104x128xbf16>
    %c5_95 = arith.constant 5 : index
    %c0_96 = arith.constant 0 : index
    %c0_97 = arith.constant 0 : index
    %100 = vector.load %arg6[%c5_95, %c0_96, %c0_97] : memref<9x128x128xbf16, #tpu.memory_space<vmem>>, vector<1x128x128xbf16>
    %101 = vector.shape_cast %100 : vector<1x128x128xbf16> to vector<128x128xbf16>
    %cst_98 = arith.constant dense<0.000000e+00> : vector<104x128xf32>
    %102 = tpu.matmul %99, %101, %cst_98 {dimension_numbers = #tpu.dot_dimension_numbers<[1], [0], [0], [1], [0, 0, 1, 1], [], []>} : vector<104x128xbf16>, vector<128x128xbf16>, vector<104x128xf32> -> vector<104x128xf32>
    %103 = arith.addf %98, %102 : vector<104x128xf32>
    %c22_99 = arith.constant 22 : index
    %c0_100 = arith.constant 0 : index
    %104 = vector.load %arg11[%c22_99, %c0_100] : memref<128x128xbf16, #tpu.memory_space<vmem>>, vector<104x128xbf16>
    %c6_101 = arith.constant 6 : index
    %c0_102 = arith.constant 0 : index
    %c0_103 = arith.constant 0 : index
    %105 = vector.load %arg6[%c6_101, %c0_102, %c0_103] : memref<9x128x128xbf16, #tpu.memory_space<vmem>>, vector<1x128x128xbf16>
    %106 = vector.shape_cast %105 : vector<1x128x128xbf16> to vector<128x128xbf16>
    %cst_104 = arith.constant dense<0.000000e+00> : vector<104x128xf32>
    %107 = tpu.matmul %104, %106, %cst_104 {dimension_numbers = #tpu.dot_dimension_numbers<[1], [0], [0], [1], [0, 0, 1, 1], [], []>} : vector<104x128xbf16>, vector<128x128xbf16>, vector<104x128xf32> -> vector<104x128xf32>
    %108 = arith.addf %103, %107 : vector<104x128xf32>
    %c23_105 = arith.constant 23 : index
    %c0_106 = arith.constant 0 : index
    %109 = vector.load %arg11[%c23_105, %c0_106] : memref<128x128xbf16, #tpu.memory_space<vmem>>, vector<104x128xbf16>
    %c7_107 = arith.constant 7 : index
    %c0_108 = arith.constant 0 : index
    %c0_109 = arith.constant 0 : index
    %110 = vector.load %arg6[%c7_107, %c0_108, %c0_109] : memref<9x128x128xbf16, #tpu.memory_space<vmem>>, vector<1x128x128xbf16>
    %111 = vector.shape_cast %110 : vector<1x128x128xbf16> to vector<128x128xbf16>
    %cst_110 = arith.constant dense<0.000000e+00> : vector<104x128xf32>
    %112 = tpu.matmul %109, %111, %cst_110 {dimension_numbers = #tpu.dot_dimension_numbers<[1], [0], [0], [1], [0, 0, 1, 1], [], []>} : vector<104x128xbf16>, vector<128x128xbf16>, vector<104x128xf32> -> vector<104x128xf32>
    %113 = arith.addf %108, %112 : vector<104x128xf32>
    %c24_111 = arith.constant 24 : index
    %c0_112 = arith.constant 0 : index
    %114 = vector.load %arg11[%c24_111, %c0_112] : memref<128x128xbf16, #tpu.memory_space<vmem>>, vector<104x128xbf16>
    %c8_113 = arith.constant 8 : index
    %c0_114 = arith.constant 0 : index
    %c0_115 = arith.constant 0 : index
    %115 = vector.load %arg6[%c8_113, %c0_114, %c0_115] : memref<9x128x128xbf16, #tpu.memory_space<vmem>>, vector<1x128x128xbf16>
    %116 = vector.shape_cast %115 : vector<1x128x128xbf16> to vector<128x128xbf16>
    %cst_116 = arith.constant dense<0.000000e+00> : vector<104x128xf32>
    %117 = tpu.matmul %114, %116, %cst_116 {dimension_numbers = #tpu.dot_dimension_numbers<[1], [0], [0], [1], [0, 0, 1, 1], [], []>} : vector<104x128xbf16>, vector<128x128xbf16>, vector<104x128xf32> -> vector<104x128xf32>
    %118 = arith.addf %113, %117 : vector<104x128xf32>
    %c0_117 = arith.constant 0 : index
    %c0_118 = arith.constant 0 : index
    %119 = vector.load %arg7[%c0_117, %c0_118] : memref<1x128xf32, #tpu.memory_space<vmem>>, vector<1x128xf32>
    %120 = vector.broadcast %119 : vector<1x128xf32> to vector<104x128xf32>
    %121 = arith.addf %118, %120 : vector<104x128xf32>
    %122 = arith.addf %121, %14 : vector<104x128xf32>
    %cst_119 = arith.constant 0.000000e+00 : f32
    %123 = vector.broadcast %cst_119 : f32 to vector<104x128xf32>
    %124 = arith.maximumf %122, %123 : vector<104x128xf32>
    %c0_120 = arith.constant 0 : index
    %c0_121 = arith.constant 0 : index
    %c0_122 = arith.constant 0 : index
    %125 = vector.load %arg9[%c0_120, %c0_121, %c0_122] : memref<1x104x128xf32, #tpu.memory_space<vmem>>, vector<1x104x128xf32>
    %126 = vector.shape_cast %125 : vector<1x104x128xf32> to vector<104x128xf32>
    %127 = vector.shape_cast %124 : vector<104x128xf32> to vector<1x104x128xf32>
    tpu.vector_store %arg9[%c0_120, %c0_121, %c0_122], %127 {strides = array<i32>} : memref<1x104x128xf32, #tpu.memory_space<vmem>>, vector<1x104x128xf32>,
    return
  }
  func.func @transform_0(%arg0: i32) -> (i32, i32, i32) {
    %c0_i32 = arith.constant 0 : i32
    %c0_i32_0 = arith.constant 0 : i32
    %c0_i32_1 = arith.constant 0 : i32
    return %arg0, %c0_i32, %c0_i32_0 : i32, i32, i32
  }
  func.func @transform_1(%arg0: i32) -> (i32, i32) {
    %c0_i32 = arith.constant 0 : i32
    %c0_i32_0 = arith.constant 0 : i32
    %c0_i32_1 = arith.constant 0 : i32
    return %c0_i32, %c0_i32_0 : i32, i32
  }
  func.func @transform_2(%arg0: i32) -> (i32, i32) {
    %c0_i32 = arith.constant 0 : i32
    %c0_i32_0 = arith.constant 0 : i32
    %c0_i32_1 = arith.constant 0 : i32
    return %c0_i32, %c0_i32_0 : i32, i32
  }
  func.func @transform_3(%arg0: i32) -> (i32, i32, i32) {
    %c0_i32 = arith.constant 0 : i32
    %c0_i32_0 = arith.constant 0 : i32
    %c0_i32_1 = arith.constant 0 : i32
    %c0_i32_2 = arith.constant 0 : i32
    return %c0_i32, %c0_i32_0, %c0_i32_1 : i32, i32, i32
  }
  func.func @transform_4(%arg0: i32) -> (i32, i32) {
    %c0_i32 = arith.constant 0 : i32
    %c0_i32_0 = arith.constant 0 : i32
    %c0_i32_1 = arith.constant 0 : i32
    return %c0_i32, %c0_i32_0 : i32, i32
  }
  func.func @transform_5(%arg0: i32) -> (i32, i32, i32) {
    %c0_i32 = arith.constant 0 : i32
    %c0_i32_0 = arith.constant 0 : i32
    %c0_i32_1 = arith.constant 0 : i32
    %c0_i32_2 = arith.constant 0 : i32
    return %c0_i32, %c0_i32_0, %c0_i32_1 : i32, i32, i32
  }
  func.func @transform_6(%arg0: i32) -> (i32, i32) {
    %c0_i32 = arith.constant 0 : i32
    %c0_i32_0 = arith.constant 0 : i32
    %c0_i32_1 = arith.constant 0 : i32
    return %c0_i32, %c0_i32_0 : i32, i32
  }
  func.func @transform_7(%arg0: i32) -> (i32, i32) {
    %c0_i32 = arith.constant 0 : i32
    %c0_i32_0 = arith.constant 0 : i32
    %c0_i32_1 = arith.constant 0 : i32
    return %c0_i32, %c0_i32_0 : i32, i32
  }
  func.func @transform_8(%arg0: i32) -> (i32, i32, i32) {
    %c0_i32 = arith.constant 0 : i32
    %c0_i32_0 = arith.constant 0 : i32
    %c0_i32_1 = arith.constant 0 : i32
    return %arg0, %c0_i32, %c0_i32_0 : i32, i32, i32
  }
}

</mosaic_0001>

<llo_original>
// kernel: down_block_forward.1
$region0: #{down_block_forward.1}
  #allocation0 [shape = 'u32[]', space=smem, size = 0x4, offset = 0x4, fixed_abs, tag = 'smem constant byte address 0x4 - core index']
  #allocation1 [shape = 'u32[144,128]{1,0:T(1,128)}', space=vmem, size = 0x12000, scoped, tag = 'internal scratch']
  #allocation2 [shape = 'bf16[128,128]{1,0:T(16,128)(2,1)}', space=vmem, size = 0x8000, scoped, tag = 'scratch operand']
  #allocation3 [shape = 'bf16[128,128]{1,0:T(16,128)(2,1)}', space=vmem, size = 0x8000, scoped, tag = 'scratch operand']
  %s0 = inlined_call_operand.vmem [shape: bf16[2,128,16], index: 0, kind: input, shape index: {}]
  %s1 = inlined_call_operand.vmem [shape: bf16[16,128], index: 1, kind: input, shape index: {}]
  %s2 = inlined_call_operand.vmem [shape: f32[1,128], index: 2, kind: input, shape index: {}]
  %s3 = inlined_call_operand.vmem [shape: bf16[9,128,128], index: 3, kind: input, shape index: {}]
  %s4 = inlined_call_operand.vmem [shape: f32[1,128], index: 4, kind: input, shape index: {}]
  %s5 = inlined_call_operand.vmem [shape: bf16[9,128,128], index: 5, kind: input, shape index: {}]
  %s6 = inlined_call_operand.vmem [shape: f32[1,128], index: 6, kind: input, shape index: {}]
  %s7 = inlined_call_operand.vmem [shape: f32[128,1], index: 7, kind: input, shape index: {}]
  %s8 = inlined_call_operand.vmem [shape: f32[2,104,128], index: 8, kind: output, shape index: {}]
  %s9 = sld [smem:[#allocation0]]
  $region65: #{down_block_forward.1} parent=0
    _
  %s11 = ssub.s32 1, %s9
  %s12 = scalar_select 0, %s11, %s9
  loop: start=0, step=1, limit=4
  $region2: #{down_block_forward.1} parent=0 // loop_pre_header
    _
  $region3: #{down_block_forward.1} parent=0 // loop_header
    %s14 = sphi 0, %s18
    %p15 = scmp.ge.s32.totalorder %s14, 4
    %s24 = sphi 0, %s26
    %s27 = sphi 0, %s24
    %s28 = sphi 0, %s27
    %s44 = sphi 0, %s28
    %s48 = sphi 0, %s48
    %s50 = sphi 0, %s48
    %s51 = sphi 0, %s50
    %s65 = sphi 0, %s51
    %s69 = sphi 0, %s69
    %s71 = sphi 0, %s69
    %s72 = sphi 0, %s71
    %s86 = sphi 0, %s72
    %s90 = sphi 0, %s90
    %s92 = sphi 0, %s90
    %s93 = sphi 0, %s92
    %s107 = sphi 0, %s93
    %s111 = sphi 0, %s111
    %s113 = sphi 0, %s111
    %s114 = sphi 0, %s113
    %s128 = sphi 0, %s114
    %s132 = sphi 0, %s132
    %s134 = sphi 0, %s132
    %s135 = sphi 0, %s134
    %s149 = sphi 0, %s135
    %s153 = sphi 0, %s153
    %s155 = sphi 0, %s153
    %s156 = sphi 0, %s155
    %s170 = sphi 0, %s156
    %s174 = sphi 0, %s174
    %s176 = sphi 0, %s174
    %s177 = sphi 0, %s176
    %s191 = sphi 0, %s177
    %s197 = sphi 0, %s199
    %s200 = sphi 0, %s197
    %s201 = sphi 0, %s200
    %s217 = sphi 0, %s201
  $region4: #{down_block_forward.1} parent=0 // loop_header_branch
    %17 = sbr.rel (%p15) target = $region8
  $region5: #{down_block_forward.1} parent=0 // loop_body
    %s19 = ssub.s32 %s14, 1
    %s20 = ssub.s32 %s14, 2
    %s21 = sadd.s32 %s14, 1
    %s22 = ssub.s32 %s14, %s21
    %p23 = scmp.eq.s32.totalorder %s22, 0
    %s25 = sadd.s32 %s24, 1
    %s26 = scalar_select %p23, %s24, %s25
    %p29 = pneg %p23
    %p30 = scmp.eq.s32.totalorder %s14, 1
    %p31 = por %p29, %p30
    %p32 = scmp.ne.s32.totalorder %s24, %s27
    %p33 = scmp.eq.s32.totalorder %s14, 0
    %p34 = por %p32, %p33
    %p35 = scmp.ne.s32.totalorder %s24, %s27
    %p36 = scmp.eq.s32.totalorder %s19, 1
    %p37 = por %p35, %p36
    %p38 = scmp.ne.s32.totalorder %s27, %s28
    %p39 = scmp.eq.s32.totalorder %s19, 0
    %p40 = por %p38, %p39
    %p41 = scmp.ne.s32.totalorder %s27, %s28
    %p42 = scmp.eq.s32.totalorder %s20, 1
    %p43 = por %p41, %p42
    %p45 = scmp.ne.s32.totalorder %s28, %s44
    %p46 = scmp.eq.s32.totalorder %s20, 0
    %p47 = por %p45, %p46
    %s49 = sadd.s32 %s48, 1
    %p52 = scmp.eq.s32.totalorder %s14, 1
    %p53 = scmp.ne.s32.totalorder %s48, %s50
    %p54 = scmp.eq.s32.totalorder %s14, 0
    %p55 = por %p53, %p54
    %p56 = scmp.ne.s32.totalorder %s48, %s50
    %p57 = scmp.eq.s32.totalorder %s19, 1
    %p58 = por %p56, %p57
    %p59 = scmp.ne.s32.totalorder %s50, %s51
    %p60 = scmp.eq.s32.totalorder %s19, 0
    %p61 = por %p59, %p60
    %p62 = scmp.ne.s32.totalorder %s50, %s51
    %p63 = scmp.eq.s32.totalorder %s20, 1
    %p64 = por %p62, %p63
    %p66 = scmp.ne.s32.totalorder %s51, %s65
    %p67 = scmp.eq.s32.totalorder %s20, 0
    %p68 = por %p66, %p67
    %s70 = sadd.s32 %s69, 1
    %p73 = scmp.eq.s32.totalorder %s14, 1
    %p74 = scmp.ne.s32.totalorder %s69, %s71
    %p75 = scmp.eq.s32.totalorder %s14, 0
    %p76 = por %p74, %p75
    %p77 = scmp.ne.s32.totalorder %s69, %s71
    %p78 = scmp.eq.s32.totalorder %s19, 1
    %p79 = por %p77, %p78
    %p80 = scmp.ne.s32.totalorder %s71, %s72
    %p81 = scmp.eq.s32.totalorder %s19, 0
    %p82 = por %p80, %p81
    %p83 = scmp.ne.s32.totalorder %s71, %s72
    %p84 = scmp.eq.s32.totalorder %s20, 1
    %p85 = por %p83, %p84
    %p87 = scmp.ne.s32.totalorder %s72, %s86
    %p88 = scmp.eq.s32.totalorder %s20, 0
    %p89 = por %p87, %p88
    %s91 = sadd.s32 %s90, 1
    %p94 = scmp.eq.s32.totalorder %s14, 1
    %p95 = scmp.ne.s32.totalorder %s90, %s92
    %p96 = scmp.eq.s32.totalorder %s14, 0
    %p97 = por %p95, %p96
    %p98 = scmp.ne.s32.totalorder %s90, %s92
    %p99 = scmp.eq.s32.totalorder %s19, 1
    %p100 = por %p98, %p99
    %p101 = scmp.ne.s32.totalorder %s92, %s93
    %p102 = scmp.eq.s32.totalorder %s19, 0
    %p103 = por %p101, %p102
    %p104 = scmp.ne.s32.totalorder %s92, %s93
    %p105 = scmp.eq.s32.totalorder %s20, 1
    %p106 = por %p104, %p105
    %p108 = scmp.ne.s32.totalorder %s93, %s107
    %p109 = scmp.eq.s32.totalorder %s20, 0
    %p110 = por %p108, %p109
    %s112 = sadd.s32 %s111, 1
    %p115 = scmp.eq.s32.totalorder %s14, 1
    %p116 = scmp.ne.s32.totalorder %s111, %s113
    %p117 = scmp.eq.s32.totalorder %s14, 0
    %p118 = por %p116, %p117
    %p119 = scmp.ne.s32.totalorder %s111, %s113
    %p120 = scmp.eq.s32.totalorder %s19, 1
    %p121 = por %p119, %p120
    %p122 = scmp.ne.s32.totalorder %s113, %s114
    %p123 = scmp.eq.s32.totalorder %s19, 0
    %p124 = por %p122, %p123
    %p125 = scmp.ne.s32.totalorder %s113, %s114
    %p126 = scmp.eq.s32.totalorder %s20, 1
    %p127 = por %p125, %p126
    %p129 = scmp.ne.s32.totalorder %s114, %s128
    %p130 = scmp.eq.s32.totalorder %s20, 0
    %p131 = por %p129, %p130
    %s133 = sadd.s32 %s132, 1
    %p136 = scmp.eq.s32.totalorder %s14, 1
    %p137 = scmp.ne.s32.totalorder %s132, %s134
    %p138 = scmp.eq.s32.totalorder %s14, 0
    %p139 = por %p137, %p138
    %p140 = scmp.ne.s32.totalorder %s132, %s134
    %p141 = scmp.eq.s32.totalorder %s19, 1
    %p142 = por %p140, %p141
    %p143 = scmp.ne.s32.totalorder %s134, %s135
    %p144 = scmp.eq.s32.totalorder %s19, 0
    %p145 = por %p143, %p144
    %p146 = scmp.ne.s32.totalorder %s134, %s135
    %p147 = scmp.eq.s32.totalorder %s20, 1
    %p148 = por %p146, %p147
    %p150 = scmp.ne.s32.totalorder %s135, %s149
    %p151 = scmp.eq.s32.totalorder %s20, 0
    %p152 = por %p150, %p151
    %s154 = sadd.s32 %s153, 1
    %p157 = scmp.eq.s32.totalorder %s14, 1
    %p158 = scmp.ne.s32.totalorder %s153, %s155
    %p159 = scmp.eq.s32.totalorder %s14, 0
    %p160 = por %p158, %p159
    %p161 = scmp.ne.s32.totalorder %s153, %s155
    %p162 = scmp.eq.s32.totalorder %s19, 1
    %p163 = por %p161, %p162
    %p164 = scmp.ne.s32.totalorder %s155, %s156
    %p165 = scmp.eq.s32.totalorder %s19, 0
    %p166 = por %p164, %p165
    %p167 = scmp.ne.s32.totalorder %s155, %s156
    %p168 = scmp.eq.s32.totalorder %s20, 1
    %p169 = por %p167, %p168
    %p171 = scmp.ne.s32.totalorder %s156, %s170
    %p172 = scmp.eq.s32.totalorder %s20, 0
    %p173 = por %p171, %p172
    %s175 = sadd.s32 %s174, 1
    %p178 = scmp.eq.s32.totalorder %s14, 1
    %p179 = scmp.ne.s32.totalorder %s174, %s176
    %p180 = scmp.eq.s32.totalorder %s14, 0
    %p181 = por %p179, %p180
    %p182 = scmp.ne.s32.totalorder %s174, %s176
    %p183 = scmp.eq.s32.totalorder %s19, 1
    %p184 = por %p182, %p183
    %p185 = scmp.ne.s32.totalorder %s176, %s177
    %p186 = scmp.eq.s32.totalorder %s19, 0
    %p187 = por %p185, %p186
    %p188 = scmp.ne.s32.totalorder %s176, %s177
    %p189 = scmp.eq.s32.totalorder %s20, 1
    %p190 = por %p188, %p189
    %p192 = scmp.ne.s32.totalorder %s177, %s191
    %p193 = scmp.eq.s32.totalorder %s20, 0
    %p194 = por %p192, %p193
    %s195 = ssub.s32 %s14, %s21
    %p196 = scmp.eq.s32.totalorder %s195, 0
    %s198 = sadd.s32 %s197, 1
    %s199 = scalar_select %p196, %s197, %s198
    %p202 = pneg %p196
    %p203 = scmp.eq.s32.totalorder %s14, 1
    %p204 = por %p202, %p203
    %p205 = scmp.ne.s32.totalorder %s197, %s200
    %p206 = scmp.eq.s32.totalorder %s14, 0
    %p207 = por %p205, %p206
    %p208 = scmp.ne.s32.totalorder %s197, %s200
    %p209 = scmp.eq.s32.totalorder %s19, 1
    %p210 = por %p208, %p209
    %p211 = scmp.ne.s32.totalorder %s200, %s201
    %p212 = scmp.eq.s32.totalorder %s19, 0
    %p213 = por %p211, %p212
    %p214 = scmp.ne.s32.totalorder %s200, %s201
    %p215 = scmp.eq.s32.totalorder %s20, 1
    %p216 = por %p214, %p215
    %p218 = scmp.ne.s32.totalorder %s201, %s217
    %p219 = scmp.eq.s32.totalorder %s20, 0
    %p220 = por %p218, %p219
    %p221 = scmp.le.s32.totalorder 1, %s14
    %p222 = scmp.lt.s32.totalorder %s14, 3
    %p223 = pnand %p221, %p222
    %p224 = pneg %p223
    // Predicated region
    $region9: #{down_block_forward.1} parent=5 // pred_check
      _
    $region10: #{down_block_forward.1} parent=5 // pred_check_branch
      %226 = sbr.rel (%p223) target = $region12
    $region11: #{down_block_forward.1} parent=5 // pred_region
      %s227 = ssub.s32 %s14, 1
      // Predicated region
      $region13: #{down_block_forward.1} parent=11 // pred_check
        %p228 = pneg %p61
      $region14: #{down_block_forward.1} parent=11 // pred_check_branch
        %230 = sbr.rel (%p228) target = $region16
      $region15: #{down_block_forward.1} parent=11 // pred_region
        _
      $region16: #{down_block_forward.1} parent=11 // pred_fallthru
        _
      // Predicated region
      $region17: #{down_block_forward.1} parent=11 // pred_check
        %p231 = pneg %p82
      $region18: #{down_block_forward.1} parent=11 // pred_check_branch
        %233 = sbr.rel (%p231) target = $region20
      $region19: #{down_block_forward.1} parent=11 // pred_region
        _
      $region20: #{down_block_forward.1} parent=11 // pred_fallthru
        _
      // Predicated region
      $region21: #{down_block_forward.1} parent=11 // pred_check
        %p234 = pneg %p103
      $region22: #{down_block_forward.1} parent=11 // pred_check_branch
        %236 = sbr.rel (%p234) target = $region24
      $region23: #{down_block_forward.1} parent=11 // pred_region
        _
      $region24: #{down_block_forward.1} parent=11 // pred_fallthru
        _
      // Predicated region
      $region25: #{down_block_forward.1} parent=11 // pred_check
        %p237 = pneg %p124
      $region26: #{down_block_forward.1} parent=11 // pred_check_branch
        %239 = sbr.rel (%p237) target = $region28
      $region27: #{down_block_forward.1} parent=11 // pred_region
        _
      $region28: #{down_block_forward.1} parent=11 // pred_fallthru
        _
      // Predicated region
      $region29: #{down_block_forward.1} parent=11 // pred_check
        %p240 = pneg %p145
      $region30: #{down_block_forward.1} parent=11 // pred_check_branch
        %242 = sbr.rel (%p240) target = $region32
      $region31: #{down_block_forward.1} parent=11 // pred_region
        _
      $region32: #{down_block_forward.1} parent=11 // pred_fallthru
        _
      // Predicated region
      $region33: #{down_block_forward.1} parent=11 // pred_check
        %p243 = pneg %p166
      $region34: #{down_block_forward.1} parent=11 // pred_check_branch
        %245 = sbr.rel (%p243) target = $region36
      $region35: #{down_block_forward.1} parent=11 // pred_region
        _
      $region36: #{down_block_forward.1} parent=11 // pred_fallthru
        _
      // Predicated region
      $region37: #{down_block_forward.1} parent=11 // pred_check
        %p246 = pneg %p187
      $region38: #{down_block_forward.1} parent=11 // pred_check_branch
        %248 = sbr.rel (%p246) target = $region40
      $region39: #{down_block_forward.1} parent=11 // pred_region
        _
      $region40: #{down_block_forward.1} parent=11 // pred_fallthru
        _
    $region12: #{down_block_forward.1} parent=5 // pred_fallthru
      _
    %p249 = scmp.lt.s32.totalorder %s14, 2
    // Predicated region
    $region41: #{down_block_forward.1} parent=5 // pred_check
      %p250 = pneg %p249
    $region42: #{down_block_forward.1} parent=5 // pred_check_branch
      %252 = sbr.rel (%p250) target = $region44
    $region43: #{down_block_forward.1} parent=5 // pred_region
      // Predicated region
      $region45: #{down_block_forward.1} parent=43 // pred_check
        %p253 = pneg %p34
      $region46: #{down_block_forward.1} parent=43 // pred_check_branch
        %255 = sbr.rel (%p253) target = $region48
      $region47: #{down_block_forward.1} parent=43 // pred_region
        %p256 = scmp.lt.s32.totalorder %s14, 1
        %s257 = scalar_select %p256, %s14, 1
        %s258 = smul.addr %s257, 16
        %s259 = smul.addr %s258, 4
        %s260 = scalar_lea.vmem %s0, %s259
      $region48: #{down_block_forward.1} parent=43 // pred_fallthru
        _
    $region44: #{down_block_forward.1} parent=5 // pred_fallthru
      _
    %p261 = scmp.le.s32.totalorder 1, %s14
    %p262 = scmp.lt.s32.totalorder %s14, 3
    %p263 = pnand %p261, %p262
    %p264 = pneg %p263
    // Predicated region
    $region49: #{down_block_forward.1} parent=5 // pred_check
      _
    $region50: #{down_block_forward.1} parent=5 // pred_check_branch
      %266 = sbr.rel (%p263) target = $region52
    $region51: #{down_block_forward.1} parent=5 // pred_region
      %s267 = ssub.s32 %s14, 1
      %p268 = scmp.lt.s32.totalorder %s19, 1
      %s269 = scalar_select %p268, %s19, 1
      %s270 = smul.addr %s269, 16
      %s271 = smul.addr %s270, 4
      %s272 = scalar_lea.vmem %s0, %s271
      %p273 = pneg %p40
      %p274 = pneg %p37
      %p275 = pneg %p61
      %p276 = pneg %p58
      %p277 = pneg %p82
      %p278 = pneg %p79
      %p279 = pneg %p103
      %p280 = pneg %p100
      %p281 = pneg %p124
      %p282 = pneg %p121
      %p283 = pneg %p145
      %p284 = pneg %p142
      %p285 = pneg %p166
      %p286 = pneg %p163
      %p287 = pneg %p187
      %p288 = pneg %p184
      %p289 = pneg %p213
      %p290 = pneg %p210
      %p291 = scmp.lt.s32.totalorder %s19, 1
      %s292 = scalar_select %p291, %s19, 1
      %s293 = smul.addr %s292, 13
      %s294 = smul.addr %s293, 8
      %s295 = scalar_lea.vmem %s8, %s294
      %p296 = scmp.lt.s32.totalorder %s19, 1
      %s297 = scalar_select %p296, %s19, 1
      %s298 = smul.addr %s297, 16
      %s299 = smul.addr %s298, 4
      %s300 = scalar_lea.vmem %s0, %s299
      %p301 = scmp.lt.s32.totalorder %s19, 1
      %s302 = scalar_select %p301, %s19, 1
      %s303 = smul.addr %s302, 13
      %s304 = smul.addr %s303, 8
      %s305 = scalar_lea.vmem %s8, %s304
      %v307 = vld [vmem:[%s300] sm:$0xf]
      %v308 = vld [vmem:[%s300 + $0x4] sm:$0xf]
      %v309 = vld [vmem:[%s300 + $0x8] sm:$0xf]
      %v310 = vld [vmem:[%s300 + $0xc] sm:$0xf]
      %v311 = vld [vmem:[%s300 + $0x10] sm:$0xf]
      %v312 = vld [vmem:[%s300 + $0x14] sm:$0xf]
      %v313 = vld [vmem:[%s300 + $0x18] sm:$0xf]
      %v314 = vld [vmem:[%s300 + $0x1c] sm:$0xf]
      %v315 = vld [vmem:[%s300 + $0x20] sm:$0xf]
      %v316 = vld [vmem:[%s300 + $0x24] sm:$0xf]
      %v317 = vld [vmem:[%s300 + $0x28] sm:$0xf]
      %v318 = vld [vmem:[%s300 + $0x2c] sm:$0xf]
      %v319 = vld [vmem:[%s300 + $0x30] sm:$0xf]
      %v320 = vld [vmem:[%s300 + $0x34] sm:$0xf]
      %v321 = vld [vmem:[%s300 + $0x38] sm:$0xf]
      %v322 = vld [vmem:[%s300 + $0x3c] sm:$0xf]
      %v323 = vld [vmem:[%s1] sm:$0xf]
      %v324 = vld [vmem:[%s1 + $0x4] sm:$0xf]
      %v325 = vld [vmem:[%s2] sm:$0x1]
      %v327 = vlaneseq
      %v328 = vshrl.u32 %v327, 7
      %v329 = vsub.s32 0, %v328
      %v330 = vrot.slane %v325, %v329
      %v348 = vunpack.c.l.b16 %v307
      %v349 = vunpack.c.l.b16 %v308
      %v350 = vunpack.c.l.b16 %v309
      %v351 = vunpack.c.l.b16 %v310
      %v352 = vunpack.c.l.b16 %v311
      %v353 = vunpack.c.l.b16 %v312
      %v354 = vunpack.c.l.b16 %v313
      %v355 = vunpack.c.l.b16 %v314
      %v356 = vunpack.c.l.b16 %v315
      %v357 = vunpack.c.l.b16 %v316
      %v358 = vunpack.c.l.b16 %v317
      %v359 = vunpack.c.l.b16 %v318
      %v360 = vunpack.c.l.b16 %v319
      %v361 = vunpack.c.l.b16 %v320
      %v362 = vunpack.c.l.b16 %v321
      %v363 = vunpack.c.l.b16 %v322
      %v364 = vpack.c.b16 %v349, %v348
      %v365 = vpack.c.b16 %v351, %v350
      %v366 = vpack.c.b16 %v353, %v352
      %v367 = vpack.c.b16 %v355, %v354
      %v368 = vpack.c.b16 %v357, %v356
      %v369 = vpack.c.b16 %v359, %v358
      %v370 = vpack.c.b16 %v361, %v360
      %v371 = vpack.c.b16 %v363, %v362
      %v374 = vunpack.c.l.b16 %v323
      %v375 = vunpack.c.l.b16 %v324
      %v376 = vpack.c.b16 %v375, %v374
      %vm378 = vcmask 130048
      %v380 = vsel %vm378, %v364, 0
      %v383 = vsel %vm378, %v365, 0
      %v386 = vsel %vm378, %v366, 0
      %v389 = vsel %vm378, %v367, 0
      %v392 = vsel %vm378, %v368, 0
      %v395 = vsel %vm378, %v369, 0
      %v398 = vsel %vm378, %v370, 0
      %v401 = vsel %vm378, %v371, 0
      %403 = vmatprep.subr.bf16.mxu0 0
      %404 = vmatpush1.bf16.msra.mxu0 %v376
      %405 = vmatprep.subr.bf16.mxu0 0
      %406 = vmatpush1.bf16.msra.mxu0 0
      %407 = vmatprep.subr.bf16.mxu0 0
      %408 = vmatpush1.bf16.msra.mxu0 0
      %409 = vmatprep.subr.bf16.mxu0 0
      %410 = vmatpush1.bf16.msra.mxu0 0
      %411 = vmatprep.subr.bf16.mxu0 0
      %412 = vmatpush1.bf16.msra.mxu0 0
      %413 = vmatprep.subr.bf16.mxu0 0
      %414 = vmatpush1.bf16.msra.mxu0 0
      %415 = vmatprep.subr.bf16.mxu0 0
      %416 = vmatpush1.bf16.msra.mxu0 0
      %417 = vmatprep.subr.bf16.mxu0 0
      %418 = vmatpush1.bf16.msra.mxu0 0
      %419 = vmatprep.subr.bf16.mxu0 0
      %420 = vmatpush1.bf16.msra.mxu0 0
      %421 = vmatprep.subr.bf16.mxu0 0
      %422 = vmatpush1.bf16.msra.mxu0 0
      %423 = vmatprep.subr.bf16.mxu0 0
      %424 = vmatpush1.bf16.msra.mxu0 0
      %425 = vmatprep.subr.bf16.mxu0 0
      %426 = vmatpush1.bf16.msra.mxu0 0
      %427 = vmatprep.subr.bf16.mxu0 0
      %428 = vmatpush1.bf16.msra.mxu0 0
      %429 = vmatprep.subr.bf16.mxu0 0
      %430 = vmatpush1.bf16.msra.mxu0 0
      %431 = vmatprep.subr.bf16.mxu0 0
      %432 = vmatpush1.bf16.msra.mxu0 0
      %433 = vmatprep.subr.bf16.mxu0 0
      %434 = vmatpush1.bf16.msra.mxu0 0
      %435 = vmatprep.mubr.bf16.mxu0 0
      %436 = vmatmul.mubr.bf16.gmra.mrb[0].mxu0 %v380
      %v437 = vpop.f32.mrb[0].mxu0
      %v438 = vadd.f32 %v330, %v437
      %v439 = vpop.f32.mrb[0].mxu0
      %v440 = vpop.f32.mrb[0].mxu0
      %v441 = vadd.f32 %v330, %v440
      %v442 = vpop.f32.mrb[0].mxu0
      %443 = vmatprep.mubr.bf16.mxu0 0
      %444 = vmatmul.mubr.bf16.gmra.mrb[0].mxu0 %v383
      %v445 = vpop.f32.mrb[0].mxu0
      %v446 = vadd.f32 %v330, %v445
      %v447 = vpop.f32.mrb[0].mxu0
      %v448 = vpop.f32.mrb[0].mxu0
      %v449 = vadd.f32 %v330, %v448
      %v450 = vpop.f32.mrb[0].mxu0
      %451 = vmatprep.mubr.bf16.mxu0 0
      %452 = vmatmul.mubr.bf16.gmra.mrb[0].mxu0 %v386
      %v453 = vpop.f32.mrb[0].mxu0
      %v454 = vadd.f32 %v330, %v453
      %v455 = vpop.f32.mrb[0].mxu0
      %v456 = vpop.f32.mrb[0].mxu0
      %v457 = vadd.f32 %v330, %v456
      %v458 = vpop.f32.mrb[0].mxu0
      %459 = vmatprep.mubr.bf16.mxu0 0
      %460 = vmatmul.mubr.bf16.gmra.mrb[0].mxu0 %v389
      %v461 = vpop.f32.mrb[0].mxu0
      %v462 = vadd.f32 %v330, %v461
      %v463 = vpop.f32.mrb[0].mxu0
      %v464 = vpop.f32.mrb[0].mxu0
      %v465 = vadd.f32 %v330, %v464
      %v466 = vpop.f32.mrb[0].mxu0
      %467 = vmatprep.mubr.bf16.mxu0 0
      %468 = vmatmul.mubr.bf16.gmra.mrb[0].mxu0 %v392
      %v469 = vpop.f32.mrb[0].mxu0
      %v470 = vadd.f32 %v330, %v469
      %v471 = vpop.f32.mrb[0].mxu0
      %v472 = vpop.f32.mrb[0].mxu0
      %v473 = vadd.f32 %v330, %v472
      %v474 = vpop.f32.mrb[0].mxu0
      %475 = vmatprep.mubr.bf16.mxu0 0
      %476 = vmatmul.mubr.bf16.gmra.mrb[0].mxu0 %v395
      %v477 = vpop.f32.mrb[0].mxu0
      %v478 = vadd.f32 %v330, %v477
      %v479 = vpop.f32.mrb[0].mxu0
      %v480 = vpop.f32.mrb[0].mxu0
      %v481 = vadd.f32 %v330, %v480
      %v482 = vpop.f32.mrb[0].mxu0
      %483 = vmatprep.mubr.bf16.mxu0 0
      %484 = vmatmul.mubr.bf16.gmra.mrb[0].mxu0 %v398
      %v485 = vpop.f32.mrb[0].mxu0
      %v486 = vadd.f32 %v330, %v485
      %v487 = vpop.f32.mrb[0].mxu0
      %v488 = vpop.f32.mrb[0].mxu0
      %v489 = vadd.f32 %v330, %v488
      %v490 = vpop.f32.mrb[0].mxu0
      %491 = vmatprep.mubr.bf16.mxu0 0
      %492 = vmatmul.mubr.bf16.gmra.mrb[0].mxu0 %v401
      %v493 = vpop.f32.mrb[0].mxu0
      %v494 = vadd.f32 %v330, %v493
      %v495 = vpop.f32.mrb[0].mxu0
      %v496 = vpop.f32.mrb[0].mxu0
      %v497 = vadd.f32 %v330, %v496
      %v498 = vpop.f32.mrb[0].mxu0
      %499 = vdwg.mxu0
      %v500 = vmax.f32 %v438, 0.0
      %v501 = vmax.f32 %v441, 0.0
      %v502 = vmax.f32 %v446, 0.0
      %v503 = vmax.f32 %v449, 0.0
      %v504 = vmax.f32 %v454, 0.0
      %v505 = vmax.f32 %v457, 0.0
      %v506 = vmax.f32 %v462, 0.0
      %v507 = vmax.f32 %v465, 0.0
      %v508 = vmax.f32 %v470, 0.0
      %v509 = vmax.f32 %v473, 0.0
      %v510 = vmax.f32 %v478, 0.0
      %v511 = vmax.f32 %v481, 0.0
      %v512 = vmax.f32 %v486, 0.0
      %v513 = vmax.f32 %v489, 0.0
      %v514 = vmax.f32 %v494, 0.0
      %v515 = vmax.f32 %v497, 0.0
      %v516 = vld [vmem:[%s7] sm:$0xff]
      %v517 = vld [vmem:[%s7 + $0x8] sm:$0xff]
      %v518 = vld [vmem:[%s7 + $0x10] sm:$0xff]
      %v519 = vld [vmem:[%s7 + $0x18] sm:$0xff]
      %v520 = vld [vmem:[%s7 + $0x20] sm:$0xff]
      %v521 = vld [vmem:[%s7 + $0x28] sm:$0xff]
      %v522 = vld [vmem:[%s7 + $0x30] sm:$0xff]
      %v523 = vld [vmem:[%s7 + $0x38] sm:$0xff]
      %v524 = vld [vmem:[%s7 + $0x40] sm:$0xff]
      %v525 = vld [vmem:[%s7 + $0x48] sm:$0xff]
      %v526 = vld [vmem:[%s7 + $0x50] sm:$0xff]
      %v527 = vld [vmem:[%s7 + $0x58] sm:$0xff]
      %v528 = vld [vmem:[%s7 + $0x60] sm:$0xff]
      %v529 = vld [vmem:[%s7 + $0x68] sm:$0xff]
      %v530 = vld [vmem:[%s7 + $0x70] sm:$0xff]
      %v531 = vld [vmem:[%s7 + $0x78] sm:$0xff]
      %533 = vset.pattern.permute.xlu0 0
      %534 = vperm.xlu0 %533, %v516
      %v535 = vpop.permute.xlu0 %534
      %538 = vset.pattern.permute.xlu0 0
      %539 = vperm.xlu0 %538, %v517
      %v540 = vpop.permute.xlu0 %539
      %543 = vset.pattern.permute.xlu0 0
      %544 = vperm.xlu0 %543, %v518
      %v545 = vpop.permute.xlu0 %544
      %548 = vset.pattern.permute.xlu0 0
      %549 = vperm.xlu0 %548, %v519
      %v550 = vpop.permute.xlu0 %549
      %553 = vset.pattern.permute.xlu0 0
      %554 = vperm.xlu0 %553, %v520
      %v555 = vpop.permute.xlu0 %554
      %558 = vset.pattern.permute.xlu0 0
      %559 = vperm.xlu0 %558, %v521
      %v560 = vpop.permute.xlu0 %559
      %563 = vset.pattern.permute.xlu0 0
      %564 = vperm.xlu0 %563, %v522
      %v565 = vpop.permute.xlu0 %564
      %568 = vset.pattern.permute.xlu0 0
      %569 = vperm.xlu0 %568, %v523
      %v570 = vpop.permute.xlu0 %569
      %573 = vset.pattern.permute.xlu0 0
      %574 = vperm.xlu0 %573, %v524
      %v575 = vpop.permute.xlu0 %574
      %578 = vset.pattern.permute.xlu0 0
      %579 = vperm.xlu0 %578, %v525
      %v580 = vpop.permute.xlu0 %579
      %583 = vset.pattern.permute.xlu0 0
      %584 = vperm.xlu0 %583, %v526
      %v585 = vpop.permute.xlu0 %584
      %588 = vset.pattern.permute.xlu0 0
      %589 = vperm.xlu0 %588, %v527
      %v590 = vpop.permute.xlu0 %589
      %593 = vset.pattern.permute.xlu0 0
      %594 = vperm.xlu0 %593, %v528
      %v595 = vpop.permute.xlu0 %594
      %598 = vset.pattern.permute.xlu0 0
      %599 = vperm.xlu0 %598, %v529
      %v600 = vpop.permute.xlu0 %599
      %603 = vset.pattern.permute.xlu0 0
      %604 = vperm.xlu0 %603, %v530
      %v605 = vpop.permute.xlu0 %604
      %608 = vset.pattern.permute.xlu0 0
      %609 = vperm.xlu0 %608, %v531
      %v610 = vpop.permute.xlu0 %609
      %v612 = vmul.f32 %v500, %v535
      %v613 = vmul.f32 %v501, %v540
      %v614 = vmul.f32 %v502, %v545
      %v615 = vmul.f32 %v503, %v550
      %v616 = vmul.f32 %v504, %v555
      %v617 = vmul.f32 %v505, %v560
      %v618 = vmul.f32 %v506, %v565
      %v619 = vmul.f32 %v507, %v570
      %v620 = vmul.f32 %v508, %v575
      %v621 = vmul.f32 %v509, %v580
      %v622 = vmul.f32 %v510, %v585
      %v623 = vmul.f32 %v511, %v590
      %v624 = vmul.f32 %v512, %v595
      %v625 = vmul.f32 %v513, %v600
      %v626 = vmul.f32 %v514, %v605
      %v627 = vmul.f32 %v515, %v610
      %v628 = vpack.c.bf16 %v613, %v612
      %v629 = vpack.c.bf16 %v615, %v614
      %v630 = vpack.c.bf16 %v617, %v616
      %v631 = vpack.c.bf16 %v619, %v618
      %v632 = vpack.c.bf16 %v621, %v620
      %v633 = vpack.c.bf16 %v623, %v622
      %v634 = vpack.c.bf16 %v625, %v624
      %v635 = vpack.c.bf16 %v627, %v626
      %636 = vst [vmem:[#allocation2] sm:$0xff] %v628
      %637 = vst [vmem:[#allocation2 + $0x8] sm:$0xff] %v629
      %638 = vst [vmem:[#allocation2 + $0x10] sm:$0xff] %v630
      %639 = vst [vmem:[#allocation2 + $0x18] sm:$0xff] %v631
      %640 = vst [vmem:[#allocation2 + $0x20] sm:$0xff] %v632
      %641 = vst [vmem:[#allocation2 + $0x28] sm:$0xff] %v633
      %642 = vst [vmem:[#allocation2 + $0x30] sm:$0xff] %v634
      %643 = vst [vmem:[#allocation2 + $0x38] sm:$0xff] %v635
      %v644 = vld [vmem:[%s7 + $0xc] sm:$0xff]
      %v645 = vld [vmem:[%s7 + $0x14] sm:$0xff]
      %v646 = vld [vmem:[%s7 + $0x1c] sm:$0xff]
      %v647 = vld [vmem:[%s7 + $0x24] sm:$0xff]
      %v648 = vld [vmem:[%s7 + $0x2c] sm:$0xff]
      %v649 = vld [vmem:[%s7 + $0x34] sm:$0xff]
      %v650 = vld [vmem:[%s7 + $0x3c] sm:$0xff]
      %v651 = vld [vmem:[%s7 + $0x44] sm:$0xff]
      %v652 = vld [vmem:[%s7 + $0x4c] sm:$0xff]
      %v653 = vld [vmem:[%s7 + $0x54] sm:$0xff]
      %v654 = vld [vmem:[%s7 + $0x5c] sm:$0xff]
      %v655 = vld [vmem:[%s7 + $0x64] sm:$0xff]
      %v656 = vld [vmem:[%s7 + $0x6c] sm:$0xff]
      %v657 = vld [vmem:[#allocation2] sm:$0xff]
      %v658 = vld [vmem:[#allocation2 + $0x8] sm:$0xff]
      %v659 = vld [vmem:[#allocation2 + $0x10] sm:$0xff]
      %v660 = vld [vmem:[#allocation2 + $0x18] sm:$0xff]
      %v661 = vld [vmem:[#allocation2 + $0x20] sm:$0xff]
      %v662 = vld [vmem:[#allocation2 + $0x28] sm:$0xff]
      %v663 = vld [vmem:[#allocation2 + $0x30] sm:$0xf]
      %v664 = vld [vmem:[%s3] sm:$0xf]
      %v665 = vld [vmem:[%s3 + $0x4] sm:$0xf]
      %v666 = vld [vmem:[%s3 + $0x8] sm:$0xf]
      %v667 = vld [vmem:[%s3 + $0xc] sm:$0xf]
      %v668 = vld [vmem:[%s3 + $0x10] sm:$0xf]
      %v669 = vld [vmem:[%s3 + $0x14] sm:$0xf]
      %v670 = vld [vmem:[%s3 + $0x18] sm:$0xf]
      %v671 = vld [vmem:[%s3 + $0x1c] sm:$0xf]
      %v672 = vld [vmem:[%s3 + $0x20] sm:$0xf]
      %v673 = vld [vmem:[%s3 + $0x24] sm:$0xf]
      %v674 = vld [vmem:[%s3 + $0x28] sm:$0xf]
      %v675 = vld [vmem:[%s3 + $0x2c] sm:$0xf]
      %v676 = vld [vmem:[%s3 + $0x30] sm:$0xf]
      %v677 = vld [vmem:[%s3 + $0x34] sm:$0xf]
      %v678 = vld [vmem:[%s3 + $0x38] sm:$0xf]
      %v679 = vld [vmem:[%s3 + $0x3c] sm:$0xf]
      %v680 = vld [vmem:[#allocation2 + $0x30] sm:$0x1f]
      %s681 = scalar_lea.vmem %s3, 64
      %v682 = vld [vmem:[%s681] sm:$0xf]
      %v683 = vld [vmem:[%s681 + $0x4] sm:$0xf]
      %v684 = vld [vmem:[%s681 + $0x8] sm:$0xf]
      %v685 = vld [vmem:[%s681 + $0xc] sm:$0xf]
      %v686 = vld [vmem:[%s681 + $0x10] sm:$0xf]
      %v687 = vld [vmem:[%s681 + $0x14] sm:$0xf]
      %v688 = vld [vmem:[%s681 + $0x18] sm:$0xf]
      %v689 = vld [vmem:[%s681 + $0x1c] sm:$0xf]
      %v690 = vld [vmem:[%s681 + $0x20] sm:$0xf]
      %v691 = vld [vmem:[%s681 + $0x24] sm:$0xf]
      %v692 = vld [vmem:[%s681 + $0x28] sm:$0xf]
      %v693 = vld [vmem:[%s681 + $0x2c] sm:$0xf]
      %v694 = vld [vmem:[%s681 + $0x30] sm:$0xf]
      %v695 = vld [vmem:[%s681 + $0x34] sm:$0xf]
      %v696 = vld [vmem:[%s681 + $0x38] sm:$0xf]
      %v697 = vld [vmem:[%s681 + $0x3c] sm:$0xf]
      %vm698 = vsmask.f32 7424
      %v700 = vshrl.u32 %v657, 16
      %v702 = vshll.u32 %v657, 16
      %v704 = vrot.slane %v702, 1
      %v705 = vor.u32 %v700, %v704
      %v707 = vshll.u32 %v658, 16
      %v709 = vrot.slane %v707, 1
      %v710 = vsel %vm698, %v705, %v709
      %v711 = vshrl.u32 %v658, 16
      %v713 = vor.u32 %v711, %v709
      %v715 = vshll.u32 %v659, 16
      %v717 = vrot.slane %v715, 1
      %v718 = vsel %vm698, %v713, %v717
      %v719 = vshrl.u32 %v659, 16
      %v721 = vor.u32 %v719, %v717
      %v723 = vshll.u32 %v660, 16
      %v725 = vrot.slane %v723, 1
      %v726 = vsel %vm698, %v721, %v725
      %v727 = vshrl.u32 %v660, 16
      %v729 = vor.u32 %v727, %v725
      %v731 = vshll.u32 %v661, 16
      %v733 = vrot.slane %v731, 1
      %v734 = vsel %vm698, %v729, %v733
      %v735 = vshrl.u32 %v661, 16
      %v737 = vor.u32 %v735, %v733
      %v739 = vshll.u32 %v662, 16
      %v741 = vrot.slane %v739, 1
      %v742 = vsel %vm698, %v737, %v741
      %v743 = vshrl.u32 %v662, 16
      %v745 = vor.u32 %v743, %v741
      %v747 = vshll.u32 %v680, 16
      %v749 = vrot.slane %v747, 1
      %v750 = vsel %vm698, %v745, %v749
      %v751 = vshrl.u32 %v680, 16
      %v753 = vor.u32 %v751, %v749
      %v777 = vunpack.c.l.b16 %v682
      %v778 = vunpack.c.l.b16 %v683
      %v779 = vunpack.c.l.b16 %v684
      %v780 = vunpack.c.l.b16 %v685
      %v781 = vunpack.c.l.b16 %v686
      %v782 = vunpack.c.l.b16 %v687
      %v783 = vunpack.c.l.b16 %v688
      %v784 = vunpack.c.l.b16 %v689
      %v785 = vunpack.c.l.b16 %v690
      %v786 = vunpack.c.l.b16 %v691
      %v787 = vunpack.c.l.b16 %v692
      %v788 = vunpack.c.l.b16 %v693
      %v789 = vunpack.c.l.b16 %v694
      %v790 = vunpack.c.l.b16 %v695
      %v791 = vunpack.c.l.b16 %v696
      %v792 = vunpack.c.l.b16 %v697
      %v793 = vpack.c.b16 %v778, %v777
      %v794 = vpack.c.b16 %v780, %v779
      %v795 = vpack.c.b16 %v782, %v781
      %v796 = vpack.c.b16 %v784, %v783
      %v797 = vpack.c.b16 %v786, %v785
      %v798 = vpack.c.b16 %v788, %v787
      %v799 = vpack.c.b16 %v790, %v789
      %v800 = vpack.c.b16 %v792, %v791
      %809 = vmatprep.subr.bf16.mxu0 0
      %810 = vmatpush1.bf16.msra.mxu0 %v793
      %811 = vmatprep.subr.bf16.mxu0 0
      %812 = vmatpush1.bf16.msra.mxu0 %v794
      %813 = vmatprep.subr.bf16.mxu0 0
      %814 = vmatpush1.bf16.msra.mxu0 %v795
      %815 = vmatprep.subr.bf16.mxu0 0
      %816 = vmatpush1.bf16.msra.mxu0 %v796
      %817 = vmatprep.subr.bf16.mxu0 0
      %818 = vmatpush1.bf16.msra.mxu0 %v797
      %819 = vmatprep.subr.bf16.mxu0 0
      %820 = vmatpush1.bf16.msra.mxu0 %v798
      %821 = vmatprep.subr.bf16.mxu0 0
      %822 = vmatpush1.bf16.msra.mxu0 %v799
      %823 = vmatprep.subr.bf16.mxu0 0
      %824 = vmatpush1.bf16.msra.mxu0 %v800
      %825 = vmatprep.subr.bf16.mxu0 0
      %826 = vmatpush1.bf16.msra.mxu0 0
      %827 = vmatprep.subr.bf16.mxu0 0
      %828 = vmatpush1.bf16.msra.mxu0 0
      %829 = vmatprep.subr.bf16.mxu0 0
      %830 = vmatpush1.bf16.msra.mxu0 0
      %831 = vmatprep.subr.bf16.mxu0 0
      %832 = vmatpush1.bf16.msra.mxu0 0
      %833 = vmatprep.subr.bf16.mxu0 0
      %834 = vmatpush1.bf16.msra.mxu0 0
      %835 = vmatprep.subr.bf16.mxu0 0
      %836 = vmatpush1.bf16.msra.mxu0 0
      %837 = vmatprep.subr.bf16.mxu0 0
      %838 = vmatpush1.bf16.msra.mxu0 0
      %839 = vmatprep.subr.bf16.mxu0 0
      %840 = vmatpush1.bf16.msra.mxu0 0
      %841 = vmatprep.mubr.bf16.mxu0 0
      %842 = vmatmul.mubr.bf16.gmra.mrb[0].mxu0 %v710
      %v843 = vpop.f32.mrb[0].mxu0
      %v844 = vadd.f32 0.0, %v843
      %v845 = vpop.f32.mrb[0].mxu0
      %v846 = vpop.f32.mrb[0].mxu0
      %v847 = vadd.f32 0.0, %v846
      %v848 = vpop.f32.mrb[0].mxu0
      %849 = vmatprep.mubr.bf16.mxu0 0
      %850 = vmatmul.mubr.bf16.gmra.mrb[0].mxu0 %v718
      %v851 = vpop.f32.mrb[0].mxu0
      %v852 = vadd.f32 0.0, %v851
      %v853 = vpop.f32.mrb[0].mxu0
      %v854 = vpop.f32.mrb[0].mxu0
      %v855 = vadd.f32 0.0, %v854
      %v856 = vpop.f32.mrb[0].mxu0
      %857 = vmatprep.mubr.bf16.mxu0 0
      %858 = vmatmul.mubr.bf16.gmra.mrb[0].mxu0 %v726
      %v859 = vpop.f32.mrb[0].mxu0
      %v860 = vadd.f32 0.0, %v859
      %v861 = vpop.f32.mrb[0].mxu0
      %v862 = vpop.f32.mrb[0].mxu0
      %v863 = vadd.f32 0.0, %v862
      %v864 = vpop.f32.mrb[0].mxu0
      %865 = vmatprep.mubr.bf16.mxu0 0
      %866 = vmatmul.mubr.bf16.gmra.mrb[0].mxu0 %v734
      %v867 = vpop.f32.mrb[0].mxu0
      %v868 = vadd.f32 0.0, %v867
      %v869 = vpop.f32.mrb[0].mxu0
      %v870 = vpop.f32.mrb[0].mxu0
      %v871 = vadd.f32 0.0, %v870
      %v872 = vpop.f32.mrb[0].mxu0
      %873 = vmatprep.mubr.bf16.mxu0 0
      %874 = vmatmul.mubr.bf16.gmra.mrb[0].mxu0 %v742
      %v875 = vpop.f32.mrb[0].mxu0
      %v876 = vadd.f32 0.0, %v875
      %v877 = vpop.f32.mrb[0].mxu0
      %v878 = vpop.f32.mrb[0].mxu0
      %v879 = vadd.f32 0.0, %v878
      %v880 = vpop.f32.mrb[0].mxu0
      %881 = vmatprep.mubr.bf16.mxu0 0
      %882 = vmatmul.mubr.bf16.gmra.mrb[0].mxu0 %v750
      %v883 = vpop.f32.mrb[0].mxu0
      %v884 = vadd.f32 0.0, %v883
      %v885 = vpop.f32.mrb[0].mxu0
      %v886 = vpop.f32.mrb[0].mxu0
      %v887 = vadd.f32 0.0, %v886
      %v888 = vpop.f32.mrb[0].mxu0
      %889 = vmatprep.mubr.bf16.mxu0 0
      %890 = vmatmul.mubr.bf16.gmra.mrb[0].mxu0 %v753
      %v891 = vpop.f32.mrb[0].mxu0
      %v892 = vadd.f32 0.0, %v891
      %v893 = vpop.f32.mrb[0].mxu0
      %v894 = vpop.f32.mrb[0].mxu0
      %v895 = vpop.f32.mrb[0].mxu0
      %896 = vdwg.mxu0
      %v913 = vunpack.c.l.b16 %v664
      %v914 = vunpack.c.l.b16 %v665
      %v915 = vunpack.c.l.b16 %v666
      %v916 = vunpack.c.l.b16 %v667
      %v917 = vunpack.c.l.b16 %v668
      %v918 = vunpack.c.l.b16 %v669
      %v919 = vunpack.c.l.b16 %v670
      %v920 = vunpack.c.l.b16 %v671
      %v921 = vunpack.c.l.b16 %v672
      %v922 = vunpack.c.l.b16 %v673
      %v923 = vunpack.c.l.b16 %v674
      %v924 = vunpack.c.l.b16 %v675
      %v925 = vunpack.c.l.b16 %v676
      %v926 = vunpack.c.l.b16 %v677
      %v927 = vunpack.c.l.b16 %v678
      %v928 = vunpack.c.l.b16 %v679
      %v929 = vpack.c.b16 %v914, %v913
      %v930 = vpack.c.b16 %v916, %v915
      %v931 = vpack.c.b16 %v918, %v917
      %v932 = vpack.c.b16 %v920, %v919
      %v933 = vpack.c.b16 %v922, %v921
      %v934 = vpack.c.b16 %v924, %v923
      %v935 = vpack.c.b16 %v926, %v925
      %v936 = vpack.c.b16 %v928, %v927
      %945 = vmatprep.subr.bf16.mxu0 0
      %946 = vmatpush1.bf16.msra.mxu0 %v929
      %947 = vmatprep.subr.bf16.mxu0 0
      %948 = vmatpush1.bf16.msra.mxu0 %v930
      %949 = vmatprep.subr.bf16.mxu0 0
      %950 = vmatpush1.bf16.msra.mxu0 %v931
      %951 = vmatprep.subr.bf16.mxu0 0
      %952 = vmatpush1.bf16.msra.mxu0 %v932
      %953 = vmatprep.subr.bf16.mxu0 0
      %954 = vmatpush1.bf16.msra.mxu0 %v933
      %955 = vmatprep.subr.bf16.mxu0 0
      %956 = vmatpush1.bf16.msra.mxu0 %v934
      %957 = vmatprep.subr.bf16.mxu0 0
      %958 = vmatpush1.bf16.msra.mxu0 %v935
      %959 = vmatprep.subr.bf16.mxu0 0
      %960 = vmatpush1.bf16.msra.mxu0 %v936
      %961 = vmatprep.subr.bf16.mxu0 0
      %962 = vmatpush1.bf16.msra.mxu0 0
      %963 = vmatprep.subr.bf16.mxu0 0
      %964 = vmatpush1.bf16.msra.mxu0 0
      %965 = vmatprep.subr.bf16.mxu0 0
      %966 = vmatpush1.bf16.msra.mxu0 0
      %967 = vmatprep.subr.bf16.mxu0 0
      %968 = vmatpush1.bf16.msra.mxu0 0
      %969 = vmatprep.subr.bf16.mxu0 0
      %970 = vmatpush1.bf16.msra.mxu0 0
      %971 = vmatprep.subr.bf16.mxu0 0
      %972 = vmatpush1.bf16.msra.mxu0 0
      %973 = vmatprep.subr.bf16.mxu0 0
      %974 = vmatpush1.bf16.msra.mxu0 0
      %975 = vmatprep.subr.bf16.mxu0 0
      %976 = vmatpush1.bf16.msra.mxu0 0
      %977 = vmatprep.mubr.bf16.mxu0 0
      %978 = vmatmul.mubr.bf16.gmra.mrb[0].mxu0 %v657
      %v979 = vpop.f32.mrb[0].mxu0
      %v980 = vadd.f32 %v844, %v979
      %v981 = vpop.f32.mrb[0].mxu0
      %v982 = vpop.f32.mrb[0].mxu0
      %v983 = vadd.f32 %v847, %v982
      %v984 = vpop.f32.mrb[0].mxu0
      %985 = vmatprep.mubr.bf16.mxu0 0
      %986 = vmatmul.mubr.bf16.gmra.mrb[0].mxu0 %v658
      %v987 = vpop.f32.mrb[0].mxu0
      %v988 = vadd.f32 %v852, %v987
      %v989 = vpop.f32.mrb[0].mxu0
      %v990 = vpop.f32.mrb[0].mxu0
      %v991 = vadd.f32 %v855, %v990
      %v992 = vpop.f32.mrb[0].mxu0
      %993 = vmatprep.mubr.bf16.mxu0 0
      %994 = vmatmul.mubr.bf16.gmra.mrb[0].mxu0 %v659
      %v995 = vpop.f32.mrb[0].mxu0
      %v996 = vadd.f32 %v860, %v995
      %v997 = vpop.f32.mrb[0].mxu0
      %v998 = vpop.f32.mrb[0].mxu0
      %v999 = vadd.f32 %v863, %v998
      %v1000 = vpop.f32.mrb[0].mxu0
      %1001 = vmatprep.mubr.bf16.mxu0 0
      %1002 = vmatmul.mubr.bf16.gmra.mrb[0].mxu0 %v660
      %v1003 = vpop.f32.mrb[0].mxu0
      %v1004 = vadd.f32 %v868, %v1003
      %v1005 = vpop.f32.mrb[0].mxu0
      %v1006 = vpop.f32.mrb[0].mxu0
      %v1007 = vadd.f32 %v871, %v1006
      %v1008 = vpop.f32.mrb[0].mxu0
      %1009 = vmatprep.mubr.bf16.mxu0 0
      %1010 = vmatmul.mubr.bf16.gmra.mrb[0].mxu0 %v661
      %v1011 = vpop.f32.mrb[0].mxu0
      %v1012 = vadd.f32 %v876, %v1011
      %v1013 = vpop.f32.mrb[0].mxu0
      %v1014 = vpop.f32.mrb[0].mxu0
      %v1015 = vadd.f32 %v879, %v1014
      %v1016 = vpop.f32.mrb[0].mxu0
      %1017 = vmatprep.mubr.bf16.mxu0 0
      %1018 = vmatmul.mubr.bf16.gmra.mrb[0].mxu0 %v662
      %v1019 = vpop.f32.mrb[0].mxu0
      %v1020 = vadd.f32 %v884, %v1019
      %v1021 = vpop.f32.mrb[0].mxu0
      %v1022 = vpop.f32.mrb[0].mxu0
      %v1023 = vadd.f32 %v887, %v1022
      %v1024 = vpop.f32.mrb[0].mxu0
      %1025 = vmatprep.mubr.bf16.mxu0 0
      %1026 = vmatmul.mubr.bf16.gmra.mrb[0].mxu0 %v663
      %v1027 = vpop.f32.mrb[0].mxu0
      %v1028 = vadd.f32 %v892, %v1027
      %v1029 = vpop.f32.mrb[0].mxu0
      %v1030 = vpop.f32.mrb[0].mxu0
      %v1031 = vpop.f32.mrb[0].mxu0
      %1032 = vdwg.mxu0
      %v1033 = vld [vmem:[#allocation2] sm:$0xfe]
      %s1034 = scalar_lea.vmem %s3, 128
      %v1035 = vld [vmem:[%s1034] sm:$0xf]
      %v1036 = vld [vmem:[%s1034 + $0x4] sm:$0xf]
      %v1037 = vld [vmem:[%s1034 + $0x8] sm:$0xf]
      %v1038 = vld [vmem:[%s1034 + $0xc] sm:$0xf]
      %v1039 = vld [vmem:[%s1034 + $0x10] sm:$0xf]
      %v1040 = vld [vmem:[%s1034 + $0x14] sm:$0xf]
      %v1041 = vld [vmem:[%s1034 + $0x18] sm:$0xf]
      %v1042 = vld [vmem:[%s1034 + $0x1c] sm:$0xf]
      %v1043 = vld [vmem:[%s1034 + $0x20] sm:$0xf]
      %v1044 = vld [vmem:[%s1034 + $0x24] sm:$0xf]
      %v1045 = vld [vmem:[%s1034 + $0x28] sm:$0xf]
      %v1046 = vld [vmem:[%s1034 + $0x2c] sm:$0xf]
      %v1047 = vld [vmem:[%s1034 + $0x30] sm:$0xf]
      %v1048 = vld [vmem:[%s1034 + $0x34] sm:$0xf]
      %v1049 = vld [vmem:[%s1034 + $0x38] sm:$0xf]
      %v1050 = vld [vmem:[%s1034 + $0x3c] sm:$0xf]
      %vm1058 = vcmask 1046528
      %v1059 = vrot.slane %v1033, 1
      %v1060 = vrot.slane %v658, 1
      %v1061 = vsel %vm1058, %v1059, %v1060
      %v1062 = vrot.slane %v659, 1
      %v1063 = vsel %vm1058, %v1060, %v1062
      %v1064 = vrot.slane %v660, 1
      %v1065 = vsel %vm1058, %v1062, %v1064
      %v1066 = vrot.slane %v661, 1
      %v1067 = vsel %vm1058, %v1064, %v1066
      %v1068 = vrot.slane %v662, 1
      %v1069 = vsel %vm1058, %v1066, %v1068
      %v1070 = vrot.slane %v680, 1
      %v1071 = vsel %vm1058, %v1068, %v1070
      %v1095 = vunpack.c.l.b16 %v1035
      %v1096 = vunpack.c.l.b16 %v1036
      %v1097 = vunpack.c.l.b16 %v1037
      %v1098 = vunpack.c.l.b16 %v1038
      %v1099 = vunpack.c.l.b16 %v1039
      %v1100 = vunpack.c.l.b16 %v1040
      %v1101 = vunpack.c.l.b16 %v1041
      %v1102 = vunpack.c.l.b16 %v1042
      %v1103 = vunpack.c.l.b16 %v1043
      %v1104 = vunpack.c.l.b16 %v1044
      %v1105 = vunpack.c.l.b16 %v1045
      %v1106 = vunpack.c.l.b16 %v1046
      %v1107 = vunpack.c.l.b16 %v1047
      %v1108 = vunpack.c.l.b16 %v1048
      %v1109 = vunpack.c.l.b16 %v1049
      %v1110 = vunpack.c.l.b16 %v1050
      %v1111 = vpack.c.b16 %v1096, %v1095
      %v1112 = vpack.c.b16 %v1098, %v1097
      %v1113 = vpack.c.b16 %v1100, %v1099
      %v1114 = vpack.c.b16 %v1102, %v1101
      %v1115 = vpack.c.b16 %v1104, %v1103
      %v1116 = vpack.c.b16 %v1106, %v1105
      %v1117 = vpack.c.b16 %v1108, %v1107
      %v1118 = vpack.c.b16 %v1110, %v1109
      %1127 = vmatprep.subr.bf16.mxu0 0
      %1128 = vmatpush1.bf16.msra.mxu0 %v1111
      %1129 = vmatprep.subr.bf16.mxu0 0
      %1130 = vmatpush1.bf16.msra.mxu0 %v1112
      %1131 = vmatprep.subr.bf16.mxu0 0
      %1132 = vmatpush1.bf16.msra.mxu0 %v1113
      %1133 = vmatprep.subr.bf16.mxu0 0
      %1134 = vmatpush1.bf16.msra.mxu0 %v1114
      %1135 = vmatprep.subr.bf16.mxu0 0
      %1136 = vmatpush1.bf16.msra.mxu0 %v1115
      %1137 = vmatprep.subr.bf16.mxu0 0
      %1138 = vmatpush1.bf16.msra.mxu0 %v1116
      %1139 = vmatprep.subr.bf16.mxu0 0
      %1140 = vmatpush1.bf16.msra.mxu0 %v1117
      %1141 = vmatprep.subr.bf16.mxu0 0
      %1142 = vmatpush1.bf16.msra.mxu0 %v1118
      %1143 = vmatprep.subr.bf16.mxu0 0
      %1144 = vmatpush1.bf16.msra.mxu0 0
      %1145 = vmatprep.subr.bf16.mxu0 0
      %1146 = vmatpush1.bf16.msra.mxu0 0
      %1147 = vmatprep.subr.bf16.mxu0 0
      %1148 = vmatpush1.bf16.msra.mxu0 0
      %1149 = vmatprep.subr.bf16.mxu0 0
      %1150 = vmatpush1.bf16.msra.mxu0 0
      %1151 = vmatprep.subr.bf16.mxu0 0
      %1152 = vmatpush1.bf16.msra.mxu0 0
      %1153 = vmatprep.subr.bf16.mxu0 0
      %1154 = vmatpush1.bf16.msra.mxu0 0
      %1155 = vmatprep.subr.bf16.mxu0 0
      %1156 = vmatpush1.bf16.msra.mxu0 0
      %1157 = vmatprep.subr.bf16.mxu0 0
      %1158 = vmatpush1.bf16.msra.mxu0 0
      %1159 = vmatprep.mubr.bf16.mxu0 0
      %1160 = vmatmul.mubr.bf16.gmra.mrb[0].mxu0 %v1061
      %v1161 = vpop.f32.mrb[0].mxu0
      %v1162 = vadd.f32 0.0, %v1161
      %v1163 = vpop.f32.mrb[0].mxu0
      %v1164 = vpop.f32.mrb[0].mxu0
      %v1165 = vadd.f32 0.0, %v1164
      %v1166 = vpop.f32.mrb[0].mxu0
      %1167 = vmatprep.mubr.bf16.mxu0 0
      %1168 = vmatmul.mubr.bf16.gmra.mrb[0].mxu0 %v1063
      %v1169 = vpop.f32.mrb[0].mxu0
      %v1170 = vadd.f32 0.0, %v1169
      %v1171 = vpop.f32.mrb[0].mxu0
      %v1172 = vpop.f32.mrb[0].mxu0
      %v1173 = vadd.f32 0.0, %v1172
      %v1174 = vpop.f32.mrb[0].mxu0
      %1175 = vmatprep.mubr.bf16.mxu0 0
      %1176 = vmatmul.mubr.bf16.gmra.mrb[0].mxu0 %v1065
      %v1177 = vpop.f32.mrb[0].mxu0
      %v1178 = vadd.f32 0.0, %v1177
      %v1179 = vpop.f32.mrb[0].mxu0
      %v1180 = vpop.f32.mrb[0].mxu0
      %v1181 = vadd.f32 0.0, %v1180
      %v1182 = vpop.f32.mrb[0].mxu0
      %1183 = vmatprep.mubr.bf16.mxu0 0
      %1184 = vmatmul.mubr.bf16.gmra.mrb[0].mxu0 %v1067
      %v1185 = vpop.f32.mrb[0].mxu0
      %v1186 = vadd.f32 0.0, %v1185
      %v1187 = vpop.f32.mrb[0].mxu0
      %v1188 = vpop.f32.mrb[0].mxu0
      %v1189 = vadd.f32 0.0, %v1188
      %v1190 = vpop.f32.mrb[0].mxu0
      %1191 = vmatprep.mubr.bf16.mxu0 0
      %1192 = vmatmul.mubr.bf16.gmra.mrb[0].mxu0 %v1069
      %v1193 = vpop.f32.mrb[0].mxu0
      %v1194 = vadd.f32 0.0, %v1193
      %v1195 = vpop.f32.mrb[0].mxu0
      %v1196 = vpop.f32.mrb[0].mxu0
      %v1197 = vadd.f32 0.0, %v1196
      %v1198 = vpop.f32.mrb[0].mxu0
      %1199 = vmatprep.mubr.bf16.mxu0 0
      %1200 = vmatmul.mubr.bf16.gmra.mrb[0].mxu0 %v1071
      %v1201 = vpop.f32.mrb[0].mxu0
      %v1202 = vadd.f32 0.0, %v1201
      %v1203 = vpop.f32.mrb[0].mxu0
      %v1204 = vpop.f32.mrb[0].mxu0
      %v1205 = vadd.f32 0.0, %v1204
      %v1206 = vpop.f32.mrb[0].mxu0
      %1207 = vmatprep.mubr.bf16.mxu0 0
      %1208 = vmatmul.mubr.bf16.gmra.mrb[0].mxu0 %v1070
      %v1209 = vpop.f32.mrb[0].mxu0
      %v1210 = vadd.f32 0.0, %v1209
      %v1211 = vpop.f32.mrb[0].mxu0
      %v1212 = vpop.f32.mrb[0].mxu0
      %v1213 = vpop.f32.mrb[0].mxu0
      %1214 = vdwg.mxu0
      %v1215 = vadd.f32 %v980, %v1162
      %v1216 = vadd.f32 %v983, %v1165
      %v1217 = vadd.f32 %v988, %v1170
      %v1218 = vadd.f32 %v991, %v1173
      %v1219 = vadd.f32 %v996, %v1178
      %v1220 = vadd.f32 %v999, %v1181
      %v1221 = vadd.f32 %v1004, %v1186
      %v1222 = vadd.f32 %v1007, %v1189
      %v1223 = vadd.f32 %v1012, %v1194
      %v1224 = vadd.f32 %v1015, %v1197
      %v1225 = vadd.f32 %v1020, %v1202
      %v1226 = vadd.f32 %v1023, %v1205
      %v1227 = vadd.f32 %v1028, %v1210
      %v1228 = vld [vmem:[#allocation2] sm:$0xe0]
      %v1229 = vld [vmem:[#allocation2 + $0x8] sm:$0xff]
      %v1230 = vld [vmem:[#allocation2 + $0x10] sm:$0xff]
      %v1231 = vld [vmem:[#allocation2 + $0x18] sm:$0xff]
      %v1232 = vld [vmem:[#allocation2 + $0x20] sm:$0xff]
      %v1233 = vld [vmem:[#allocation2 + $0x28] sm:$0xff]
      %v1234 = vld [vmem:[#allocation2 + $0x30] sm:$0xff]
      %v1235 = vld [vmem:[#allocation2 + $0x38] sm:$0x3]
      %s1236 = scalar_lea.vmem %s3, 192
      %v1237 = vld [vmem:[%s1236] sm:$0xf]
      %v1238 = vld [vmem:[%s1236 + $0x4] sm:$0xf]
      %v1239 = vld [vmem:[%s1236 + $0x8] sm:$0xf]
      %v1240 = vld [vmem:[%s1236 + $0xc] sm:$0xf]
      %v1241 = vld [vmem:[%s1236 + $0x10] sm:$0xf]
      %v1242 = vld [vmem:[%s1236 + $0x14] sm:$0xf]
      %v1243 = vld [vmem:[%s1236 + $0x18] sm:$0xf]
      %v1244 = vld [vmem:[%s1236 + $0x1c] sm:$0xf]
      %v1245 = vld [vmem:[%s1236 + $0x20] sm:$0xf]
      %v1246 = vld [vmem:[%s1236 + $0x24] sm:$0xf]
      %v1247 = vld [vmem:[%s1236 + $0x28] sm:$0xf]
      %v1248 = vld [vmem:[%s1236 + $0x2c] sm:$0xf]
      %v1249 = vld [vmem:[%s1236 + $0x30] sm:$0xf]
      %v1250 = vld [vmem:[%s1236 + $0x34] sm:$0xf]
      %v1251 = vld [vmem:[%s1236 + $0x38] sm:$0xf]
      %v1252 = vld [vmem:[%s1236 + $0x3c] sm:$0xf]
      %vm1253 = vsmask.f32 2304
      %v1255 = vshrl.u32 %v1228, 16
      %v1257 = vrot.slane %v1255, 5
      %v1258 = vshll.u32 %v1228, 16
      %v1260 = vrot.slane %v1258, 6
      %v1261 = vor.u32 %v1257, %v1260
      %v1263 = vshrl.u32 %v1229, 16
      %v1265 = vrot.slane %v1263, 5
      %v1266 = vshll.u32 %v1229, 16
      %v1268 = vrot.slane %v1266, 6
      %v1269 = vor.u32 %v1265, %v1268
      %v1270 = vsel %vm1253, %v1261, %v1269
      %v1272 = vshrl.u32 %v1230, 16
      %v1274 = vrot.slane %v1272, 5
      %v1275 = vshll.u32 %v1230, 16
      %v1277 = vrot.slane %v1275, 6
      %v1278 = vor.u32 %v1274, %v1277
      %v1279 = vsel %vm1253, %v1269, %v1278
      %v1281 = vshrl.u32 %v1231, 16
      %v1283 = vrot.slane %v1281, 5
      %v1284 = vshll.u32 %v1231, 16
      %v1286 = vrot.slane %v1284, 6
      %v1287 = vor.u32 %v1283, %v1286
      %v1288 = vsel %vm1253, %v1278, %v1287
      %v1290 = vshrl.u32 %v1232, 16
      %v1292 = vrot.slane %v1290, 5
      %v1293 = vshll.u32 %v1232, 16
      %v1295 = vrot.slane %v1293, 6
      %v1296 = vor.u32 %v1292, %v1295
      %v1297 = vsel %vm1253, %v1287, %v1296
      %v1299 = vshrl.u32 %v1233, 16
      %v1301 = vrot.slane %v1299, 5
      %v1302 = vshll.u32 %v1233, 16
      %v1304 = vrot.slane %v1302, 6
      %v1305 = vor.u32 %v1301, %v1304
      %v1306 = vsel %vm1253, %v1296, %v1305
      %v1308 = vshrl.u32 %v1234, 16
      %v1310 = vrot.slane %v1308, 5
      %v1311 = vshll.u32 %v1234, 16
      %v1313 = vrot.slane %v1311, 6
      %v1314 = vor.u32 %v1310, %v1313
      %v1315 = vsel %vm1253, %v1305, %v1314
      %v1317 = vshrl.u32 %v1235, 16
      %v1319 = vrot.slane %v1317, 5
      %v1320 = vshll.u32 %v1235, 16
      %v1322 = vrot.slane %v1320, 6
      %v1323 = vor.u32 %v1319, %v1322
      %v1324 = vsel %vm1253, %v1314, %v1323
      %v1348 = vunpack.c.l.b16 %v1237
      %v1349 = vunpack.c.l.b16 %v1238
      %v1350 = vunpack.c.l.b16 %v1239
      %v1351 = vunpack.c.l.b16 %v1240
      %v1352 = vunpack.c.l.b16 %v1241
      %v1353 = vunpack.c.l.b16 %v1242
      %v1354 = vunpack.c.l.b16 %v1243
      %v1355 = vunpack.c.l.b16 %v1244
      %v1356 = vunpack.c.l.b16 %v1245
      %v1357 = vunpack.c.l.b16 %v1246
      %v1358 = vunpack.c.l.b16 %v1247
      %v1359 = vunpack.c.l.b16 %v1248
      %v1360 = vunpack.c.l.b16 %v1249
      %v1361 = vunpack.c.l.b16 %v1250
      %v1362 = vunpack.c.l.b16 %v1251
      %v1363 = vunpack.c.l.b16 %v1252
      %v1364 = vpack.c.b16 %v1349, %v1348
      %v1365 = vpack.c.b16 %v1351, %v1350
      %v1366 = vpack.c.b16 %v1353, %v1352
      %v1367 = vpack.c.b16 %v1355, %v1354
      %v1368 = vpack.c.b16 %v1357, %v1356
      %v1369 = vpack.c.b16 %v1359, %v1358
      %v1370 = vpack.c.b16 %v1361, %v1360
      %v1371 = vpack.c.b16 %v1363, %v1362
      %1380 = vmatprep.subr.bf16.mxu0 0
      %1381 = vmatpush1.bf16.msra.mxu0 %v1364
      %1382 = vmatprep.subr.bf16.mxu0 0
      %1383 = vmatpush1.bf16.msra.mxu0 %v1365
      %1384 = vmatprep.subr.bf16.mxu0 0
      %1385 = vmatpush1.bf16.msra.mxu0 %v1366
      %1386 = vmatprep.subr.bf16.mxu0 0
      %1387 = vmatpush1.bf16.msra.mxu0 %v1367
      %1388 = vmatprep.subr.bf16.mxu0 0
      %1389 = vmatpush1.bf16.msra.mxu0 %v1368
      %1390 = vmatprep.subr.bf16.mxu0 0
      %1391 = vmatpush1.bf16.msra.mxu0 %v1369
      %1392 = vmatprep.subr.bf16.mxu0 0
      %1393 = vmatpush1.bf16.msra.mxu0 %v1370
      %1394 = vmatprep.subr.bf16.mxu0 0
      %1395 = vmatpush1.bf16.msra.mxu0 %v1371
      %1396 = vmatprep.subr.bf16.mxu0 0
      %1397 = vmatpush1.bf16.msra.mxu0 0
      %1398 = vmatprep.subr.bf16.mxu0 0
      %1399 = vmatpush1.bf16.msra.mxu0 0
      %1400 = vmatprep.subr.bf16.mxu0 0
      %1401 = vmatpush1.bf16.msra.mxu0 0
      %1402 = vmatprep.subr.bf16.mxu0 0
      %1403 = vmatpush1.bf16.msra.mxu0 0
      %1404 = vmatprep.subr.bf16.mxu0 0
      %1405 = vmatpush1.bf16.msra.mxu0 0
      %1406 = vmatprep.subr.bf16.mxu0 0
      %1407 = vmatpush1.bf16.msra.mxu0 0
      %1408 = vmatprep.subr.bf16.mxu0 0
      %1409 = vmatpush1.bf16.msra.mxu0 0
      %1410 = vmatprep.subr.bf16.mxu0 0
      %1411 = vmatpush1.bf16.msra.mxu0 0
      %1412 = vmatprep.mubr.bf16.mxu0 0
      %1413 = vmatmul.mubr.bf16.gmra.mrb[0].mxu0 %v1270
      %v1414 = vpop.f32.mrb[0].mxu0
      %v1415 = vadd.f32 0.0, %v1414
      %v1416 = vpop.f32.mrb[0].mxu0
      %v1417 = vpop.f32.mrb[0].mxu0
      %v1418 = vadd.f32 0.0, %v1417
      %v1419 = vpop.f32.mrb[0].mxu0
      %1420 = vmatprep.mubr.bf16.mxu0 0
      %1421 = vmatmul.mubr.bf16.gmra.mrb[0].mxu0 %v1279
      %v1422 = vpop.f32.mrb[0].mxu0
      %v1423 = vadd.f32 0.0, %v1422
      %v1424 = vpop.f32.mrb[0].mxu0
      %v1425 = vpop.f32.mrb[0].mxu0
      %v1426 = vadd.f32 0.0, %v1425
      %v1427 = vpop.f32.mrb[0].mxu0
      %1428 = vmatprep.mubr.bf16.mxu0 0
      %1429 = vmatmul.mubr.bf16.gmra.mrb[0].mxu0 %v1288
      %v1430 = vpop.f32.mrb[0].mxu0
      %v1431 = vadd.f32 0.0, %v1430
      %v1432 = vpop.f32.mrb[0].mxu0
      %v1433 = vpop.f32.mrb[0].mxu0
      %v1434 = vadd.f32 0.0, %v1433
      %v1435 = vpop.f32.mrb[0].mxu0
      %1436 = vmatprep.mubr.bf16.mxu0 0
      %1437 = vmatmul.mubr.bf16.gmra.mrb[0].mxu0 %v1297
      %v1438 = vpop.f32.mrb[0].mxu0
      %v1439 = vadd.f32 0.0, %v1438
      %v1440 = vpop.f32.mrb[0].mxu0
      %v1441 = vpop.f32.mrb[0].mxu0
      %v1442 = vadd.f32 0.0, %v1441
      %v1443 = vpop.f32.mrb[0].mxu0
      %1444 = vmatprep.mubr.bf16.mxu0 0
      %1445 = vmatmul.mubr.bf16.gmra.mrb[0].mxu0 %v1306
      %v1446 = vpop.f32.mrb[0].mxu0
      %v1447 = vadd.f32 0.0, %v1446
      %v1448 = vpop.f32.mrb[0].mxu0
      %v1449 = vpop.f32.mrb[0].mxu0
      %v1450 = vadd.f32 0.0, %v1449
      %v1451 = vpop.f32.mrb[0].mxu0
      %1452 = vmatprep.mubr.bf16.mxu0 0
      %1453 = vmatmul.mubr.bf16.gmra.mrb[0].mxu0 %v1315
      %v1454 = vpop.f32.mrb[0].mxu0
      %v1455 = vadd.f32 0.0, %v1454
      %v1456 = vpop.f32.mrb[0].mxu0
      %v1457 = vpop.f32.mrb[0].mxu0
      %v1458 = vadd.f32 0.0, %v1457
      %v1459 = vpop.f32.mrb[0].mxu0
      %1460 = vmatprep.mubr.bf16.mxu0 0
      %1461 = vmatmul.mubr.bf16.gmra.mrb[0].mxu0 %v1324
      %v1462 = vpop.f32.mrb[0].mxu0
      %v1463 = vadd.f32 0.0, %v1462
      %v1464 = vpop.f32.mrb[0].mxu0
      %v1465 = vpop.f32.mrb[0].mxu0
      %v1466 = vpop.f32.mrb[0].mxu0
      %1467 = vdwg.mxu0
      %v1468 = vadd.f32 %v1215, %v1415
      %v1469 = vadd.f32 %v1216, %v1418
      %v1470 = vadd.f32 %v1217, %v1423
      %v1471 = vadd.f32 %v1218, %v1426
      %v1472 = vadd.f32 %v1219, %v1431
      %v1473 = vadd.f32 %v1220, %v1434
      %v1474 = vadd.f32 %v1221, %v1439
      %v1475 = vadd.f32 %v1222, %v1442
      %v1476 = vadd.f32 %v1223, %v1447
      %v1477 = vadd.f32 %v1224, %v1450
      %v1478 = vadd.f32 %v1225, %v1455
      %v1479 = vadd.f32 %v1226, %v1458
      %v1480 = vadd.f32 %v1227, %v1463
      %v1481 = vld [vmem:[#allocation2] sm:$0xc0]
      %s1482 = scalar_lea.vmem %s3, 256
      %v1483 = vld [vmem:[%s1482] sm:$0xf]
      %v1484 = vld [vmem:[%s1482 + $0x4] sm:$0xf]
      %v1485 = vld [vmem:[%s1482 + $0x8] sm:$0xf]
      %v1486 = vld [vmem:[%s1482 + $0xc] sm:$0xf]
      %v1487 = vld [vmem:[%s1482 + $0x10] sm:$0xf]
      %v1488 = vld [vmem:[%s1482 + $0x14] sm:$0xf]
      %v1489 = vld [vmem:[%s1482 + $0x18] sm:$0xf]
      %v1490 = vld [vmem:[%s1482 + $0x1c] sm:$0xf]
      %v1491 = vld [vmem:[%s1482 + $0x20] sm:$0xf]
      %v1492 = vld [vmem:[%s1482 + $0x24] sm:$0xf]
      %v1493 = vld [vmem:[%s1482 + $0x28] sm:$0xf]
      %v1494 = vld [vmem:[%s1482 + $0x2c] sm:$0xf]
      %v1495 = vld [vmem:[%s1482 + $0x30] sm:$0xf]
      %v1496 = vld [vmem:[%s1482 + $0x34] sm:$0xf]
      %v1497 = vld [vmem:[%s1482 + $0x38] sm:$0xf]
      %v1498 = vld [vmem:[%s1482 + $0x3c] sm:$0xf]
      %vm1507 = vcmask 1041408
      %v1508 = vrot.slane %v1481, 6
      %v1509 = vrot.slane %v1229, 6
      %v1510 = vsel %vm1507, %v1508, %v1509
      %v1511 = vrot.slane %v1230, 6
      %v1512 = vsel %vm1507, %v1509, %v1511
      %v1513 = vrot.slane %v1231, 6
      %v1514 = vsel %vm1507, %v1511, %v1513
      %v1515 = vrot.slane %v1232, 6
      %v1516 = vsel %vm1507, %v1513, %v1515
      %v1517 = vrot.slane %v1233, 6
      %v1518 = vsel %vm1507, %v1515, %v1517
      %v1519 = vrot.slane %v1234, 6
      %v1520 = vsel %vm1507, %v1517, %v1519
      %v1521 = vrot.slane %v1235, 6
      %v1522 = vsel %vm1507, %v1519, %v1521
      %v1546 = vunpack.c.l.b16 %v1483
      %v1547 = vunpack.c.l.b16 %v1484
      %v1548 = vunpack.c.l.b16 %v1485
      %v1549 = vunpack.c.l.b16 %v1486
      %v1550 = vunpack.c.l.b16 %v1487
      %v1551 = vunpack.c.l.b16 %v1488
      %v1552 = vunpack.c.l.b16 %v1489
      %v1553 = vunpack.c.l.b16 %v1490
      %v1554 = vunpack.c.l.b16 %v1491
      %v1555 = vunpack.c.l.b16 %v1492
      %v1556 = vunpack.c.l.b16 %v1493
      %v1557 = vunpack.c.l.b16 %v1494
      %v1558 = vunpack.c.l.b16 %v1495
      %v1559 = vunpack.c.l.b16 %v1496
      %v1560 = vunpack.c.l.b16 %v1497
      %v1561 = vunpack.c.l.b16 %v1498
      %v1562 = vpack.c.b16 %v1547, %v1546
      %v1563 = vpack.c.b16 %v1549, %v1548
      %v1564 = vpack.c.b16 %v1551, %v1550
      %v1565 = vpack.c.b16 %v1553, %v1552
      %v1566 = vpack.c.b16 %v1555, %v1554
      %v1567 = vpack.c.b16 %v1557, %v1556
      %v1568 = vpack.c.b16 %v1559, %v1558
      %v1569 = vpack.c.b16 %v1561, %v1560
      %1578 = vmatprep.subr.bf16.mxu0 0
      %1579 = vmatpush1.bf16.msra.mxu0 %v1562
      %1580 = vmatprep.subr.bf16.mxu0 0
      %1581 = vmatpush1.bf16.msra.mxu0 %v1563
      %1582 = vmatprep.subr.bf16.mxu0 0
      %1583 = vmatpush1.bf16.msra.mxu0 %v1564
      %1584 = vmatprep.subr.bf16.mxu0 0
      %1585 = vmatpush1.bf16.msra.mxu0 %v1565
      %1586 = vmatprep.subr.bf16.mxu0 0
      %1587 = vmatpush1.bf16.msra.mxu0 %v1566
      %1588 = vmatprep.subr.bf16.mxu0 0
      %1589 = vmatpush1.bf16.msra.mxu0 %v1567
      %1590 = vmatprep.subr.bf16.mxu0 0
      %1591 = vmatpush1.bf16.msra.mxu0 %v1568
      %1592 = vmatprep.subr.bf16.mxu0 0
      %1593 = vmatpush1.bf16.msra.mxu0 %v1569
      %1594 = vmatprep.subr.bf16.mxu0 0
      %1595 = vmatpush1.bf16.msra.mxu0 0
      %1596 = vmatprep.subr.bf16.mxu0 0
      %1597 = vmatpush1.bf16.msra.mxu0 0
      %1598 = vmatprep.subr.bf16.mxu0 0
      %1599 = vmatpush1.bf16.msra.mxu0 0
      %1600 = vmatprep.subr.bf16.mxu0 0
      %1601 = vmatpush1.bf16.msra.mxu0 0
      %1602 = vmatprep.subr.bf16.mxu0 0
      %1603 = vmatpush1.bf16.msra.mxu0 0
      %1604 = vmatprep.subr.bf16.mxu0 0
      %1605 = vmatpush1.bf16.msra.mxu0 0
      %1606 = vmatprep.subr.bf16.mxu0 0
      %1607 = vmatpush1.bf16.msra.mxu0 0
      %1608 = vmatprep.subr.bf16.mxu0 0
      %1609 = vmatpush1.bf16.msra.mxu0 0
      %1610 = vmatprep.mubr.bf16.mxu0 0
      %1611 = vmatmul.mubr.bf16.gmra.mrb[0].mxu0 %v1510
      %v1612 = vpop.f32.mrb[0].mxu0
      %v1613 = vadd.f32 0.0, %v1612
      %v1614 = vpop.f32.mrb[0].mxu0
      %v1615 = vpop.f32.mrb[0].mxu0
      %v1616 = vadd.f32 0.0, %v1615
      %v1617 = vpop.f32.mrb[0].mxu0
      %1618 = vmatprep.mubr.bf16.mxu0 0
      %1619 = vmatmul.mubr.bf16.gmra.mrb[0].mxu0 %v1512
      %v1620 = vpop.f32.mrb[0].mxu0
      %v1621 = vadd.f32 0.0, %v1620
      %v1622 = vpop.f32.mrb[0].mxu0
      %v1623 = vpop.f32.mrb[0].mxu0
      %v1624 = vadd.f32 0.0, %v1623
      %v1625 = vpop.f32.mrb[0].mxu0
      %1626 = vmatprep.mubr.bf16.mxu0 0
      %1627 = vmatmul.mubr.bf16.gmra.mrb[0].mxu0 %v1514
      %v1628 = vpop.f32.mrb[0].mxu0
      %v1629 = vadd.f32 0.0, %v1628
      %v1630 = vpop.f32.mrb[0].mxu0
      %v1631 = vpop.f32.mrb[0].mxu0
      %v1632 = vadd.f32 0.0, %v1631
      %v1633 = vpop.f32.mrb[0].mxu0
      %1634 = vmatprep.mubr.bf16.mxu0 0
      %1635 = vmatmul.mubr.bf16.gmra.mrb[0].mxu0 %v1516
      %v1636 = vpop.f32.mrb[0].mxu0
      %v1637 = vadd.f32 0.0, %v1636
      %v1638 = vpop.f32.mrb[0].mxu0
      %v1639 = vpop.f32.mrb[0].mxu0
      %v1640 = vadd.f32 0.0, %v1639
      %v1641 = vpop.f32.mrb[0].mxu0
      %1642 = vmatprep.mubr.bf16.mxu0 0
      %1643 = vmatmul.mubr.bf16.gmra.mrb[0].mxu0 %v1518
      %v1644 = vpop.f32.mrb[0].mxu0
      %v1645 = vadd.f32 0.0, %v1644
      %v1646 = vpop.f32.mrb[0].mxu0
      %v1647 = vpop.f32.mrb[0].mxu0
      %v1648 = vadd.f32 0.0, %v1647
      %v1649 = vpop.f32.mrb[0].mxu0
      %1650 = vmatprep.mubr.bf16.mxu0 0
      %1651 = vmatmul.mubr.bf16.gmra.mrb[0].mxu0 %v1520
      %v1652 = vpop.f32.mrb[0].mxu0
      %v1653 = vadd.f32 0.0, %v1652
      %v1654 = vpop.f32.mrb[0].mxu0
      %v1655 = vpop.f32.mrb[0].mxu0
      %v1656 = vadd.f32 0.0, %v1655
      %v1657 = vpop.f32.mrb[0].mxu0
      %1658 = vmatprep.mubr.bf16.mxu0 0
      %1659 = vmatmul.mubr.bf16.gmra.mrb[0].mxu0 %v1522
      %v1660 = vpop.f32.mrb[0].mxu0
      %v1661 = vadd.f32 0.0, %v1660
      %v1662 = vpop.f32.mrb[0].mxu0
      %v1663 = vpop.f32.mrb[0].mxu0
      %v1664 = vpop.f32.mrb[0].mxu0
      %1665 = vdwg.mxu0
      %v1666 = vadd.f32 %v1468, %v1613
      %v1667 = vadd.f32 %v1469, %v1616
      %v1668 = vadd.f32 %v1470, %v1621
      %v1669 = vadd.f32 %v1471, %v1624
      %v1670 = vadd.f32 %v1472, %v1629
      %v1671 = vadd.f32 %v1473, %v1632
      %v1672 = vadd.f32 %v1474, %v1637
      %v1673 = vadd.f32 %v1475, %v1640
      %v1674 = vadd.f32 %v1476, %v1645
      %v1675 = vadd.f32 %v1477, %v1648
      %v1676 = vadd.f32 %v1478, %v1653
      %v1677 = vadd.f32 %v1479, %v1656
      %v1678 = vadd.f32 %v1480, %v1661
      %v1679 = vld [vmem:[#allocation2 + $0x38] sm:$0x7]
      %s1680 = scalar_lea.vmem %s3, 320
      %v1681 = vld [vmem:[%s1680] sm:$0xf]
      %v1682 = vld [vmem:[%s1680 + $0x4] sm:$0xf]
      %v1683 = vld [vmem:[%s1680 + $0x8] sm:$0xf]
      %v1684 = vld [vmem:[%s1680 + $0xc] sm:$0xf]
      %v1685 = vld [vmem:[%s1680 + $0x10] sm:$0xf]
      %v1686 = vld [vmem:[%s1680 + $0x14] sm:$0xf]
      %v1687 = vld [vmem:[%s1680 + $0x18] sm:$0xf]
      %v1688 = vld [vmem:[%s1680 + $0x1c] sm:$0xf]
      %v1689 = vld [vmem:[%s1680 + $0x20] sm:$0xf]
      %v1690 = vld [vmem:[%s1680 + $0x24] sm:$0xf]
      %v1691 = vld [vmem:[%s1680 + $0x28] sm:$0xf]
      %v1692 = vld [vmem:[%s1680 + $0x2c] sm:$0xf]
      %v1693 = vld [vmem:[%s1680 + $0x30] sm:$0xf]
      %v1694 = vld [vmem:[%s1680 + $0x34] sm:$0xf]
      %v1695 = vld [vmem:[%s1680 + $0x38] sm:$0xf]
      %v1696 = vld [vmem:[%s1680 + $0x3c] sm:$0xf]
      %vm1697 = vsmask.f32 1280
      %v1699 = vshrl.u32 %v1481, 16
      %v1701 = vrot.slane %v1699, 6
      %v1702 = vshll.u32 %v1481, 16
      %v1704 = vrot.slane %v1702, 7
      %v1705 = vor.u32 %v1701, %v1704
      %v1706 = vrot.slane %v1263, 6
      %v1707 = vrot.slane %v1266, 7
      %v1708 = vor.u32 %v1706, %v1707
      %v1709 = vsel %vm1697, %v1705, %v1708
      %v1710 = vrot.slane %v1272, 6
      %v1711 = vrot.slane %v1275, 7
      %v1712 = vor.u32 %v1710, %v1711
      %v1713 = vsel %vm1697, %v1708, %v1712
      %v1714 = vrot.slane %v1281, 6
      %v1715 = vrot.slane %v1284, 7
      %v1716 = vor.u32 %v1714, %v1715
      %v1717 = vsel %vm1697, %v1712, %v1716
      %v1718 = vrot.slane %v1290, 6
      %v1719 = vrot.slane %v1293, 7
      %v1720 = vor.u32 %v1718, %v1719
      %v1721 = vsel %vm1697, %v1716, %v1720
      %v1722 = vrot.slane %v1299, 6
      %v1723 = vrot.slane %v1302, 7
      %v1724 = vor.u32 %v1722, %v1723
      %v1725 = vsel %vm1697, %v1720, %v1724
      %v1726 = vrot.slane %v1308, 6
      %v1727 = vrot.slane %v1311, 7
      %v1728 = vor.u32 %v1726, %v1727
      %v1729 = vsel %vm1697, %v1724, %v1728
      %v1731 = vshrl.u32 %v1679, 16
      %v1733 = vrot.slane %v1731, 6
      %v1734 = vshll.u32 %v1679, 16
      %v1736 = vrot.slane %v1734, 7
      %v1737 = vor.u32 %v1733, %v1736
      %v1738 = vsel %vm1697, %v1728, %v1737
      %v1762 = vunpack.c.l.b16 %v1681
      %v1763 = vunpack.c.l.b16 %v1682
      %v1764 = vunpack.c.l.b16 %v1683
      %v1765 = vunpack.c.l.b16 %v1684
      %v1766 = vunpack.c.l.b16 %v1685
      %v1767 = vunpack.c.l.b16 %v1686
      %v1768 = vunpack.c.l.b16 %v1687
      %v1769 = vunpack.c.l.b16 %v1688
      %v1770 = vunpack.c.l.b16 %v1689
      %v1771 = vunpack.c.l.b16 %v1690
      %v1772 = vunpack.c.l.b16 %v1691
      %v1773 = vunpack.c.l.b16 %v1692
      %v1774 = vunpack.c.l.b16 %v1693
      %v1775 = vunpack.c.l.b16 %v1694
      %v1776 = vunpack.c.l.b16 %v1695
      %v1777 = vunpack.c.l.b16 %v1696
      %v1778 = vpack.c.b16 %v1763, %v1762
      %v1779 = vpack.c.b16 %v1765, %v1764
      %v1780 = vpack.c.b16 %v1767, %v1766
      %v1781 = vpack.c.b16 %v1769, %v1768
      %v1782 = vpack.c.b16 %v1771, %v1770
      %v1783 = vpack.c.b16 %v1773, %v1772
      %v1784 = vpack.c.b16 %v1775, %v1774
      %v1785 = vpack.c.b16 %v1777, %v1776
      %1794 = vmatprep.subr.bf16.mxu0 0
      %1795 = vmatpush1.bf16.msra.mxu0 %v1778
      %1796 = vmatprep.subr.bf16.mxu0 0
      %1797 = vmatpush1.bf16.msra.mxu0 %v1779
      %1798 = vmatprep.subr.bf16.mxu0 0
      %1799 = vmatpush1.bf16.msra.mxu0 %v1780
      %1800 = vmatprep.subr.bf16.mxu0 0
      %1801 = vmatpush1.bf16.msra.mxu0 %v1781
      %1802 = vmatprep.subr.bf16.mxu0 0
      %1803 = vmatpush1.bf16.msra.mxu0 %v1782
      %1804 = vmatprep.subr.bf16.mxu0 0
      %1805 = vmatpush1.bf16.msra.mxu0 %v1783
      %1806 = vmatprep.subr.bf16.mxu0 0
      %1807 = vmatpush1.bf16.msra.mxu0 %v1784
      %1808 = vmatprep.subr.bf16.mxu0 0
      %1809 = vmatpush1.bf16.msra.mxu0 %v1785
      %1810 = vmatprep.subr.bf16.mxu0 0
      %1811 = vmatpush1.bf16.msra.mxu0 0
      %1812 = vmatprep.subr.bf16.mxu0 0
      %1813 = vmatpush1.bf16.msra.mxu0 0
      %1814 = vmatprep.subr.bf16.mxu0 0
      %1815 = vmatpush1.bf16.msra.mxu0 0
      %1816 = vmatprep.subr.bf16.mxu0 0
      %1817 = vmatpush1.bf16.msra.mxu0 0
      %1818 = vmatprep.subr.bf16.mxu0 0
      %1819 = vmatpush1.bf16.msra.mxu0 0
      %1820 = vmatprep.subr.bf16.mxu0 0
      %1821 = vmatpush1.bf16.msra.mxu0 0
      %1822 = vmatprep.subr.bf16.mxu0 0
      %1823 = vmatpush1.bf16.msra.mxu0 0
      %1824 = vmatprep.subr.bf16.mxu0 0
      %1825 = vmatpush1.bf16.msra.mxu0 0
      %1826 = vmatprep.mubr.bf16.mxu0 0
      %1827 = vmatmul.mubr.bf16.gmra.mrb[0].mxu0 %v1709
      %v1828 = vpop.f32.mrb[0].mxu0
      %v1829 = vadd.f32 0.0, %v1828
      %v1830 = vpop.f32.mrb[0].mxu0
      %v1831 = vpop.f32.mrb[0].mxu0
      %v1832 = vadd.f32 0.0, %v1831
      %v1833 = vpop.f32.mrb[0].mxu0
      %1834 = vmatprep.mubr.bf16.mxu0 0
      %1835 = vmatmul.mubr.bf16.gmra.mrb[0].mxu0 %v1713
      %v1836 = vpop.f32.mrb[0].mxu0
      %v1837 = vadd.f32 0.0, %v1836
      %v1838 = vpop.f32.mrb[0].mxu0
      %v1839 = vpop.f32.mrb[0].mxu0
      %v1840 = vadd.f32 0.0, %v1839
      %v1841 = vpop.f32.mrb[0].mxu0
      %1842 = vmatprep.mubr.bf16.mxu0 0
      %1843 = vmatmul.mubr.bf16.gmra.mrb[0].mxu0 %v1717
      %v1844 = vpop.f32.mrb[0].mxu0
      %v1845 = vadd.f32 0.0, %v1844
      %v1846 = vpop.f32.mrb[0].mxu0
      %v1847 = vpop.f32.mrb[0].mxu0
      %v1848 = vadd.f32 0.0, %v1847
      %v1849 = vpop.f32.mrb[0].mxu0
      %1850 = vmatprep.mubr.bf16.mxu0 0
      %1851 = vmatmul.mubr.bf16.gmra.mrb[0].mxu0 %v1721
      %v1852 = vpop.f32.mrb[0].mxu0
      %v1853 = vadd.f32 0.0, %v1852
      %v1854 = vpop.f32.mrb[0].mxu0
      %v1855 = vpop.f32.mrb[0].mxu0
      %v1856 = vadd.f32 0.0, %v1855
      %v1857 = vpop.f32.mrb[0].mxu0
      %1858 = vmatprep.mubr.bf16.mxu0 0
      %1859 = vmatmul.mubr.bf16.gmra.mrb[0].mxu0 %v1725
      %v1860 = vpop.f32.mrb[0].mxu0
      %v1861 = vadd.f32 0.0, %v1860
      %v1862 = vpop.f32.mrb[0].mxu0
      %v1863 = vpop.f32.mrb[0].mxu0
      %v1864 = vadd.f32 0.0, %v1863
      %v1865 = vpop.f32.mrb[0].mxu0
      %1866 = vmatprep.mubr.bf16.mxu0 0
      %1867 = vmatmul.mubr.bf16.gmra.mrb[0].mxu0 %v1729
      %v1868 = vpop.f32.mrb[0].mxu0
      %v1869 = vadd.f32 0.0, %v1868
      %v1870 = vpop.f32.mrb[0].mxu0
      %v1871 = vpop.f32.mrb[0].mxu0
      %v1872 = vadd.f32 0.0, %v1871
      %v1873 = vpop.f32.mrb[0].mxu0
      %1874 = vmatprep.mubr.bf16.mxu0 0
      %1875 = vmatmul.mubr.bf16.gmra.mrb[0].mxu0 %v1738
      %v1876 = vpop.f32.mrb[0].mxu0
      %v1877 = vadd.f32 0.0, %v1876
      %v1878 = vpop.f32.mrb[0].mxu0
      %v1879 = vpop.f32.mrb[0].mxu0
      %v1880 = vpop.f32.mrb[0].mxu0
      %1881 = vdwg.mxu0
      %v1882 = vadd.f32 %v1666, %v1829
      %v1883 = vadd.f32 %v1667, %v1832
      %v1884 = vadd.f32 %v1668, %v1837
      %v1885 = vadd.f32 %v1669, %v1840
      %v1886 = vadd.f32 %v1670, %v1845
      %v1887 = vadd.f32 %v1671, %v1848
      %v1888 = vadd.f32 %v1672, %v1853
      %v1889 = vadd.f32 %v1673, %v1856
      %v1890 = vadd.f32 %v1674, %v1861
      %v1891 = vadd.f32 %v1675, %v1864
      %v1892 = vadd.f32 %v1676, %v1869
      %v1893 = vadd.f32 %v1677, %v1872
      %v1894 = vadd.f32 %v1678, %v1877
      %v1895 = vld [vmem:[#allocation2 + $0x8] sm:$0xf8]
      %v1896 = vld [vmem:[#allocation2 + $0x38] sm:$0x7f]
      %s1897 = scalar_lea.vmem %s3, 384
      %v1898 = vld [vmem:[%s1897] sm:$0xf]
      %v1899 = vld [vmem:[%s1897 + $0x4] sm:$0xf]
      %v1900 = vld [vmem:[%s1897 + $0x8] sm:$0xf]
      %v1901 = vld [vmem:[%s1897 + $0xc] sm:$0xf]
      %v1902 = vld [vmem:[%s1897 + $0x10] sm:$0xf]
      %v1903 = vld [vmem:[%s1897 + $0x14] sm:$0xf]
      %v1904 = vld [vmem:[%s1897 + $0x18] sm:$0xf]
      %v1905 = vld [vmem:[%s1897 + $0x1c] sm:$0xf]
      %v1906 = vld [vmem:[%s1897 + $0x20] sm:$0xf]
      %v1907 = vld [vmem:[%s1897 + $0x24] sm:$0xf]
      %v1908 = vld [vmem:[%s1897 + $0x28] sm:$0xf]
      %v1909 = vld [vmem:[%s1897 + $0x2c] sm:$0xf]
      %v1910 = vld [vmem:[%s1897 + $0x30] sm:$0xf]
      %v1911 = vld [vmem:[%s1897 + $0x34] sm:$0xf]
      %v1912 = vld [vmem:[%s1897 + $0x38] sm:$0xf]
      %v1913 = vld [vmem:[%s1897 + $0x3c] sm:$0xf]
      %vm1916 = vcmask 1044480
      %v1917 = vrot.slane %v1895, 3
      %v1918 = vrot.slane %v1230, 3
      %v1919 = vsel %vm1916, %v1917, %v1918
      %v1920 = vrot.slane %v1231, 3
      %v1921 = vsel %vm1916, %v1918, %v1920
      %v1922 = vrot.slane %v1232, 3
      %v1923 = vsel %vm1916, %v1920, %v1922
      %v1924 = vrot.slane %v1233, 3
      %v1925 = vsel %vm1916, %v1922, %v1924
      %v1926 = vrot.slane %v1234, 3
      %v1927 = vsel %vm1916, %v1924, %v1926
      %v1928 = vrot.slane %v1896, 3
      %v1929 = vsel %vm1916, %v1926, %v1928
      %v1953 = vunpack.c.l.b16 %v1898
      %v1954 = vunpack.c.l.b16 %v1899
      %v1955 = vunpack.c.l.b16 %v1900
      %v1956 = vunpack.c.l.b16 %v1901
      %v1957 = vunpack.c.l.b16 %v1902
      %v1958 = vunpack.c.l.b16 %v1903
      %v1959 = vunpack.c.l.b16 %v1904
      %v1960 = vunpack.c.l.b16 %v1905
      %v1961 = vunpack.c.l.b16 %v1906
      %v1962 = vunpack.c.l.b16 %v1907
      %v1963 = vunpack.c.l.b16 %v1908
      %v1964 = vunpack.c.l.b16 %v1909
      %v1965 = vunpack.c.l.b16 %v1910
      %v1966 = vunpack.c.l.b16 %v1911
      %v1967 = vunpack.c.l.b16 %v1912
      %v1968 = vunpack.c.l.b16 %v1913
      %v1969 = vpack.c.b16 %v1954, %v1953
      %v1970 = vpack.c.b16 %v1956, %v1955
      %v1971 = vpack.c.b16 %v1958, %v1957
      %v1972 = vpack.c.b16 %v1960, %v1959
      %v1973 = vpack.c.b16 %v1962, %v1961
      %v1974 = vpack.c.b16 %v1964, %v1963
      %v1975 = vpack.c.b16 %v1966, %v1965
      %v1976 = vpack.c.b16 %v1968, %v1967
      %1985 = vmatprep.subr.bf16.mxu0 0
      %1986 = vmatpush1.bf16.msra.mxu0 %v1969
      %1987 = vmatprep.subr.bf16.mxu0 0
      %1988 = vmatpush1.bf16.msra.mxu0 %v1970
      %1989 = vmatprep.subr.bf16.mxu0 0
      %1990 = vmatpush1.bf16.msra.mxu0 %v1971
      %1991 = vmatprep.subr.bf16.mxu0 0
      %1992 = vmatpush1.bf16.msra.mxu0 %v1972
      %1993 = vmatprep.subr.bf16.mxu0 0
      %1994 = vmatpush1.bf16.msra.mxu0 %v1973
      %1995 = vmatprep.subr.bf16.mxu0 0
      %1996 = vmatpush1.bf16.msra.mxu0 %v1974
      %1997 = vmatprep.subr.bf16.mxu0 0
      %1998 = vmatpush1.bf16.msra.mxu0 %v1975
      %1999 = vmatprep.subr.bf16.mxu0 0
      %2000 = vmatpush1.bf16.msra.mxu0 %v1976
      %2001 = vmatprep.subr.bf16.mxu0 0
      %2002 = vmatpush1.bf16.msra.mxu0 0
      %2003 = vmatprep.subr.bf16.mxu0 0
      %2004 = vmatpush1.bf16.msra.mxu0 0
      %2005 = vmatprep.subr.bf16.mxu0 0
      %2006 = vmatpush1.bf16.msra.mxu0 0
      %2007 = vmatprep.subr.bf16.mxu0 0
      %2008 = vmatpush1.bf16.msra.mxu0 0
      %2009 = vmatprep.subr.bf16.mxu0 0
      %2010 = vmatpush1.bf16.msra.mxu0 0
      %2011 = vmatprep.subr.bf16.mxu0 0
      %2012 = vmatpush1.bf16.msra.mxu0 0
      %2013 = vmatprep.subr.bf16.mxu0 0
      %2014 = vmatpush1.bf16.msra.mxu0 0
      %2015 = vmatprep.subr.bf16.mxu0 0
      %2016 = vmatpush1.bf16.msra.mxu0 0
      %2017 = vmatprep.mubr.bf16.mxu0 0
      %2018 = vmatmul.mubr.bf16.gmra.mrb[0].mxu0 %v1919
      %v2019 = vpop.f32.mrb[0].mxu0
      %v2020 = vadd.f32 0.0, %v2019
      %v2021 = vpop.f32.mrb[0].mxu0
      %v2022 = vpop.f32.mrb[0].mxu0
      %v2023 = vadd.f32 0.0, %v2022
      %v2024 = vpop.f32.mrb[0].mxu0
      %2025 = vmatprep.mubr.bf16.mxu0 0
      %2026 = vmatmul.mubr.bf16.gmra.mrb[0].mxu0 %v1921
      %v2027 = vpop.f32.mrb[0].mxu0
      %v2028 = vadd.f32 0.0, %v2027
      %v2029 = vpop.f32.mrb[0].mxu0
      %v2030 = vpop.f32.mrb[0].mxu0
      %v2031 = vadd.f32 0.0, %v2030
      %v2032 = vpop.f32.mrb[0].mxu0
      %2033 = vmatprep.mubr.bf16.mxu0 0
      %2034 = vmatmul.mubr.bf16.gmra.mrb[0].mxu0 %v1923
      %v2035 = vpop.f32.mrb[0].mxu0
      %v2036 = vadd.f32 0.0, %v2035
      %v2037 = vpop.f32.mrb[0].mxu0
      %v2038 = vpop.f32.mrb[0].mxu0
      %v2039 = vadd.f32 0.0, %v2038
      %v2040 = vpop.f32.mrb[0].mxu0
      %2041 = vmatprep.mubr.bf16.mxu0 0
      %2042 = vmatmul.mubr.bf16.gmra.mrb[0].mxu0 %v1925
      %v2043 = vpop.f32.mrb[0].mxu0
      %v2044 = vadd.f32 0.0, %v2043
      %v2045 = vpop.f32.mrb[0].mxu0
      %v2046 = vpop.f32.mrb[0].mxu0
      %v2047 = vadd.f32 0.0, %v2046
      %v2048 = vpop.f32.mrb[0].mxu0
      %2049 = vmatprep.mubr.bf16.mxu0 0
      %2050 = vmatmul.mubr.bf16.gmra.mrb[0].mxu0 %v1927
      %v2051 = vpop.f32.mrb[0].mxu0
      %v2052 = vadd.f32 0.0, %v2051
      %v2053 = vpop.f32.mrb[0].mxu0
      %v2054 = vpop.f32.mrb[0].mxu0
      %v2055 = vadd.f32 0.0, %v2054
      %v2056 = vpop.f32.mrb[0].mxu0
      %2057 = vmatprep.mubr.bf16.mxu0 0
      %2058 = vmatmul.mubr.bf16.gmra.mrb[0].mxu0 %v1929
      %v2059 = vpop.f32.mrb[0].mxu0
      %v2060 = vadd.f32 0.0, %v2059
      %v2061 = vpop.f32.mrb[0].mxu0
      %v2062 = vpop.f32.mrb[0].mxu0
      %v2063 = vadd.f32 0.0, %v2062
      %v2064 = vpop.f32.mrb[0].mxu0
      %2065 = vmatprep.mubr.bf16.mxu0 0
      %2066 = vmatmul.mubr.bf16.gmra.mrb[0].mxu0 %v1928
      %v2067 = vpop.f32.mrb[0].mxu0
      %v2068 = vadd.f32 0.0, %v2067
      %v2069 = vpop.f32.mrb[0].mxu0
      %v2070 = vpop.f32.mrb[0].mxu0
      %v2071 = vpop.f32.mrb[0].mxu0
      %2072 = vdwg.mxu0
      %v2073 = vadd.f32 %v1882, %v2020
      %v2074 = vadd.f32 %v1883, %v2023
      %v2075 = vadd.f32 %v1884, %v2028
      %v2076 = vadd.f32 %v1885, %v2031
      %v2077 = vadd.f32 %v1886, %v2036
      %v2078 = vadd.f32 %v1887, %v2039
      %v2079 = vadd.f32 %v1888, %v2044
      %v2080 = vadd.f32 %v1889, %v2047
      %v2081 = vadd.f32 %v1890, %v2052
      %v2082 = vadd.f32 %v1891, %v2055
      %v2083 = vadd.f32 %v1892, %v2060
      %v2084 = vadd.f32 %v1893, %v2063
      %v2085 = vadd.f32 %v1894, %v2068
      %v2086 = vld [vmem:[#allocation2 + $0x38] sm:$0xff]
      %s2087 = scalar_lea.vmem %s3, 448
      %v2088 = vld [vmem:[%s2087] sm:$0xf]
      %v2089 = vld [vmem:[%s2087 + $0x4] sm:$0xf]
      %v2090 = vld [vmem:[%s2087 + $0x8] sm:$0xf]
      %v2091 = vld [vmem:[%s2087 + $0xc] sm:$0xf]
      %v2092 = vld [vmem:[%s2087 + $0x10] sm:$0xf]
      %v2093 = vld [vmem:[%s2087 + $0x14] sm:$0xf]
      %v2094 = vld [vmem:[%s2087 + $0x18] sm:$0xf]
      %v2095 = vld [vmem:[%s2087 + $0x1c] sm:$0xf]
      %v2096 = vld [vmem:[%s2087 + $0x20] sm:$0xf]
      %v2097 = vld [vmem:[%s2087 + $0x24] sm:$0xf]
      %v2098 = vld [vmem:[%s2087 + $0x28] sm:$0xf]
      %v2099 = vld [vmem:[%s2087 + $0x2c] sm:$0xf]
      %v2100 = vld [vmem:[%s2087 + $0x30] sm:$0xf]
      %v2101 = vld [vmem:[%s2087 + $0x34] sm:$0xf]
      %v2102 = vld [vmem:[%s2087 + $0x38] sm:$0xf]
      %v2103 = vld [vmem:[%s2087 + $0x3c] sm:$0xf]
      %vm2104 = vsmask.f32 4352
      %v2106 = vshrl.u32 %v1895, 16
      %v2108 = vrot.slane %v2106, 3
      %v2109 = vshll.u32 %v1895, 16
      %v2111 = vrot.slane %v2109, 4
      %v2112 = vor.u32 %v2108, %v2111
      %v2113 = vrot.slane %v1272, 3
      %v2114 = vrot.slane %v1275, 4
      %v2115 = vor.u32 %v2113, %v2114
      %v2116 = vsel %vm2104, %v2112, %v2115
      %v2117 = vrot.slane %v1281, 3
      %v2118 = vrot.slane %v1284, 4
      %v2119 = vor.u32 %v2117, %v2118
      %v2120 = vsel %vm2104, %v2115, %v2119
      %v2121 = vrot.slane %v1290, 3
      %v2122 = vrot.slane %v1293, 4
      %v2123 = vor.u32 %v2121, %v2122
      %v2124 = vsel %vm2104, %v2119, %v2123
      %v2125 = vrot.slane %v1299, 3
      %v2126 = vrot.slane %v1302, 4
      %v2127 = vor.u32 %v2125, %v2126
      %v2128 = vsel %vm2104, %v2123, %v2127
      %v2129 = vrot.slane %v1308, 3
      %v2130 = vrot.slane %v1311, 4
      %v2131 = vor.u32 %v2129, %v2130
      %v2132 = vsel %vm2104, %v2127, %v2131
      %v2134 = vshrl.u32 %v2086, 16
      %v2136 = vrot.slane %v2134, 3
      %v2137 = vshll.u32 %v2086, 16
      %v2139 = vrot.slane %v2137, 4
      %v2140 = vor.u32 %v2136, %v2139
      %v2141 = vsel %vm2104, %v2131, %v2140
      %v2165 = vunpack.c.l.b16 %v2088
      %v2166 = vunpack.c.l.b16 %v2089
      %v2167 = vunpack.c.l.b16 %v2090
      %v2168 = vunpack.c.l.b16 %v2091
      %v2169 = vunpack.c.l.b16 %v2092
      %v2170 = vunpack.c.l.b16 %v2093
      %v2171 = vunpack.c.l.b16 %v2094
      %v2172 = vunpack.c.l.b16 %v2095
      %v2173 = vunpack.c.l.b16 %v2096
      %v2174 = vunpack.c.l.b16 %v2097
      %v2175 = vunpack.c.l.b16 %v2098
      %v2176 = vunpack.c.l.b16 %v2099
      %v2177 = vunpack.c.l.b16 %v2100
      %v2178 = vunpack.c.l.b16 %v2101
      %v2179 = vunpack.c.l.b16 %v2102
      %v2180 = vunpack.c.l.b16 %v2103
      %v2181 = vpack.c.b16 %v2166, %v2165
      %v2182 = vpack.c.b16 %v2168, %v2167
      %v2183 = vpack.c.b16 %v2170, %v2169
      %v2184 = vpack.c.b16 %v2172, %v2171
      %v2185 = vpack.c.b16 %v2174, %v2173
      %v2186 = vpack.c.b16 %v2176, %v2175
      %v2187 = vpack.c.b16 %v2178, %v2177
      %v2188 = vpack.c.b16 %v2180, %v2179
      %2197 = vmatprep.subr.bf16.mxu0 0
      %2198 = vmatpush1.bf16.msra.mxu0 %v2181
      %2199 = vmatprep.subr.bf16.mxu0 0
      %2200 = vmatpush1.bf16.msra.mxu0 %v2182
      %2201 = vmatprep.subr.bf16.mxu0 0
      %2202 = vmatpush1.bf16.msra.mxu0 %v2183
      %2203 = vmatprep.subr.bf16.mxu0 0
      %2204 = vmatpush1.bf16.msra.mxu0 %v2184
      %2205 = vmatprep.subr.bf16.mxu0 0
      %2206 = vmatpush1.bf16.msra.mxu0 %v2185
      %2207 = vmatprep.subr.bf16.mxu0 0
      %2208 = vmatpush1.bf16.msra.mxu0 %v2186
      %2209 = vmatprep.subr.bf16.mxu0 0
      %2210 = vmatpush1.bf16.msra.mxu0 %v2187
      %2211 = vmatprep.subr.bf16.mxu0 0
      %2212 = vmatpush1.bf16.msra.mxu0 %v2188
      %2213 = vmatprep.subr.bf16.mxu0 0
      %2214 = vmatpush1.bf16.msra.mxu0 0
      %2215 = vmatprep.subr.bf16.mxu0 0
      %2216 = vmatpush1.bf16.msra.mxu0 0
      %2217 = vmatprep.subr.bf16.mxu0 0
      %2218 = vmatpush1.bf16.msra.mxu0 0
      %2219 = vmatprep.subr.bf16.mxu0 0
      %2220 = vmatpush1.bf16.msra.mxu0 0
      %2221 = vmatprep.subr.bf16.mxu0 0
      %2222 = vmatpush1.bf16.msra.mxu0 0
      %2223 = vmatprep.subr.bf16.mxu0 0
      %2224 = vmatpush1.bf16.msra.mxu0 0
      %2225 = vmatprep.subr.bf16.mxu0 0
      %2226 = vmatpush1.bf16.msra.mxu0 0
      %2227 = vmatprep.subr.bf16.mxu0 0
      %2228 = vmatpush1.bf16.msra.mxu0 0
      %2229 = vmatprep.mubr.bf16.mxu0 0
      %2230 = vmatmul.mubr.bf16.gmra.mrb[0].mxu0 %v2116
      %v2231 = vpop.f32.mrb[0].mxu0
      %v2232 = vadd.f32 0.0, %v2231
      %v2233 = vpop.f32.mrb[0].mxu0
      %v2234 = vpop.f32.mrb[0].mxu0
      %v2235 = vadd.f32 0.0, %v2234
      %v2236 = vpop.f32.mrb[0].mxu0
      %2237 = vmatprep.mubr.bf16.mxu0 0
      %2238 = vmatmul.mubr.bf16.gmra.mrb[0].mxu0 %v2120
      %v2239 = vpop.f32.mrb[0].mxu0
      %v2240 = vadd.f32 0.0, %v2239
      %v2241 = vpop.f32.mrb[0].mxu0
      %v2242 = vpop.f32.mrb[0].mxu0
      %v2243 = vadd.f32 0.0, %v2242
      %v2244 = vpop.f32.mrb[0].mxu0
      %2245 = vmatprep.mubr.bf16.mxu0 0
      %2246 = vmatmul.mubr.bf16.gmra.mrb[0].mxu0 %v2124
      %v2247 = vpop.f32.mrb[0].mxu0
      %v2248 = vadd.f32 0.0, %v2247
      %v2249 = vpop.f32.mrb[0].mxu0
      %v2250 = vpop.f32.mrb[0].mxu0
      %v2251 = vadd.f32 0.0, %v2250
      %v2252 = vpop.f32.mrb[0].mxu0
      %2253 = vmatprep.mubr.bf16.mxu0 0
      %2254 = vmatmul.mubr.bf16.gmra.mrb[0].mxu0 %v2128
      %v2255 = vpop.f32.mrb[0].mxu0
      %v2256 = vadd.f32 0.0, %v2255
      %v2257 = vpop.f32.mrb[0].mxu0
      %v2258 = vpop.f32.mrb[0].mxu0
      %v2259 = vadd.f32 0.0, %v2258
      %v2260 = vpop.f32.mrb[0].mxu0
      %2261 = vmatprep.mubr.bf16.mxu0 0
      %2262 = vmatmul.mubr.bf16.gmra.mrb[0].mxu0 %v2132
      %v2263 = vpop.f32.mrb[0].mxu0
      %v2264 = vadd.f32 0.0, %v2263
      %v2265 = vpop.f32.mrb[0].mxu0
      %v2266 = vpop.f32.mrb[0].mxu0
      %v2267 = vadd.f32 0.0, %v2266
      %v2268 = vpop.f32.mrb[0].mxu0
      %2269 = vmatprep.mubr.bf16.mxu0 0
      %2270 = vmatmul.mubr.bf16.gmra.mrb[0].mxu0 %v2141
      %v2271 = vpop.f32.mrb[0].mxu0
      %v2272 = vadd.f32 0.0, %v2271
      %v2273 = vpop.f32.mrb[0].mxu0
      %v2274 = vpop.f32.mrb[0].mxu0
      %v2275 = vadd.f32 0.0, %v2274
      %v2276 = vpop.f32.mrb[0].mxu0
      %2277 = vmatprep.mubr.bf16.mxu0 0
      %2278 = vmatmul.mubr.bf16.gmra.mrb[0].mxu0 %v2140
      %v2279 = vpop.f32.mrb[0].mxu0
      %v2280 = vadd.f32 0.0, %v2279
      %v2281 = vpop.f32.mrb[0].mxu0
      %v2282 = vpop.f32.mrb[0].mxu0
      %v2283 = vpop.f32.mrb[0].mxu0
      %2284 = vdwg.mxu0
      %v2285 = vadd.f32 %v2073, %v2232
      %v2286 = vadd.f32 %v2074, %v2235
      %v2287 = vadd.f32 %v2075, %v2240
      %v2288 = vadd.f32 %v2076, %v2243
      %v2289 = vadd.f32 %v2077, %v2248
      %v2290 = vadd.f32 %v2078, %v2251
      %v2291 = vadd.f32 %v2079, %v2256
      %v2292 = vadd.f32 %v2080, %v2259
      %v2293 = vadd.f32 %v2081, %v2264
      %v2294 = vadd.f32 %v2082, %v2267
      %v2295 = vadd.f32 %v2083, %v2272
      %v2296 = vadd.f32 %v2084, %v2275
      %v2297 = vadd.f32 %v2085, %v2280
      %v2298 = vld [vmem:[#allocation2 + $0x8] sm:$0xf0]
      %s2299 = scalar_lea.vmem %s3, 512
      %v2300 = vld [vmem:[%s2299] sm:$0xf]
      %v2301 = vld [vmem:[%s2299 + $0x4] sm:$0xf]
      %v2302 = vld [vmem:[%s2299 + $0x8] sm:$0xf]
      %v2303 = vld [vmem:[%s2299 + $0xc] sm:$0xf]
      %v2304 = vld [vmem:[%s2299 + $0x10] sm:$0xf]
      %v2305 = vld [vmem:[%s2299 + $0x14] sm:$0xf]
      %v2306 = vld [vmem:[%s2299 + $0x18] sm:$0xf]
      %v2307 = vld [vmem:[%s2299 + $0x1c] sm:$0xf]
      %v2308 = vld [vmem:[%s2299 + $0x20] sm:$0xf]
      %v2309 = vld [vmem:[%s2299 + $0x24] sm:$0xf]
      %v2310 = vld [vmem:[%s2299 + $0x28] sm:$0xf]
      %v2311 = vld [vmem:[%s2299 + $0x2c] sm:$0xf]
      %v2312 = vld [vmem:[%s2299 + $0x30] sm:$0xf]
      %v2313 = vld [vmem:[%s2299 + $0x34] sm:$0xf]
      %v2314 = vld [vmem:[%s2299 + $0x38] sm:$0xf]
      %v2315 = vld [vmem:[%s2299 + $0x3c] sm:$0xf]
      %vm2318 = vcmask 1043456
      %v2319 = vrot.slane %v2298, 4
      %v2320 = vrot.slane %v1230, 4
      %v2321 = vsel %vm2318, %v2319, %v2320
      %v2322 = vrot.slane %v1231, 4
      %v2323 = vsel %vm2318, %v2320, %v2322
      %v2324 = vrot.slane %v1232, 4
      %v2325 = vsel %vm2318, %v2322, %v2324
      %v2326 = vrot.slane %v1233, 4
      %v2327 = vsel %vm2318, %v2324, %v2326
      %v2328 = vrot.slane %v1234, 4
      %v2329 = vsel %vm2318, %v2326, %v2328
      %v2330 = vrot.slane %v2086, 4
      %v2331 = vsel %vm2318, %v2328, %v2330
      %v2355 = vunpack.c.l.b16 %v2300
      %v2356 = vunpack.c.l.b16 %v2301
      %v2357 = vunpack.c.l.b16 %v2302
      %v2358 = vunpack.c.l.b16 %v2303
      %v2359 = vunpack.c.l.b16 %v2304
      %v2360 = vunpack.c.l.b16 %v2305
      %v2361 = vunpack.c.l.b16 %v2306
      %v2362 = vunpack.c.l.b16 %v2307
      %v2363 = vunpack.c.l.b16 %v2308
      %v2364 = vunpack.c.l.b16 %v2309
      %v2365 = vunpack.c.l.b16 %v2310
      %v2366 = vunpack.c.l.b16 %v2311
      %v2367 = vunpack.c.l.b16 %v2312
      %v2368 = vunpack.c.l.b16 %v2313
      %v2369 = vunpack.c.l.b16 %v2314
      %v2370 = vunpack.c.l.b16 %v2315
      %v2371 = vpack.c.b16 %v2356, %v2355
      %v2372 = vpack.c.b16 %v2358, %v2357
      %v2373 = vpack.c.b16 %v2360, %v2359
      %v2374 = vpack.c.b16 %v2362, %v2361
      %v2375 = vpack.c.b16 %v2364, %v2363
      %v2376 = vpack.c.b16 %v2366, %v2365
      %v2377 = vpack.c.b16 %v2368, %v2367
      %v2378 = vpack.c.b16 %v2370, %v2369
      %2387 = vmatprep.subr.bf16.mxu0 0
      %2388 = vmatpush1.bf16.msra.mxu0 %v2371
      %2389 = vmatprep.subr.bf16.mxu0 0
      %2390 = vmatpush1.bf16.msra.mxu0 %v2372
      %2391 = vmatprep.subr.bf16.mxu0 0
      %2392 = vmatpush1.bf16.msra.mxu0 %v2373
      %2393 = vmatprep.subr.bf16.mxu0 0
      %2394 = vmatpush1.bf16.msra.mxu0 %v2374
      %2395 = vmatprep.subr.bf16.mxu0 0
      %2396 = vmatpush1.bf16.msra.mxu0 %v2375
      %2397 = vmatprep.subr.bf16.mxu0 0
      %2398 = vmatpush1.bf16.msra.mxu0 %v2376
      %2399 = vmatprep.subr.bf16.mxu0 0
      %2400 = vmatpush1.bf16.msra.mxu0 %v2377
      %2401 = vmatprep.subr.bf16.mxu0 0
      %2402 = vmatpush1.bf16.msra.mxu0 %v2378
      %2403 = vmatprep.subr.bf16.mxu0 0
      %2404 = vmatpush1.bf16.msra.mxu0 0
      %2405 = vmatprep.subr.bf16.mxu0 0
      %2406 = vmatpush1.bf16.msra.mxu0 0
      %2407 = vmatprep.subr.bf16.mxu0 0
      %2408 = vmatpush1.bf16.msra.mxu0 0
      %2409 = vmatprep.subr.bf16.mxu0 0
      %2410 = vmatpush1.bf16.msra.mxu0 0
      %2411 = vmatprep.subr.bf16.mxu0 0
      %2412 = vmatpush1.bf16.msra.mxu0 0
      %2413 = vmatprep.subr.bf16.mxu0 0
      %2414 = vmatpush1.bf16.msra.mxu0 0
      %2415 = vmatprep.subr.bf16.mxu0 0
      %2416 = vmatpush1.bf16.msra.mxu0 0
      %2417 = vmatprep.subr.bf16.mxu0 0
      %2418 = vmatpush1.bf16.msra.mxu0 0
      %2419 = vmatprep.mubr.bf16.mxu0 0
      %2420 = vmatmul.mubr.bf16.gmra.mrb[0].mxu0 %v2321
      %v2421 = vpop.f32.mrb[0].mxu0
      %v2422 = vadd.f32 0.0, %v2421
      %v2423 = vpop.f32.mrb[0].mxu0
      %v2424 = vpop.f32.mrb[0].mxu0
      %v2425 = vadd.f32 0.0, %v2424
      %v2426 = vpop.f32.mrb[0].mxu0
      %2427 = vmatprep.mubr.bf16.mxu0 0
      %2428 = vmatmul.mubr.bf16.gmra.mrb[0].mxu0 %v2323
      %v2429 = vpop.f32.mrb[0].mxu0
      %v2430 = vadd.f32 0.0, %v2429
      %v2431 = vpop.f32.mrb[0].mxu0
      %v2432 = vpop.f32.mrb[0].mxu0
      %v2433 = vadd.f32 0.0, %v2432
      %v2434 = vpop.f32.mrb[0].mxu0
      %2435 = vmatprep.mubr.bf16.mxu0 0
      %2436 = vmatmul.mubr.bf16.gmra.mrb[0].mxu0 %v2325
      %v2437 = vpop.f32.mrb[0].mxu0
      %v2438 = vadd.f32 0.0, %v2437
      %v2439 = vpop.f32.mrb[0].mxu0
      %v2440 = vpop.f32.mrb[0].mxu0
      %v2441 = vadd.f32 0.0, %v2440
      %v2442 = vpop.f32.mrb[0].mxu0
      %2443 = vmatprep.mubr.bf16.mxu0 0
      %2444 = vmatmul.mubr.bf16.gmra.mrb[0].mxu0 %v2327
      %v2445 = vpop.f32.mrb[0].mxu0
      %v2446 = vadd.f32 0.0, %v2445
      %v2447 = vpop.f32.mrb[0].mxu0
      %v2448 = vpop.f32.mrb[0].mxu0
      %v2449 = vadd.f32 0.0, %v2448
      %v2450 = vpop.f32.mrb[0].mxu0
      %2451 = vmatprep.mubr.bf16.mxu0 0
      %2452 = vmatmul.mubr.bf16.gmra.mrb[0].mxu0 %v2329
      %v2453 = vpop.f32.mrb[0].mxu0
      %v2454 = vadd.f32 0.0, %v2453
      %v2455 = vpop.f32.mrb[0].mxu0
      %v2456 = vpop.f32.mrb[0].mxu0
      %v2457 = vadd.f32 0.0, %v2456
      %v2458 = vpop.f32.mrb[0].mxu0
      %2459 = vmatprep.mubr.bf16.mxu0 0
      %2460 = vmatmul.mubr.bf16.gmra.mrb[0].mxu0 %v2331
      %v2461 = vpop.f32.mrb[0].mxu0
      %v2462 = vadd.f32 0.0, %v2461
      %v2463 = vpop.f32.mrb[0].mxu0
      %v2464 = vpop.f32.mrb[0].mxu0
      %v2465 = vadd.f32 0.0, %v2464
      %v2466 = vpop.f32.mrb[0].mxu0
      %2467 = vmatprep.mubr.bf16.mxu0 0
      %2468 = vmatmul.mubr.bf16.gmra.mrb[0].mxu0 %v2330
      %v2469 = vpop.f32.mrb[0].mxu0
      %v2470 = vadd.f32 0.0, %v2469
      %v2471 = vpop.f32.mrb[0].mxu0
      %v2472 = vpop.f32.mrb[0].mxu0
      %v2473 = vpop.f32.mrb[0].mxu0
      %2474 = vdwg.mxu0
      %v2475 = vadd.f32 %v2285, %v2422
      %v2476 = vadd.f32 %v2286, %v2425
      %v2477 = vadd.f32 %v2287, %v2430
      %v2478 = vadd.f32 %v2288, %v2433
      %v2479 = vadd.f32 %v2289, %v2438
      %v2480 = vadd.f32 %v2290, %v2441
      %v2481 = vadd.f32 %v2291, %v2446
      %v2482 = vadd.f32 %v2292, %v2449
      %v2483 = vadd.f32 %v2293, %v2454
      %v2484 = vadd.f32 %v2294, %v2457
      %v2485 = vadd.f32 %v2295, %v2462
      %v2486 = vadd.f32 %v2296, %v2465
      %v2487 = vadd.f32 %v2297, %v2470
      %v2488 = vld [vmem:[%s4] sm:$0x1]
      %v2490 = vlaneseq
      %v2491 = vshrl.u32 %v2490, 7
      %v2492 = vsub.s32 0, %v2491
      %v2493 = vrot.slane %v2488, %v2492
      %v2495 = vadd.f32 %v2475, %v2493
      %v2496 = vadd.f32 %v2476, %v2493
      %v2497 = vadd.f32 %v2477, %v2493
      %v2498 = vadd.f32 %v2478, %v2493
      %v2499 = vadd.f32 %v2479, %v2493
      %v2500 = vadd.f32 %v2480, %v2493
      %v2501 = vadd.f32 %v2481, %v2493
      %v2502 = vadd.f32 %v2482, %v2493
      %v2503 = vadd.f32 %v2483, %v2493
      %v2504 = vadd.f32 %v2484, %v2493
      %v2505 = vadd.f32 %v2485, %v2493
      %v2506 = vadd.f32 %v2486, %v2493
      %v2507 = vadd.f32 %v2487, %v2493
      %v2508 = vmax.f32 %v2495, 0.0
      %v2509 = vmax.f32 %v2496, 0.0
      %v2510 = vmax.f32 %v2497, 0.0
      %v2511 = vmax.f32 %v2498, 0.0
      %v2512 = vmax.f32 %v2499, 0.0
      %v2513 = vmax.f32 %v2500, 0.0
      %v2514 = vmax.f32 %v2501, 0.0
      %v2515 = vmax.f32 %v2502, 0.0
      %v2516 = vmax.f32 %v2503, 0.0
      %v2517 = vmax.f32 %v2504, 0.0
      %v2518 = vmax.f32 %v2505, 0.0
      %v2519 = vmax.f32 %v2506, 0.0
      %v2520 = vmax.f32 %v2507, 0.0
      %2522 = vset.pattern.permute.xlu0 0
      %2523 = vperm.xlu0 %2522, %v644
      %v2524 = vpop.permute.xlu0 %2523
      %2527 = vset.pattern.permute.xlu0 0
      %2528 = vperm.xlu0 %2527, %v645
      %v2529 = vpop.permute.xlu0 %2528
      %2532 = vset.pattern.permute.xlu0 0
      %2533 = vperm.xlu0 %2532, %v646
      %v2534 = vpop.permute.xlu0 %2533
      %2537 = vset.pattern.permute.xlu0 0
      %2538 = vperm.xlu0 %2537, %v647
      %v2539 = vpop.permute.xlu0 %2538
      %2542 = vset.pattern.permute.xlu0 0
      %2543 = vperm.xlu0 %2542, %v648
      %v2544 = vpop.permute.xlu0 %2543
      %2547 = vset.pattern.permute.xlu0 0
      %2548 = vperm.xlu0 %2547, %v649
      %v2549 = vpop.permute.xlu0 %2548
      %2552 = vset.pattern.permute.xlu0 0
      %2553 = vperm.xlu0 %2552, %v650
      %v2554 = vpop.permute.xlu0 %2553
      %2557 = vset.pattern.permute.xlu0 0
      %2558 = vperm.xlu0 %2557, %v651
      %v2559 = vpop.permute.xlu0 %2558
      %2562 = vset.pattern.permute.xlu0 0
      %2563 = vperm.xlu0 %2562, %v652
      %v2564 = vpop.permute.xlu0 %2563
      %2567 = vset.pattern.permute.xlu0 0
      %2568 = vperm.xlu0 %2567, %v653
      %v2569 = vpop.permute.xlu0 %2568
      %2572 = vset.pattern.permute.xlu0 0
      %2573 = vperm.xlu0 %2572, %v654
      %v2574 = vpop.permute.xlu0 %2573
      %2577 = vset.pattern.permute.xlu0 0
      %2578 = vperm.xlu0 %2577, %v655
      %v2579 = vpop.permute.xlu0 %2578
      %2582 = vset.pattern.permute.xlu0 0
      %2583 = vperm.xlu0 %2582, %v656
      %v2584 = vpop.permute.xlu0 %2583
      %v2586 = vmul.f32 %v2508, %v2524
      %v2587 = vmul.f32 %v2509, %v2529
      %v2588 = vmul.f32 %v2510, %v2534
      %v2589 = vmul.f32 %v2511, %v2539
      %v2590 = vmul.f32 %v2512, %v2544
      %v2591 = vmul.f32 %v2513, %v2549
      %v2592 = vmul.f32 %v2514, %v2554
      %v2593 = vmul.f32 %v2515, %v2559
      %v2594 = vmul.f32 %v2516, %v2564
      %v2595 = vmul.f32 %v2517, %v2569
      %v2596 = vmul.f32 %v2518, %v2574
      %v2597 = vmul.f32 %v2519, %v2579
      %v2598 = vmul.f32 %v2520, %v2584
      %2599 = vst [vmem:[#allocation3] sm:$0xff] 0
      %2600 = vst [vmem:[#allocation3 + $0x8] sm:$0xff] 0
      %2601 = vst [vmem:[#allocation3 + $0x10] sm:$0xff] 0
      %2602 = vst [vmem:[#allocation3 + $0x18] sm:$0xff] 0
      %2603 = vst [vmem:[#allocation3 + $0x20] sm:$0xff] 0
      %2604 = vst [vmem:[#allocation3 + $0x28] sm:$0xff] 0
      %2605 = vst [vmem:[#allocation3 + $0x30] sm:$0xff] 0
      %2606 = vst [vmem:[#allocation3 + $0x38] sm:$0xff] 0
      %v2607 = vpack.c.bf16 %v2587, %v2586
      %v2608 = vpack.c.bf16 %v2589, %v2588
      %v2609 = vpack.c.bf16 %v2591, %v2590
      %v2610 = vpack.c.bf16 %v2593, %v2592
      %v2611 = vpack.c.bf16 %v2595, %v2594
      %v2612 = vpack.c.bf16 %v2597, %v2596
      %v2613 = vpack.c.bf16 %v2598, %v2598
      %vm2621 = vcmask 1045504
      %v2622 = vrot.slane %v2607, 2
      %v2623 = vrot.slane %v2608, 2
      %v2624 = vsel %vm2621, %v2622, %v2623
      %v2625 = vrot.slane %v2609, 2
      %v2626 = vsel %vm2621, %v2623, %v2625
      %v2627 = vrot.slane %v2610, 2
      %v2628 = vsel %vm2621, %v2625, %v2627
      %v2629 = vrot.slane %v2611, 2
      %v2630 = vsel %vm2621, %v2627, %v2629
      %v2631 = vrot.slane %v2612, 2
      %v2632 = vsel %vm2621, %v2629, %v2631
      %v2633 = vrot.slane %v2613, 2
      %v2634 = vsel %vm2621, %v2631, %v2633
      %2643 = vst [vmem:[#allocation3] sm:$0xc0] %v2622
      %2644 = vst [vmem:[#allocation3 + $0x8] sm:$0xff] %v2624
      %2645 = vst [vmem:[#allocation3 + $0x10] sm:$0xff] %v2626
      %2646 = vst [vmem:[#allocation3 + $0x18] sm:$0xff] %v2628
      %2647 = vst [vmem:[#allocation3 + $0x20] sm:$0xff] %v2630
      %2648 = vst [vmem:[#allocation3 + $0x28] sm:$0xff] %v2632
      %2649 = vst [vmem:[#allocation3 + $0x30] sm:$0xff] %v2634
      %2650 = vst [vmem:[#allocation3 + $0x38] sm:$0x3] %v2633
      %v2651 = vld [vmem:[#allocation3] sm:$0xff]
      %v2652 = vld [vmem:[#allocation3 + $0x8] sm:$0xff]
      %v2653 = vld [vmem:[#allocation3 + $0x10] sm:$0xff]
      %v2654 = vld [vmem:[#allocation3 + $0x18] sm:$0xff]
      %v2655 = vld [vmem:[#allocation3 + $0x20] sm:$0xff]
      %v2656 = vld [vmem:[#allocation3 + $0x28] sm:$0xff]
      %v2657 = vld [vmem:[#allocation3 + $0x30] sm:$0xf]
      %v2658 = vld [vmem:[%s5] sm:$0xf]
      %v2659 = vld [vmem:[%s5 + $0x4] sm:$0xf]
      %v2660 = vld [vmem:[%s5 + $0x8] sm:$0xf]
      %v2661 = vld [vmem:[%s5 + $0xc] sm:$0xf]
      %v2662 = vld [vmem:[%s5 + $0x10] sm:$0xf]
      %v2663 = vld [vmem:[%s5 + $0x14] sm:$0xf]
      %v2664 = vld [vmem:[%s5 + $0x18] sm:$0xf]
      %v2665 = vld [vmem:[%s5 + $0x1c] sm:$0xf]
      %v2666 = vld [vmem:[%s5 + $0x20] sm:$0xf]
      %v2667 = vld [vmem:[%s5 + $0x24] sm:$0xf]
      %v2668 = vld [vmem:[%s5 + $0x28] sm:$0xf]
      %v2669 = vld [vmem:[%s5 + $0x2c] sm:$0xf]
      %v2670 = vld [vmem:[%s5 + $0x30] sm:$0xf]
      %v2671 = vld [vmem:[%s5 + $0x34] sm:$0xf]
      %v2672 = vld [vmem:[%s5 + $0x38] sm:$0xf]
      %v2673 = vld [vmem:[%s5 + $0x3c] sm:$0xf]
      %v2674 = vld [vmem:[#allocation3 + $0x30] sm:$0x1f]
      %s2675 = scalar_lea.vmem %s5, 64
      %v2676 = vld [vmem:[%s2675] sm:$0xf]
      %v2677 = vld [vmem:[%s2675 + $0x4] sm:$0xf]
      %v2678 = vld [vmem:[%s2675 + $0x8] sm:$0xf]
      %v2679 = vld [vmem:[%s2675 + $0xc] sm:$0xf]
      %v2680 = vld [vmem:[%s2675 + $0x10] sm:$0xf]
      %v2681 = vld [vmem:[%s2675 + $0x14] sm:$0xf]
      %v2682 = vld [vmem:[%s2675 + $0x18] sm:$0xf]
      %v2683 = vld [vmem:[%s2675 + $0x1c] sm:$0xf]
      %v2684 = vld [vmem:[%s2675 + $0x20] sm:$0xf]
      %v2685 = vld [vmem:[%s2675 + $0x24] sm:$0xf]
      %v2686 = vld [vmem:[%s2675 + $0x28] sm:$0xf]
      %v2687 = vld [vmem:[%s2675 + $0x2c] sm:$0xf]
      %v2688 = vld [vmem:[%s2675 + $0x30] sm:$0xf]
      %v2689 = vld [vmem:[%s2675 + $0x34] sm:$0xf]
      %v2690 = vld [vmem:[%s2675 + $0x38] sm:$0xf]
      %v2691 = vld [vmem:[%s2675 + $0x3c] sm:$0xf]
      %v2693 = vshrl.u32 %v2651, 16
      %v2695 = vshll.u32 %v2651, 16
      %v2697 = vrot.slane %v2695, 1
      %v2698 = vor.u32 %v2693, %v2697
      %v2700 = vshll.u32 %v2652, 16
      %v2702 = vrot.slane %v2700, 1
      %v2703 = vsel %vm698, %v2698, %v2702
      %v2704 = vshrl.u32 %v2652, 16
      %v2706 = vor.u32 %v2704, %v2702
      %v2708 = vshll.u32 %v2653, 16
      %v2710 = vrot.slane %v2708, 1
      %v2711 = vsel %vm698, %v2706, %v2710
      %v2712 = vshrl.u32 %v2653, 16
      %v2714 = vor.u32 %v2712, %v2710
      %v2716 = vshll.u32 %v2654, 16
      %v2718 = vrot.slane %v2716, 1
      %v2719 = vsel %vm698, %v2714, %v2718
      %v2720 = vshrl.u32 %v2654, 16
      %v2722 = vor.u32 %v2720, %v2718
      %v2724 = vshll.u32 %v2655, 16
      %v2726 = vrot.slane %v2724, 1
      %v2727 = vsel %vm698, %v2722, %v2726
      %v2728 = vshrl.u32 %v2655, 16
      %v2730 = vor.u32 %v2728, %v2726
      %v2732 = vshll.u32 %v2656, 16
      %v2734 = vrot.slane %v2732, 1
      %v2735 = vsel %vm698, %v2730, %v2734
      %v2736 = vshrl.u32 %v2656, 16
      %v2738 = vor.u32 %v2736, %v2734
      %v2740 = vshll.u32 %v2674, 16
      %v2742 = vrot.slane %v2740, 1
      %v2743 = vsel %vm698, %v2738, %v2742
      %v2744 = vshrl.u32 %v2674, 16
      %v2746 = vor.u32 %v2744, %v2742
      %v2770 = vunpack.c.l.b16 %v2676
      %v2771 = vunpack.c.l.b16 %v2677
      %v2772 = vunpack.c.l.b16 %v2678
      %v2773 = vunpack.c.l.b16 %v2679
      %v2774 = vunpack.c.l.b16 %v2680
      %v2775 = vunpack.c.l.b16 %v2681
      %v2776 = vunpack.c.l.b16 %v2682
      %v2777 = vunpack.c.l.b16 %v2683
      %v2778 = vunpack.c.l.b16 %v2684
      %v2779 = vunpack.c.l.b16 %v2685
      %v2780 = vunpack.c.l.b16 %v2686
      %v2781 = vunpack.c.l.b16 %v2687
      %v2782 = vunpack.c.l.b16 %v2688
      %v2783 = vunpack.c.l.b16 %v2689
      %v2784 = vunpack.c.l.b16 %v2690
      %v2785 = vunpack.c.l.b16 %v2691
      %v2786 = vpack.c.b16 %v2771, %v2770
      %v2787 = vpack.c.b16 %v2773, %v2772
      %v2788 = vpack.c.b16 %v2775, %v2774
      %v2789 = vpack.c.b16 %v2777, %v2776
      %v2790 = vpack.c.b16 %v2779, %v2778
      %v2791 = vpack.c.b16 %v2781, %v2780
      %v2792 = vpack.c.b16 %v2783, %v2782
      %v2793 = vpack.c.b16 %v2785, %v2784
      %2802 = vmatprep.subr.bf16.mxu0 0
      %2803 = vmatpush1.bf16.msra.mxu0 %v2786
      %2804 = vmatprep.subr.bf16.mxu0 0
      %2805 = vmatpush1.bf16.msra.mxu0 %v2787
      %2806 = vmatprep.subr.bf16.mxu0 0
      %2807 = vmatpush1.bf16.msra.mxu0 %v2788
      %2808 = vmatprep.subr.bf16.mxu0 0
      %2809 = vmatpush1.bf16.msra.mxu0 %v2789
      %2810 = vmatprep.subr.bf16.mxu0 0
      %2811 = vmatpush1.bf16.msra.mxu0 %v2790
      %2812 = vmatprep.subr.bf16.mxu0 0
      %2813 = vmatpush1.bf16.msra.mxu0 %v2791
      %2814 = vmatprep.subr.bf16.mxu0 0
      %2815 = vmatpush1.bf16.msra.mxu0 %v2792
      %2816 = vmatprep.subr.bf16.mxu0 0
      %2817 = vmatpush1.bf16.msra.mxu0 %v2793
      %2818 = vmatprep.subr.bf16.mxu0 0
      %2819 = vmatpush1.bf16.msra.mxu0 0
      %2820 = vmatprep.subr.bf16.mxu0 0
      %2821 = vmatpush1.bf16.msra.mxu0 0
      %2822 = vmatprep.subr.bf16.mxu0 0
      %2823 = vmatpush1.bf16.msra.mxu0 0
      %2824 = vmatprep.subr.bf16.mxu0 0
      %2825 = vmatpush1.bf16.msra.mxu0 0
      %2826 = vmatprep.subr.bf16.mxu0 0
      %2827 = vmatpush1.bf16.msra.mxu0 0
      %2828 = vmatprep.subr.bf16.mxu0 0
      %2829 = vmatpush1.bf16.msra.mxu0 0
      %2830 = vmatprep.subr.bf16.mxu0 0
      %2831 = vmatpush1.bf16.msra.mxu0 0
      %2832 = vmatprep.subr.bf16.mxu0 0
      %2833 = vmatpush1.bf16.msra.mxu0 0
      %2834 = vmatprep.mubr.bf16.mxu0 0
      %2835 = vmatmul.mubr.bf16.gmra.mrb[0].mxu0 %v2703
      %v2836 = vpop.f32.mrb[0].mxu0
      %v2837 = vadd.f32 0.0, %v2836
      %v2838 = vpop.f32.mrb[0].mxu0
      %v2839 = vpop.f32.mrb[0].mxu0
      %v2840 = vadd.f32 0.0, %v2839
      %v2841 = vpop.f32.mrb[0].mxu0
      %2842 = vmatprep.mubr.bf16.mxu0 0
      %2843 = vmatmul.mubr.bf16.gmra.mrb[0].mxu0 %v2711
      %v2844 = vpop.f32.mrb[0].mxu0
      %v2845 = vadd.f32 0.0, %v2844
      %v2846 = vpop.f32.mrb[0].mxu0
      %v2847 = vpop.f32.mrb[0].mxu0
      %v2848 = vadd.f32 0.0, %v2847
      %v2849 = vpop.f32.mrb[0].mxu0
      %2850 = vmatprep.mubr.bf16.mxu0 0
      %2851 = vmatmul.mubr.bf16.gmra.mrb[0].mxu0 %v2719
      %v2852 = vpop.f32.mrb[0].mxu0
      %v2853 = vadd.f32 0.0, %v2852
      %v2854 = vpop.f32.mrb[0].mxu0
      %v2855 = vpop.f32.mrb[0].mxu0
      %v2856 = vadd.f32 0.0, %v2855
      %v2857 = vpop.f32.mrb[0].mxu0
      %2858 = vmatprep.mubr.bf16.mxu0 0
      %2859 = vmatmul.mubr.bf16.gmra.mrb[0].mxu0 %v2727
      %v2860 = vpop.f32.mrb[0].mxu0
      %v2861 = vadd.f32 0.0, %v2860
      %v2862 = vpop.f32.mrb[0].mxu0
      %v2863 = vpop.f32.mrb[0].mxu0
      %v2864 = vadd.f32 0.0, %v2863
      %v2865 = vpop.f32.mrb[0].mxu0
      %2866 = vmatprep.mubr.bf16.mxu0 0
      %2867 = vmatmul.mubr.bf16.gmra.mrb[0].mxu0 %v2735
      %v2868 = vpop.f32.mrb[0].mxu0
      %v2869 = vadd.f32 0.0, %v2868
      %v2870 = vpop.f32.mrb[0].mxu0
      %v2871 = vpop.f32.mrb[0].mxu0
      %v2872 = vadd.f32 0.0, %v2871
      %v2873 = vpop.f32.mrb[0].mxu0
      %2874 = vmatprep.mubr.bf16.mxu0 0
      %2875 = vmatmul.mubr.bf16.gmra.mrb[0].mxu0 %v2743
      %v2876 = vpop.f32.mrb[0].mxu0
      %v2877 = vadd.f32 0.0, %v2876
      %v2878 = vpop.f32.mrb[0].mxu0
      %v2879 = vpop.f32.mrb[0].mxu0
      %v2880 = vadd.f32 0.0, %v2879
      %v2881 = vpop.f32.mrb[0].mxu0
      %2882 = vmatprep.mubr.bf16.mxu0 0
      %2883 = vmatmul.mubr.bf16.gmra.mrb[0].mxu0 %v2746
      %v2884 = vpop.f32.mrb[0].mxu0
      %v2885 = vadd.f32 0.0, %v2884
      %v2886 = vpop.f32.mrb[0].mxu0
      %v2887 = vpop.f32.mrb[0].mxu0
      %v2888 = vpop.f32.mrb[0].mxu0
      %2889 = vdwg.mxu0
      %v2906 = vunpack.c.l.b16 %v2658
      %v2907 = vunpack.c.l.b16 %v2659
      %v2908 = vunpack.c.l.b16 %v2660
      %v2909 = vunpack.c.l.b16 %v2661
      %v2910 = vunpack.c.l.b16 %v2662
      %v2911 = vunpack.c.l.b16 %v2663
      %v2912 = vunpack.c.l.b16 %v2664
      %v2913 = vunpack.c.l.b16 %v2665
      %v2914 = vunpack.c.l.b16 %v2666
      %v2915 = vunpack.c.l.b16 %v2667
      %v2916 = vunpack.c.l.b16 %v2668
      %v2917 = vunpack.c.l.b16 %v2669
      %v2918 = vunpack.c.l.b16 %v2670
      %v2919 = vunpack.c.l.b16 %v2671
      %v2920 = vunpack.c.l.b16 %v2672
      %v2921 = vunpack.c.l.b16 %v2673
      %v2922 = vpack.c.b16 %v2907, %v2906
      %v2923 = vpack.c.b16 %v2909, %v2908
      %v2924 = vpack.c.b16 %v2911, %v2910
      %v2925 = vpack.c.b16 %v2913, %v2912
      %v2926 = vpack.c.b16 %v2915, %v2914
      %v2927 = vpack.c.b16 %v2917, %v2916
      %v2928 = vpack.c.b16 %v2919, %v2918
      %v2929 = vpack.c.b16 %v2921, %v2920
      %2938 = vmatprep.subr.bf16.mxu0 0
      %2939 = vmatpush1.bf16.msra.mxu0 %v2922
      %2940 = vmatprep.subr.bf16.mxu0 0
      %2941 = vmatpush1.bf16.msra.mxu0 %v2923
      %2942 = vmatprep.subr.bf16.mxu0 0
      %2943 = vmatpush1.bf16.msra.mxu0 %v2924
      %2944 = vmatprep.subr.bf16.mxu0 0
      %2945 = vmatpush1.bf16.msra.mxu0 %v2925
      %2946 = vmatprep.subr.bf16.mxu0 0
      %2947 = vmatpush1.bf16.msra.mxu0 %v2926
      %2948 = vmatprep.subr.bf16.mxu0 0
      %2949 = vmatpush1.bf16.msra.mxu0 %v2927
      %2950 = vmatprep.subr.bf16.mxu0 0
      %2951 = vmatpush1.bf16.msra.mxu0 %v2928
      %2952 = vmatprep.subr.bf16.mxu0 0
      %2953 = vmatpush1.bf16.msra.mxu0 %v2929
      %2954 = vmatprep.subr.bf16.mxu0 0
      %2955 = vmatpush1.bf16.msra.mxu0 0
      %2956 = vmatprep.subr.bf16.mxu0 0
      %2957 = vmatpush1.bf16.msra.mxu0 0
      %2958 = vmatprep.subr.bf16.mxu0 0
      %2959 = vmatpush1.bf16.msra.mxu0 0
      %2960 = vmatprep.subr.bf16.mxu0 0
      %2961 = vmatpush1.bf16.msra.mxu0 0
      %2962 = vmatprep.subr.bf16.mxu0 0
      %2963 = vmatpush1.bf16.msra.mxu0 0
      %2964 = vmatprep.subr.bf16.mxu0 0
      %2965 = vmatpush1.bf16.msra.mxu0 0
      %2966 = vmatprep.subr.bf16.mxu0 0
      %2967 = vmatpush1.bf16.msra.mxu0 0
      %2968 = vmatprep.subr.bf16.mxu0 0
      %2969 = vmatpush1.bf16.msra.mxu0 0
      %2970 = vmatprep.mubr.bf16.mxu0 0
      %2971 = vmatmul.mubr.bf16.gmra.mrb[0].mxu0 %v2651
      %v2972 = vpop.f32.mrb[0].mxu0
      %v2973 = vadd.f32 %v2837, %v2972
      %v2974 = vpop.f32.mrb[0].mxu0
      %v2975 = vpop.f32.mrb[0].mxu0
      %v2976 = vadd.f32 %v2840, %v2975
      %v2977 = vpop.f32.mrb[0].mxu0
      %2978 = vmatprep.mubr.bf16.mxu0 0
      %2979 = vmatmul.mubr.bf16.gmra.mrb[0].mxu0 %v2652
      %v2980 = vpop.f32.mrb[0].mxu0
      %v2981 = vadd.f32 %v2845, %v2980
      %v2982 = vpop.f32.mrb[0].mxu0
      %v2983 = vpop.f32.mrb[0].mxu0
      %v2984 = vadd.f32 %v2848, %v2983
      %v2985 = vpop.f32.mrb[0].mxu0
      %2986 = vmatprep.mubr.bf16.mxu0 0
      %2987 = vmatmul.mubr.bf16.gmra.mrb[0].mxu0 %v2653
      %v2988 = vpop.f32.mrb[0].mxu0
      %v2989 = vadd.f32 %v2853, %v2988
      %v2990 = vpop.f32.mrb[0].mxu0
      %v2991 = vpop.f32.mrb[0].mxu0
      %v2992 = vadd.f32 %v2856, %v2991
      %v2993 = vpop.f32.mrb[0].mxu0
      %2994 = vmatprep.mubr.bf16.mxu0 0
      %2995 = vmatmul.mubr.bf16.gmra.mrb[0].mxu0 %v2654
      %v2996 = vpop.f32.mrb[0].mxu0
      %v2997 = vadd.f32 %v2861, %v2996
      %v2998 = vpop.f32.mrb[0].mxu0
      %v2999 = vpop.f32.mrb[0].mxu0
      %v3000 = vadd.f32 %v2864, %v2999
      %v3001 = vpop.f32.mrb[0].mxu0
      %3002 = vmatprep.mubr.bf16.mxu0 0
      %3003 = vmatmul.mubr.bf16.gmra.mrb[0].mxu0 %v2655
      %v3004 = vpop.f32.mrb[0].mxu0
      %v3005 = vadd.f32 %v2869, %v3004
      %v3006 = vpop.f32.mrb[0].mxu0
      %v3007 = vpop.f32.mrb[0].mxu0
      %v3008 = vadd.f32 %v2872, %v3007
      %v3009 = vpop.f32.mrb[0].mxu0
      %3010 = vmatprep.mubr.bf16.mxu0 0
      %3011 = vmatmul.mubr.bf16.gmra.mrb[0].mxu0 %v2656
      %v3012 = vpop.f32.mrb[0].mxu0
      %v3013 = vadd.f32 %v2877, %v3012
      %v3014 = vpop.f32.mrb[0].mxu0
      %v3015 = vpop.f32.mrb[0].mxu0
      %v3016 = vadd.f32 %v2880, %v3015
      %v3017 = vpop.f32.mrb[0].mxu0
      %3018 = vmatprep.mubr.bf16.mxu0 0
      %3019 = vmatmul.mubr.bf16.gmra.mrb[0].mxu0 %v2657
      %v3020 = vpop.f32.mrb[0].mxu0
      %v3021 = vadd.f32 %v2885, %v3020
      %v3022 = vpop.f32.mrb[0].mxu0
      %v3023 = vpop.f32.mrb[0].mxu0
      %v3024 = vpop.f32.mrb[0].mxu0
      %3025 = vdwg.mxu0
      %v3026 = vld [vmem:[#allocation3] sm:$0xfe]
      %s3027 = scalar_lea.vmem %s5, 128
      %v3028 = vld [vmem:[%s3027] sm:$0xf]
      %v3029 = vld [vmem:[%s3027 + $0x4] sm:$0xf]
      %v3030 = vld [vmem:[%s3027 + $0x8] sm:$0xf]
      %v3031 = vld [vmem:[%s3027 + $0xc] sm:$0xf]
      %v3032 = vld [vmem:[%s3027 + $0x10] sm:$0xf]
      %v3033 = vld [vmem:[%s3027 + $0x14] sm:$0xf]
      %v3034 = vld [vmem:[%s3027 + $0x18] sm:$0xf]
      %v3035 = vld [vmem:[%s3027 + $0x1c] sm:$0xf]
      %v3036 = vld [vmem:[%s3027 + $0x20] sm:$0xf]
      %v3037 = vld [vmem:[%s3027 + $0x24] sm:$0xf]
      %v3038 = vld [vmem:[%s3027 + $0x28] sm:$0xf]
      %v3039 = vld [vmem:[%s3027 + $0x2c] sm:$0xf]
      %v3040 = vld [vmem:[%s3027 + $0x30] sm:$0xf]
      %v3041 = vld [vmem:[%s3027 + $0x34] sm:$0xf]
      %v3042 = vld [vmem:[%s3027 + $0x38] sm:$0xf]
      %v3043 = vld [vmem:[%s3027 + $0x3c] sm:$0xf]
      %v3051 = vrot.slane %v3026, 1
      %v3052 = vrot.slane %v2652, 1
      %v3053 = vsel %vm1058, %v3051, %v3052
      %v3054 = vrot.slane %v2653, 1
      %v3055 = vsel %vm1058, %v3052, %v3054
      %v3056 = vrot.slane %v2654, 1
      %v3057 = vsel %vm1058, %v3054, %v3056
      %v3058 = vrot.slane %v2655, 1
      %v3059 = vsel %vm1058, %v3056, %v3058
      %v3060 = vrot.slane %v2656, 1
      %v3061 = vsel %vm1058, %v3058, %v3060
      %v3062 = vrot.slane %v2674, 1
      %v3063 = vsel %vm1058, %v3060, %v3062
      %v3087 = vunpack.c.l.b16 %v3028
      %v3088 = vunpack.c.l.b16 %v3029
      %v3089 = vunpack.c.l.b16 %v3030
      %v3090 = vunpack.c.l.b16 %v3031
      %v3091 = vunpack.c.l.b16 %v3032
      %v3092 = vunpack.c.l.b16 %v3033
      %v3093 = vunpack.c.l.b16 %v3034
      %v3094 = vunpack.c.l.b16 %v3035
      %v3095 = vunpack.c.l.b16 %v3036
      %v3096 = vunpack.c.l.b16 %v3037
      %v3097 = vunpack.c.l.b16 %v3038
      %v3098 = vunpack.c.l.b16 %v3039
      %v3099 = vunpack.c.l.b16 %v3040
      %v3100 = vunpack.c.l.b16 %v3041
      %v3101 = vunpack.c.l.b16 %v3042
      %v3102 = vunpack.c.l.b16 %v3043
      %v3103 = vpack.c.b16 %v3088, %v3087
      %v3104 = vpack.c.b16 %v3090, %v3089
      %v3105 = vpack.c.b16 %v3092, %v3091
      %v3106 = vpack.c.b16 %v3094, %v3093
      %v3107 = vpack.c.b16 %v3096, %v3095
      %v3108 = vpack.c.b16 %v3098, %v3097
      %v3109 = vpack.c.b16 %v3100, %v3099
      %v3110 = vpack.c.b16 %v3102, %v3101
      %3119 = vmatprep.subr.bf16.mxu0 0
      %3120 = vmatpush1.bf16.msra.mxu0 %v3103
      %3121 = vmatprep.subr.bf16.mxu0 0
      %3122 = vmatpush1.bf16.msra.mxu0 %v3104
      %3123 = vmatprep.subr.bf16.mxu0 0
      %3124 = vmatpush1.bf16.msra.mxu0 %v3105
      %3125 = vmatprep.subr.bf16.mxu0 0
      %3126 = vmatpush1.bf16.msra.mxu0 %v3106
      %3127 = vmatprep.subr.bf16.mxu0 0
      %3128 = vmatpush1.bf16.msra.mxu0 %v3107
      %3129 = vmatprep.subr.bf16.mxu0 0
      %3130 = vmatpush1.bf16.msra.mxu0 %v3108
      %3131 = vmatprep.subr.bf16.mxu0 0
      %3132 = vmatpush1.bf16.msra.mxu0 %v3109
      %3133 = vmatprep.subr.bf16.mxu0 0
      %3134 = vmatpush1.bf16.msra.mxu0 %v3110
      %3135 = vmatprep.subr.bf16.mxu0 0
      %3136 = vmatpush1.bf16.msra.mxu0 0
      %3137 = vmatprep.subr.bf16.mxu0 0
      %3138 = vmatpush1.bf16.msra.mxu0 0
      %3139 = vmatprep.subr.bf16.mxu0 0
      %3140 = vmatpush1.bf16.msra.mxu0 0
      %3141 = vmatprep.subr.bf16.mxu0 0
      %3142 = vmatpush1.bf16.msra.mxu0 0
      %3143 = vmatprep.subr.bf16.mxu0 0
      %3144 = vmatpush1.bf16.msra.mxu0 0
      %3145 = vmatprep.subr.bf16.mxu0 0
      %3146 = vmatpush1.bf16.msra.mxu0 0
      %3147 = vmatprep.subr.bf16.mxu0 0
      %3148 = vmatpush1.bf16.msra.mxu0 0
      %3149 = vmatprep.subr.bf16.mxu0 0
      %3150 = vmatpush1.bf16.msra.mxu0 0
      %3151 = vmatprep.mubr.bf16.mxu0 0
      %3152 = vmatmul.mubr.bf16.gmra.mrb[0].mxu0 %v3053
      %v3153 = vpop.f32.mrb[0].mxu0
      %v3154 = vadd.f32 0.0, %v3153
      %v3155 = vpop.f32.mrb[0].mxu0
      %v3156 = vpop.f32.mrb[0].mxu0
      %v3157 = vadd.f32 0.0, %v3156
      %v3158 = vpop.f32.mrb[0].mxu0
      %3159 = vmatprep.mubr.bf16.mxu0 0
      %3160 = vmatmul.mubr.bf16.gmra.mrb[0].mxu0 %v3055
      %v3161 = vpop.f32.mrb[0].mxu0
      %v3162 = vadd.f32 0.0, %v3161
      %v3163 = vpop.f32.mrb[0].mxu0
      %v3164 = vpop.f32.mrb[0].mxu0
      %v3165 = vadd.f32 0.0, %v3164
      %v3166 = vpop.f32.mrb[0].mxu0
      %3167 = vmatprep.mubr.bf16.mxu0 0
      %3168 = vmatmul.mubr.bf16.gmra.mrb[0].mxu0 %v3057
      %v3169 = vpop.f32.mrb[0].mxu0
      %v3170 = vadd.f32 0.0, %v3169
      %v3171 = vpop.f32.mrb[0].mxu0
      %v3172 = vpop.f32.mrb[0].mxu0
      %v3173 = vadd.f32 0.0, %v3172
      %v3174 = vpop.f32.mrb[0].mxu0
      %3175 = vmatprep.mubr.bf16.mxu0 0
      %3176 = vmatmul.mubr.bf16.gmra.mrb[0].mxu0 %v3059
      %v3177 = vpop.f32.mrb[0].mxu0
      %v3178 = vadd.f32 0.0, %v3177
      %v3179 = vpop.f32.mrb[0].mxu0
      %v3180 = vpop.f32.mrb[0].mxu0
      %v3181 = vadd.f32 0.0, %v3180
      %v3182 = vpop.f32.mrb[0].mxu0
      %3183 = vmatprep.mubr.bf16.mxu0 0
      %3184 = vmatmul.mubr.bf16.gmra.mrb[0].mxu0 %v3061
      %v3185 = vpop.f32.mrb[0].mxu0
      %v3186 = vadd.f32 0.0, %v3185
      %v3187 = vpop.f32.mrb[0].mxu0
      %v3188 = vpop.f32.mrb[0].mxu0
      %v3189 = vadd.f32 0.0, %v3188
      %v3190 = vpop.f32.mrb[0].mxu0
      %3191 = vmatprep.mubr.bf16.mxu0 0
      %3192 = vmatmul.mubr.bf16.gmra.mrb[0].mxu0 %v3063
      %v3193 = vpop.f32.mrb[0].mxu0
      %v3194 = vadd.f32 0.0, %v3193
      %v3195 = vpop.f32.mrb[0].mxu0
      %v3196 = vpop.f32.mrb[0].mxu0
      %v3197 = vadd.f32 0.0, %v3196
      %v3198 = vpop.f32.mrb[0].mxu0
      %3199 = vmatprep.mubr.bf16.mxu0 0
      %3200 = vmatmul.mubr.bf16.gmra.mrb[0].mxu0 %v3062
      %v3201 = vpop.f32.mrb[0].mxu0
      %v3202 = vadd.f32 0.0, %v3201
      %v3203 = vpop.f32.mrb[0].mxu0
      %v3204 = vpop.f32.mrb[0].mxu0
      %v3205 = vpop.f32.mrb[0].mxu0
      %3206 = vdwg.mxu0
      %v3207 = vadd.f32 %v2973, %v3154
      %v3208 = vadd.f32 %v2976, %v3157
      %v3209 = vadd.f32 %v2981, %v3162
      %v3210 = vadd.f32 %v2984, %v3165
      %v3211 = vadd.f32 %v2989, %v3170
      %v3212 = vadd.f32 %v2992, %v3173
      %v3213 = vadd.f32 %v2997, %v3178
      %v3214 = vadd.f32 %v3000, %v3181
      %v3215 = vadd.f32 %v3005, %v3186
      %v3216 = vadd.f32 %v3008, %v3189
      %v3217 = vadd.f32 %v3013, %v3194
      %v3218 = vadd.f32 %v3016, %v3197
      %v3219 = vadd.f32 %v3021, %v3202
      %v3220 = vld [vmem:[#allocation3] sm:$0xe0]
      %v3221 = vld [vmem:[#allocation3 + $0x8] sm:$0xff]
      %v3222 = vld [vmem:[#allocation3 + $0x10] sm:$0xff]
      %v3223 = vld [vmem:[#allocation3 + $0x18] sm:$0xff]
      %v3224 = vld [vmem:[#allocation3 + $0x20] sm:$0xff]
      %v3225 = vld [vmem:[#allocation3 + $0x28] sm:$0xff]
      %v3226 = vld [vmem:[#allocation3 + $0x30] sm:$0xff]
      %v3227 = vld [vmem:[#allocation3 + $0x38] sm:$0x3]
      %s3228 = scalar_lea.vmem %s5, 192
      %v3229 = vld [vmem:[%s3228] sm:$0xf]
      %v3230 = vld [vmem:[%s3228 + $0x4] sm:$0xf]
      %v3231 = vld [vmem:[%s3228 + $0x8] sm:$0xf]
      %v3232 = vld [vmem:[%s3228 + $0xc] sm:$0xf]
      %v3233 = vld [vmem:[%s3228 + $0x10] sm:$0xf]
      %v3234 = vld [vmem:[%s3228 + $0x14] sm:$0xf]
      %v3235 = vld [vmem:[%s3228 + $0x18] sm:$0xf]
      %v3236 = vld [vmem:[%s3228 + $0x1c] sm:$0xf]
      %v3237 = vld [vmem:[%s3228 + $0x20] sm:$0xf]
      %v3238 = vld [vmem:[%s3228 + $0x24] sm:$0xf]
      %v3239 = vld [vmem:[%s3228 + $0x28] sm:$0xf]
      %v3240 = vld [vmem:[%s3228 + $0x2c] sm:$0xf]
      %v3241 = vld [vmem:[%s3228 + $0x30] sm:$0xf]
      %v3242 = vld [vmem:[%s3228 + $0x34] sm:$0xf]
      %v3243 = vld [vmem:[%s3228 + $0x38] sm:$0xf]
      %v3244 = vld [vmem:[%s3228 + $0x3c] sm:$0xf]
      %v3246 = vshrl.u32 %v3220, 16
      %v3248 = vrot.slane %v3246, 5
      %v3249 = vshll.u32 %v3220, 16
      %v3251 = vrot.slane %v3249, 6
      %v3252 = vor.u32 %v3248, %v3251
      %v3254 = vshrl.u32 %v3221, 16
      %v3256 = vrot.slane %v3254, 5
      %v3257 = vshll.u32 %v3221, 16
      %v3259 = vrot.slane %v3257, 6
      %v3260 = vor.u32 %v3256, %v3259
      %v3261 = vsel %vm1253, %v3252, %v3260
      %v3263 = vshrl.u32 %v3222, 16
      %v3265 = vrot.slane %v3263, 5
      %v3266 = vshll.u32 %v3222, 16
      %v3268 = vrot.slane %v3266, 6
      %v3269 = vor.u32 %v3265, %v3268
      %v3270 = vsel %vm1253, %v3260, %v3269
      %v3272 = vshrl.u32 %v3223, 16
      %v3274 = vrot.slane %v3272, 5
      %v3275 = vshll.u32 %v3223, 16
      %v3277 = vrot.slane %v3275, 6
      %v3278 = vor.u32 %v3274, %v3277
      %v3279 = vsel %vm1253, %v3269, %v3278
      %v3281 = vshrl.u32 %v3224, 16
      %v3283 = vrot.slane %v3281, 5
      %v3284 = vshll.u32 %v3224, 16
      %v3286 = vrot.slane %v3284, 6
      %v3287 = vor.u32 %v3283, %v3286
      %v3288 = vsel %vm1253, %v3278, %v3287
      %v3290 = vshrl.u32 %v3225, 16
      %v3292 = vrot.slane %v3290, 5
      %v3293 = vshll.u32 %v3225, 16
      %v3295 = vrot.slane %v3293, 6
      %v3296 = vor.u32 %v3292, %v3295
      %v3297 = vsel %vm1253, %v3287, %v3296
      %v3299 = vshrl.u32 %v3226, 16
      %v3301 = vrot.slane %v3299, 5
      %v3302 = vshll.u32 %v3226, 16
      %v3304 = vrot.slane %v3302, 6
      %v3305 = vor.u32 %v3301, %v3304
      %v3306 = vsel %vm1253, %v3296, %v3305
      %v3308 = vshrl.u32 %v3227, 16
      %v3310 = vrot.slane %v3308, 5
      %v3311 = vshll.u32 %v3227, 16
      %v3313 = vrot.slane %v3311, 6
      %v3314 = vor.u32 %v3310, %v3313
      %v3315 = vsel %vm1253, %v3305, %v3314
      %v3339 = vunpack.c.l.b16 %v3229
      %v3340 = vunpack.c.l.b16 %v3230
      %v3341 = vunpack.c.l.b16 %v3231
      %v3342 = vunpack.c.l.b16 %v3232
      %v3343 = vunpack.c.l.b16 %v3233
      %v3344 = vunpack.c.l.b16 %v3234
      %v3345 = vunpack.c.l.b16 %v3235
      %v3346 = vunpack.c.l.b16 %v3236
      %v3347 = vunpack.c.l.b16 %v3237
      %v3348 = vunpack.c.l.b16 %v3238
      %v3349 = vunpack.c.l.b16 %v3239
      %v3350 = vunpack.c.l.b16 %v3240
      %v3351 = vunpack.c.l.b16 %v3241
      %v3352 = vunpack.c.l.b16 %v3242
      %v3353 = vunpack.c.l.b16 %v3243
      %v3354 = vunpack.c.l.b16 %v3244
      %v3355 = vpack.c.b16 %v3340, %v3339
      %v3356 = vpack.c.b16 %v3342, %v3341
      %v3357 = vpack.c.b16 %v3344, %v3343
      %v3358 = vpack.c.b16 %v3346, %v3345
      %v3359 = vpack.c.b16 %v3348, %v3347
      %v3360 = vpack.c.b16 %v3350, %v3349
      %v3361 = vpack.c.b16 %v3352, %v3351
      %v3362 = vpack.c.b16 %v3354, %v3353
      %3371 = vmatprep.subr.bf16.mxu0 0
      %3372 = vmatpush1.bf16.msra.mxu0 %v3355
      %3373 = vmatprep.subr.bf16.mxu0 0
      %3374 = vmatpush1.bf16.msra.mxu0 %v3356
      %3375 = vmatprep.subr.bf16.mxu0 0
      %3376 = vmatpush1.bf16.msra.mxu0 %v3357
      %3377 = vmatprep.subr.bf16.mxu0 0
      %3378 = vmatpush1.bf16.msra.mxu0 %v3358
      %3379 = vmatprep.subr.bf16.mxu0 0
      %3380 = vmatpush1.bf16.msra.mxu0 %v3359
      %3381 = vmatprep.subr.bf16.mxu0 0
      %3382 = vmatpush1.bf16.msra.mxu0 %v3360
      %3383 = vmatprep.subr.bf16.mxu0 0
      %3384 = vmatpush1.bf16.msra.mxu0 %v3361
      %3385 = vmatprep.subr.bf16.mxu0 0
      %3386 = vmatpush1.bf16.msra.mxu0 %v3362
      %3387 = vmatprep.subr.bf16.mxu0 0
      %3388 = vmatpush1.bf16.msra.mxu0 0
      %3389 = vmatprep.subr.bf16.mxu0 0
      %3390 = vmatpush1.bf16.msra.mxu0 0
      %3391 = vmatprep.subr.bf16.mxu0 0
      %3392 = vmatpush1.bf16.msra.mxu0 0
      %3393 = vmatprep.subr.bf16.mxu0 0
      %3394 = vmatpush1.bf16.msra.mxu0 0
      %3395 = vmatprep.subr.bf16.mxu0 0
      %3396 = vmatpush1.bf16.msra.mxu0 0
      %3397 = vmatprep.subr.bf16.mxu0 0
      %3398 = vmatpush1.bf16.msra.mxu0 0
      %3399 = vmatprep.subr.bf16.mxu0 0
      %3400 = vmatpush1.bf16.msra.mxu0 0
      %3401 = vmatprep.subr.bf16.mxu0 0
      %3402 = vmatpush1.bf16.msra.mxu0 0
      %3403 = vmatprep.mubr.bf16.mxu0 0
      %3404 = vmatmul.mubr.bf16.gmra.mrb[0].mxu0 %v3261
      %v3405 = vpop.f32.mrb[0].mxu0
      %v3406 = vadd.f32 0.0, %v3405
      %v3407 = vpop.f32.mrb[0].mxu0
      %v3408 = vpop.f32.mrb[0].mxu0
      %v3409 = vadd.f32 0.0, %v3408
      %v3410 = vpop.f32.mrb[0].mxu0
      %3411 = vmatprep.mubr.bf16.mxu0 0
      %3412 = vmatmul.mubr.bf16.gmra.mrb[0].mxu0 %v3270
      %v3413 = vpop.f32.mrb[0].mxu0
      %v3414 = vadd.f32 0.0, %v3413
      %v3415 = vpop.f32.mrb[0].mxu0
      %v3416 = vpop.f32.mrb[0].mxu0
      %v3417 = vadd.f32 0.0, %v3416
      %v3418 = vpop.f32.mrb[0].mxu0
      %3419 = vmatprep.mubr.bf16.mxu0 0
      %3420 = vmatmul.mubr.bf16.gmra.mrb[0].mxu0 %v3279
      %v3421 = vpop.f32.mrb[0].mxu0
      %v3422 = vadd.f32 0.0, %v3421
      %v3423 = vpop.f32.mrb[0].mxu0
      %v3424 = vpop.f32.mrb[0].mxu0
      %v3425 = vadd.f32 0.0, %v3424
      %v3426 = vpop.f32.mrb[0].mxu0
      %3427 = vmatprep.mubr.bf16.mxu0 0
      %3428 = vmatmul.mubr.bf16.gmra.mrb[0].mxu0 %v3288
      %v3429 = vpop.f32.mrb[0].mxu0
      %v3430 = vadd.f32 0.0, %v3429
      %v3431 = vpop.f32.mrb[0].mxu0
      %v3432 = vpop.f32.mrb[0].mxu0
      %v3433 = vadd.f32 0.0, %v3432
      %v3434 = vpop.f32.mrb[0].mxu0
      %3435 = vmatprep.mubr.bf16.mxu0 0
      %3436 = vmatmul.mubr.bf16.gmra.mrb[0].mxu0 %v3297
      %v3437 = vpop.f32.mrb[0].mxu0
      %v3438 = vadd.f32 0.0, %v3437
      %v3439 = vpop.f32.mrb[0].mxu0
      %v3440 = vpop.f32.mrb[0].mxu0
      %v3441 = vadd.f32 0.0, %v3440
      %v3442 = vpop.f32.mrb[0].mxu0
      %3443 = vmatprep.mubr.bf16.mxu0 0
      %3444 = vmatmul.mubr.bf16.gmra.mrb[0].mxu0 %v3306
      %v3445 = vpop.f32.mrb[0].mxu0
      %v3446 = vadd.f32 0.0, %v3445
      %v3447 = vpop.f32.mrb[0].mxu0
      %v3448 = vpop.f32.mrb[0].mxu0
      %v3449 = vadd.f32 0.0, %v3448
      %v3450 = vpop.f32.mrb[0].mxu0
      %3451 = vmatprep.mubr.bf16.mxu0 0
      %3452 = vmatmul.mubr.bf16.gmra.mrb[0].mxu0 %v3315
      %v3453 = vpop.f32.mrb[0].mxu0
      %v3454 = vadd.f32 0.0, %v3453
      %v3455 = vpop.f32.mrb[0].mxu0
      %v3456 = vpop.f32.mrb[0].mxu0
      %v3457 = vpop.f32.mrb[0].mxu0
      %3458 = vdwg.mxu0
      %v3459 = vadd.f32 %v3207, %v3406
      %v3460 = vadd.f32 %v3208, %v3409
      %v3461 = vadd.f32 %v3209, %v3414
      %v3462 = vadd.f32 %v3210, %v3417
      %v3463 = vadd.f32 %v3211, %v3422
      %v3464 = vadd.f32 %v3212, %v3425
      %v3465 = vadd.f32 %v3213, %v3430
      %v3466 = vadd.f32 %v3214, %v3433
      %v3467 = vadd.f32 %v3215, %v3438
      %v3468 = vadd.f32 %v3216, %v3441
      %v3469 = vadd.f32 %v3217, %v3446
      %v3470 = vadd.f32 %v3218, %v3449
      %v3471 = vadd.f32 %v3219, %v3454
      %v3472 = vld [vmem:[#allocation3] sm:$0xc0]
      %s3473 = scalar_lea.vmem %s5, 256
      %v3474 = vld [vmem:[%s3473] sm:$0xf]
      %v3475 = vld [vmem:[%s3473 + $0x4] sm:$0xf]
      %v3476 = vld [vmem:[%s3473 + $0x8] sm:$0xf]
      %v3477 = vld [vmem:[%s3473 + $0xc] sm:$0xf]
      %v3478 = vld [vmem:[%s3473 + $0x10] sm:$0xf]
      %v3479 = vld [vmem:[%s3473 + $0x14] sm:$0xf]
      %v3480 = vld [vmem:[%s3473 + $0x18] sm:$0xf]
      %v3481 = vld [vmem:[%s3473 + $0x1c] sm:$0xf]
      %v3482 = vld [vmem:[%s3473 + $0x20] sm:$0xf]
      %v3483 = vld [vmem:[%s3473 + $0x24] sm:$0xf]
      %v3484 = vld [vmem:[%s3473 + $0x28] sm:$0xf]
      %v3485 = vld [vmem:[%s3473 + $0x2c] sm:$0xf]
      %v3486 = vld [vmem:[%s3473 + $0x30] sm:$0xf]
      %v3487 = vld [vmem:[%s3473 + $0x34] sm:$0xf]
      %v3488 = vld [vmem:[%s3473 + $0x38] sm:$0xf]
      %v3489 = vld [vmem:[%s3473 + $0x3c] sm:$0xf]
      %v3498 = vrot.slane %v3472, 6
      %v3499 = vrot.slane %v3221, 6
      %v3500 = vsel %vm1507, %v3498, %v3499
      %v3501 = vrot.slane %v3222, 6
      %v3502 = vsel %vm1507, %v3499, %v3501
      %v3503 = vrot.slane %v3223, 6
      %v3504 = vsel %vm1507, %v3501, %v3503
      %v3505 = vrot.slane %v3224, 6
      %v3506 = vsel %vm1507, %v3503, %v3505
      %v3507 = vrot.slane %v3225, 6
      %v3508 = vsel %vm1507, %v3505, %v3507
      %v3509 = vrot.slane %v3226, 6
      %v3510 = vsel %vm1507, %v3507, %v3509
      %v3511 = vrot.slane %v3227, 6
      %v3512 = vsel %vm1507, %v3509, %v3511
      %v3536 = vunpack.c.l.b16 %v3474
      %v3537 = vunpack.c.l.b16 %v3475
      %v3538 = vunpack.c.l.b16 %v3476
      %v3539 = vunpack.c.l.b16 %v3477
      %v3540 = vunpack.c.l.b16 %v3478
      %v3541 = vunpack.c.l.b16 %v3479
      %v3542 = vunpack.c.l.b16 %v3480
      %v3543 = vunpack.c.l.b16 %v3481
      %v3544 = vunpack.c.l.b16 %v3482
      %v3545 = vunpack.c.l.b16 %v3483
      %v3546 = vunpack.c.l.b16 %v3484
      %v3547 = vunpack.c.l.b16 %v3485
      %v3548 = vunpack.c.l.b16 %v3486
      %v3549 = vunpack.c.l.b16 %v3487
      %v3550 = vunpack.c.l.b16 %v3488
      %v3551 = vunpack.c.l.b16 %v3489
      %v3552 = vpack.c.b16 %v3537, %v3536
      %v3553 = vpack.c.b16 %v3539, %v3538
      %v3554 = vpack.c.b16 %v3541, %v3540
      %v3555 = vpack.c.b16 %v3543, %v3542
      %v3556 = vpack.c.b16 %v3545, %v3544
      %v3557 = vpack.c.b16 %v3547, %v3546
      %v3558 = vpack.c.b16 %v3549, %v3548
      %v3559 = vpack.c.b16 %v3551, %v3550
      %3568 = vmatprep.subr.bf16.mxu0 0
      %3569 = vmatpush1.bf16.msra.mxu0 %v3552
      %3570 = vmatprep.subr.bf16.mxu0 0
      %3571 = vmatpush1.bf16.msra.mxu0 %v3553
      %3572 = vmatprep.subr.bf16.mxu0 0
      %3573 = vmatpush1.bf16.msra.mxu0 %v3554
      %3574 = vmatprep.subr.bf16.mxu0 0
      %3575 = vmatpush1.bf16.msra.mxu0 %v3555
      %3576 = vmatprep.subr.bf16.mxu0 0
      %3577 = vmatpush1.bf16.msra.mxu0 %v3556
      %3578 = vmatprep.subr.bf16.mxu0 0
      %3579 = vmatpush1.bf16.msra.mxu0 %v3557
      %3580 = vmatprep.subr.bf16.mxu0 0
      %3581 = vmatpush1.bf16.msra.mxu0 %v3558
      %3582 = vmatprep.subr.bf16.mxu0 0
      %3583 = vmatpush1.bf16.msra.mxu0 %v3559
      %3584 = vmatprep.subr.bf16.mxu0 0
      %3585 = vmatpush1.bf16.msra.mxu0 0
      %3586 = vmatprep.subr.bf16.mxu0 0
      %3587 = vmatpush1.bf16.msra.mxu0 0
      %3588 = vmatprep.subr.bf16.mxu0 0
      %3589 = vmatpush1.bf16.msra.mxu0 0
      %3590 = vmatprep.subr.bf16.mxu0 0
      %3591 = vmatpush1.bf16.msra.mxu0 0
      %3592 = vmatprep.subr.bf16.mxu0 0
      %3593 = vmatpush1.bf16.msra.mxu0 0
      %3594 = vmatprep.subr.bf16.mxu0 0
      %3595 = vmatpush1.bf16.msra.mxu0 0
      %3596 = vmatprep.subr.bf16.mxu0 0
      %3597 = vmatpush1.bf16.msra.mxu0 0
      %3598 = vmatprep.subr.bf16.mxu0 0
      %3599 = vmatpush1.bf16.msra.mxu0 0
      %3600 = vmatprep.mubr.bf16.mxu0 0
      %3601 = vmatmul.mubr.bf16.gmra.mrb[0].mxu0 %v3500
      %v3602 = vpop.f32.mrb[0].mxu0
      %v3603 = vadd.f32 0.0, %v3602
      %v3604 = vpop.f32.mrb[0].mxu0
      %v3605 = vpop.f32.mrb[0].mxu0
      %v3606 = vadd.f32 0.0, %v3605
      %v3607 = vpop.f32.mrb[0].mxu0
      %3608 = vmatprep.mubr.bf16.mxu0 0
      %3609 = vmatmul.mubr.bf16.gmra.mrb[0].mxu0 %v3502
      %v3610 = vpop.f32.mrb[0].mxu0
      %v3611 = vadd.f32 0.0, %v3610
      %v3612 = vpop.f32.mrb[0].mxu0
      %v3613 = vpop.f32.mrb[0].mxu0
      %v3614 = vadd.f32 0.0, %v3613
      %v3615 = vpop.f32.mrb[0].mxu0
      %3616 = vmatprep.mubr.bf16.mxu0 0
      %3617 = vmatmul.mubr.bf16.gmra.mrb[0].mxu0 %v3504
      %v3618 = vpop.f32.mrb[0].mxu0
      %v3619 = vadd.f32 0.0, %v3618
      %v3620 = vpop.f32.mrb[0].mxu0
      %v3621 = vpop.f32.mrb[0].mxu0
      %v3622 = vadd.f32 0.0, %v3621
      %v3623 = vpop.f32.mrb[0].mxu0
      %3624 = vmatprep.mubr.bf16.mxu0 0
      %3625 = vmatmul.mubr.bf16.gmra.mrb[0].mxu0 %v3506
      %v3626 = vpop.f32.mrb[0].mxu0
      %v3627 = vadd.f32 0.0, %v3626
      %v3628 = vpop.f32.mrb[0].mxu0
      %v3629 = vpop.f32.mrb[0].mxu0
      %v3630 = vadd.f32 0.0, %v3629
      %v3631 = vpop.f32.mrb[0].mxu0
      %3632 = vmatprep.mubr.bf16.mxu0 0
      %3633 = vmatmul.mubr.bf16.gmra.mrb[0].mxu0 %v3508
      %v3634 = vpop.f32.mrb[0].mxu0
      %v3635 = vadd.f32 0.0, %v3634
      %v3636 = vpop.f32.mrb[0].mxu0
      %v3637 = vpop.f32.mrb[0].mxu0
      %v3638 = vadd.f32 0.0, %v3637
      %v3639 = vpop.f32.mrb[0].mxu0
      %3640 = vmatprep.mubr.bf16.mxu0 0
      %3641 = vmatmul.mubr.bf16.gmra.mrb[0].mxu0 %v3510
      %v3642 = vpop.f32.mrb[0].mxu0
      %v3643 = vadd.f32 0.0, %v3642
      %v3644 = vpop.f32.mrb[0].mxu0
      %v3645 = vpop.f32.mrb[0].mxu0
      %v3646 = vadd.f32 0.0, %v3645
      %v3647 = vpop.f32.mrb[0].mxu0
      %3648 = vmatprep.mubr.bf16.mxu0 0
      %3649 = vmatmul.mubr.bf16.gmra.mrb[0].mxu0 %v3512
      %v3650 = vpop.f32.mrb[0].mxu0
      %v3651 = vadd.f32 0.0, %v3650
      %v3652 = vpop.f32.mrb[0].mxu0
      %v3653 = vpop.f32.mrb[0].mxu0
      %v3654 = vpop.f32.mrb[0].mxu0
      %3655 = vdwg.mxu0
      %v3656 = vadd.f32 %v3459, %v3603
      %v3657 = vadd.f32 %v3460, %v3606
      %v3658 = vadd.f32 %v3461, %v3611
      %v3659 = vadd.f32 %v3462, %v3614
      %v3660 = vadd.f32 %v3463, %v3619
      %v3661 = vadd.f32 %v3464, %v3622
      %v3662 = vadd.f32 %v3465, %v3627
      %v3663 = vadd.f32 %v3466, %v3630
      %v3664 = vadd.f32 %v3467, %v3635
      %v3665 = vadd.f32 %v3468, %v3638
      %v3666 = vadd.f32 %v3469, %v3643
      %v3667 = vadd.f32 %v3470, %v3646
      %v3668 = vadd.f32 %v3471, %v3651
      %v3669 = vld [vmem:[#allocation3 + $0x38] sm:$0x7]
      %s3670 = scalar_lea.vmem %s5, 320
      %v3671 = vld [vmem:[%s3670] sm:$0xf]
      %v3672 = vld [vmem:[%s3670 + $0x4] sm:$0xf]
      %v3673 = vld [vmem:[%s3670 + $0x8] sm:$0xf]
      %v3674 = vld [vmem:[%s3670 + $0xc] sm:$0xf]
      %v3675 = vld [vmem:[%s3670 + $0x10] sm:$0xf]
      %v3676 = vld [vmem:[%s3670 + $0x14] sm:$0xf]
      %v3677 = vld [vmem:[%s3670 + $0x18] sm:$0xf]
      %v3678 = vld [vmem:[%s3670 + $0x1c] sm:$0xf]
      %v3679 = vld [vmem:[%s3670 + $0x20] sm:$0xf]
      %v3680 = vld [vmem:[%s3670 + $0x24] sm:$0xf]
      %v3681 = vld [vmem:[%s3670 + $0x28] sm:$0xf]
      %v3682 = vld [vmem:[%s3670 + $0x2c] sm:$0xf]
      %v3683 = vld [vmem:[%s3670 + $0x30] sm:$0xf]
      %v3684 = vld [vmem:[%s3670 + $0x34] sm:$0xf]
      %v3685 = vld [vmem:[%s3670 + $0x38] sm:$0xf]
      %v3686 = vld [vmem:[%s3670 + $0x3c] sm:$0xf]
      %v3688 = vshrl.u32 %v3472, 16
      %v3690 = vrot.slane %v3688, 6
      %v3691 = vshll.u32 %v3472, 16
      %v3693 = vrot.slane %v3691, 7
      %v3694 = vor.u32 %v3690, %v3693
      %v3695 = vrot.slane %v3254, 6
      %v3696 = vrot.slane %v3257, 7
      %v3697 = vor.u32 %v3695, %v3696
      %v3698 = vsel %vm1697, %v3694, %v3697
      %v3699 = vrot.slane %v3263, 6
      %v3700 = vrot.slane %v3266, 7
      %v3701 = vor.u32 %v3699, %v3700
      %v3702 = vsel %vm1697, %v3697, %v3701
      %v3703 = vrot.slane %v3272, 6
      %v3704 = vrot.slane %v3275, 7
      %v3705 = vor.u32 %v3703, %v3704
      %v3706 = vsel %vm1697, %v3701, %v3705
      %v3707 = vrot.slane %v3281, 6
      %v3708 = vrot.slane %v3284, 7
      %v3709 = vor.u32 %v3707, %v3708
      %v3710 = vsel %vm1697, %v3705, %v3709
      %v3711 = vrot.slane %v3290, 6
      %v3712 = vrot.slane %v3293, 7
      %v3713 = vor.u32 %v3711, %v3712
      %v3714 = vsel %vm1697, %v3709, %v3713
      %v3715 = vrot.slane %v3299, 6
      %v3716 = vrot.slane %v3302, 7
      %v3717 = vor.u32 %v3715, %v3716
      %v3718 = vsel %vm1697, %v3713, %v3717
      %v3720 = vshrl.u32 %v3669, 16
      %v3722 = vrot.slane %v3720, 6
      %v3723 = vshll.u32 %v3669, 16
      %v3725 = vrot.slane %v3723, 7
      %v3726 = vor.u32 %v3722, %v3725
      %v3727 = vsel %vm1697, %v3717, %v3726
      %v3751 = vunpack.c.l.b16 %v3671
      %v3752 = vunpack.c.l.b16 %v3672
      %v3753 = vunpack.c.l.b16 %v3673
      %v3754 = vunpack.c.l.b16 %v3674
      %v3755 = vunpack.c.l.b16 %v3675
      %v3756 = vunpack.c.l.b16 %v3676
      %v3757 = vunpack.c.l.b16 %v3677
      %v3758 = vunpack.c.l.b16 %v3678
      %v3759 = vunpack.c.l.b16 %v3679
      %v3760 = vunpack.c.l.b16 %v3680
      %v3761 = vunpack.c.l.b16 %v3681
      %v3762 = vunpack.c.l.b16 %v3682
      %v3763 = vunpack.c.l.b16 %v3683
      %v3764 = vunpack.c.l.b16 %v3684
      %v3765 = vunpack.c.l.b16 %v3685
      %v3766 = vunpack.c.l.b16 %v3686
      %v3767 = vpack.c.b16 %v3752, %v3751
      %v3768 = vpack.c.b16 %v3754, %v3753
      %v3769 = vpack.c.b16 %v3756, %v3755
      %v3770 = vpack.c.b16 %v3758, %v3757
      %v3771 = vpack.c.b16 %v3760, %v3759
      %v3772 = vpack.c.b16 %v3762, %v3761
      %v3773 = vpack.c.b16 %v3764, %v3763
      %v3774 = vpack.c.b16 %v3766, %v3765
      %3783 = vmatprep.subr.bf16.mxu0 0
      %3784 = vmatpush1.bf16.msra.mxu0 %v3767
      %3785 = vmatprep.subr.bf16.mxu0 0
      %3786 = vmatpush1.bf16.msra.mxu0 %v3768
      %3787 = vmatprep.subr.bf16.mxu0 0
      %3788 = vmatpush1.bf16.msra.mxu0 %v3769
      %3789 = vmatprep.subr.bf16.mxu0 0
      %3790 = vmatpush1.bf16.msra.mxu0 %v3770
      %3791 = vmatprep.subr.bf16.mxu0 0
      %3792 = vmatpush1.bf16.msra.mxu0 %v3771
      %3793 = vmatprep.subr.bf16.mxu0 0
      %3794 = vmatpush1.bf16.msra.mxu0 %v3772
      %3795 = vmatprep.subr.bf16.mxu0 0
      %3796 = vmatpush1.bf16.msra.mxu0 %v3773
      %3797 = vmatprep.subr.bf16.mxu0 0
      %3798 = vmatpush1.bf16.msra.mxu0 %v3774
      %3799 = vmatprep.subr.bf16.mxu0 0
      %3800 = vmatpush1.bf16.msra.mxu0 0
      %3801 = vmatprep.subr.bf16.mxu0 0
      %3802 = vmatpush1.bf16.msra.mxu0 0
      %3803 = vmatprep.subr.bf16.mxu0 0
      %3804 = vmatpush1.bf16.msra.mxu0 0
      %3805 = vmatprep.subr.bf16.mxu0 0
      %3806 = vmatpush1.bf16.msra.mxu0 0
      %3807 = vmatprep.subr.bf16.mxu0 0
      %3808 = vmatpush1.bf16.msra.mxu0 0
      %3809 = vmatprep.subr.bf16.mxu0 0
      %3810 = vmatpush1.bf16.msra.mxu0 0
      %3811 = vmatprep.subr.bf16.mxu0 0
      %3812 = vmatpush1.bf16.msra.mxu0 0
      %3813 = vmatprep.subr.bf16.mxu0 0
      %3814 = vmatpush1.bf16.msra.mxu0 0
      %3815 = vmatprep.mubr.bf16.mxu0 0
      %3816 = vmatmul.mubr.bf16.gmra.mrb[0].mxu0 %v3698
      %v3817 = vpop.f32.mrb[0].mxu0
      %v3818 = vadd.f32 0.0, %v3817
      %v3819 = vpop.f32.mrb[0].mxu0
      %v3820 = vpop.f32.mrb[0].mxu0
      %v3821 = vadd.f32 0.0, %v3820
      %v3822 = vpop.f32.mrb[0].mxu0
      %3823 = vmatprep.mubr.bf16.mxu0 0
      %3824 = vmatmul.mubr.bf16.gmra.mrb[0].mxu0 %v3702
      %v3825 = vpop.f32.mrb[0].mxu0
      %v3826 = vadd.f32 0.0, %v3825
      %v3827 = vpop.f32.mrb[0].mxu0
      %v3828 = vpop.f32.mrb[0].mxu0
      %v3829 = vadd.f32 0.0, %v3828
      %v3830 = vpop.f32.mrb[0].mxu0
      %3831 = vmatprep.mubr.bf16.mxu0 0
      %3832 = vmatmul.mubr.bf16.gmra.mrb[0].mxu0 %v3706
      %v3833 = vpop.f32.mrb[0].mxu0
      %v3834 = vadd.f32 0.0, %v3833
      %v3835 = vpop.f32.mrb[0].mxu0
      %v3836 = vpop.f32.mrb[0].mxu0
      %v3837 = vadd.f32 0.0, %v3836
      %v3838 = vpop.f32.mrb[0].mxu0
      %3839 = vmatprep.mubr.bf16.mxu0 0
      %3840 = vmatmul.mubr.bf16.gmra.mrb[0].mxu0 %v3710
      %v3841 = vpop.f32.mrb[0].mxu0
      %v3842 = vadd.f32 0.0, %v3841
      %v3843 = vpop.f32.mrb[0].mxu0
      %v3844 = vpop.f32.mrb[0].mxu0
      %v3845 = vadd.f32 0.0, %v3844
      %v3846 = vpop.f32.mrb[0].mxu0
      %3847 = vmatprep.mubr.bf16.mxu0 0
      %3848 = vmatmul.mubr.bf16.gmra.mrb[0].mxu0 %v3714
      %v3849 = vpop.f32.mrb[0].mxu0
      %v3850 = vadd.f32 0.0, %v3849
      %v3851 = vpop.f32.mrb[0].mxu0
      %v3852 = vpop.f32.mrb[0].mxu0
      %v3853 = vadd.f32 0.0, %v3852
      %v3854 = vpop.f32.mrb[0].mxu0
      %3855 = vmatprep.mubr.bf16.mxu0 0
      %3856 = vmatmul.mubr.bf16.gmra.mrb[0].mxu0 %v3718
      %v3857 = vpop.f32.mrb[0].mxu0
      %v3858 = vadd.f32 0.0, %v3857
      %v3859 = vpop.f32.mrb[0].mxu0
      %v3860 = vpop.f32.mrb[0].mxu0
      %v3861 = vadd.f32 0.0, %v3860
      %v3862 = vpop.f32.mrb[0].mxu0
      %3863 = vmatprep.mubr.bf16.mxu0 0
      %3864 = vmatmul.mubr.bf16.gmra.mrb[0].mxu0 %v3727
      %v3865 = vpop.f32.mrb[0].mxu0
      %v3866 = vadd.f32 0.0, %v3865
      %v3867 = vpop.f32.mrb[0].mxu0
      %v3868 = vpop.f32.mrb[0].mxu0
      %v3869 = vpop.f32.mrb[0].mxu0
      %3870 = vdwg.mxu0
      %v3871 = vadd.f32 %v3656, %v3818
      %v3872 = vadd.f32 %v3657, %v3821
      %v3873 = vadd.f32 %v3658, %v3826
      %v3874 = vadd.f32 %v3659, %v3829
      %v3875 = vadd.f32 %v3660, %v3834
      %v3876 = vadd.f32 %v3661, %v3837
      %v3877 = vadd.f32 %v3662, %v3842
      %v3878 = vadd.f32 %v3663, %v3845
      %v3879 = vadd.f32 %v3664, %v3850
      %v3880 = vadd.f32 %v3665, %v3853
      %v3881 = vadd.f32 %v3666, %v3858
      %v3882 = vadd.f32 %v3667, %v3861
      %v3883 = vadd.f32 %v3668, %v3866
      %v3884 = vld [vmem:[#allocation3 + $0x8] sm:$0xf8]
      %v3885 = vld [vmem:[#allocation3 + $0x38] sm:$0x7f]
      %s3886 = scalar_lea.vmem %s5, 384
      %v3887 = vld [vmem:[%s3886] sm:$0xf]
      %v3888 = vld [vmem:[%s3886 + $0x4] sm:$0xf]
      %v3889 = vld [vmem:[%s3886 + $0x8] sm:$0xf]
      %v3890 = vld [vmem:[%s3886 + $0xc] sm:$0xf]
      %v3891 = vld [vmem:[%s3886 + $0x10] sm:$0xf]
      %v3892 = vld [vmem:[%s3886 + $0x14] sm:$0xf]
      %v3893 = vld [vmem:[%s3886 + $0x18] sm:$0xf]
      %v3894 = vld [vmem:[%s3886 + $0x1c] sm:$0xf]
      %v3895 = vld [vmem:[%s3886 + $0x20] sm:$0xf]
      %v3896 = vld [vmem:[%s3886 + $0x24] sm:$0xf]
      %v3897 = vld [vmem:[%s3886 + $0x28] sm:$0xf]
      %v3898 = vld [vmem:[%s3886 + $0x2c] sm:$0xf]
      %v3899 = vld [vmem:[%s3886 + $0x30] sm:$0xf]
      %v3900 = vld [vmem:[%s3886 + $0x34] sm:$0xf]
      %v3901 = vld [vmem:[%s3886 + $0x38] sm:$0xf]
      %v3902 = vld [vmem:[%s3886 + $0x3c] sm:$0xf]
      %v3905 = vrot.slane %v3884, 3
      %v3906 = vrot.slane %v3222, 3
      %v3907 = vsel %vm1916, %v3905, %v3906
      %v3908 = vrot.slane %v3223, 3
      %v3909 = vsel %vm1916, %v3906, %v3908
      %v3910 = vrot.slane %v3224, 3
      %v3911 = vsel %vm1916, %v3908, %v3910
      %v3912 = vrot.slane %v3225, 3
      %v3913 = vsel %vm1916, %v3910, %v3912
      %v3914 = vrot.slane %v3226, 3
      %v3915 = vsel %vm1916, %v3912, %v3914
      %v3916 = vrot.slane %v3885, 3
      %v3917 = vsel %vm1916, %v3914, %v3916
      %v3941 = vunpack.c.l.b16 %v3887
      %v3942 = vunpack.c.l.b16 %v3888
      %v3943 = vunpack.c.l.b16 %v3889
      %v3944 = vunpack.c.l.b16 %v3890
      %v3945 = vunpack.c.l.b16 %v3891
      %v3946 = vunpack.c.l.b16 %v3892
      %v3947 = vunpack.c.l.b16 %v3893
      %v3948 = vunpack.c.l.b16 %v3894
      %v3949 = vunpack.c.l.b16 %v3895
      %v3950 = vunpack.c.l.b16 %v3896
      %v3951 = vunpack.c.l.b16 %v3897
      %v3952 = vunpack.c.l.b16 %v3898
      %v3953 = vunpack.c.l.b16 %v3899
      %v3954 = vunpack.c.l.b16 %v3900
      %v3955 = vunpack.c.l.b16 %v3901
      %v3956 = vunpack.c.l.b16 %v3902
      %v3957 = vpack.c.b16 %v3942, %v3941
      %v3958 = vpack.c.b16 %v3944, %v3943
      %v3959 = vpack.c.b16 %v3946, %v3945
      %v3960 = vpack.c.b16 %v3948, %v3947
      %v3961 = vpack.c.b16 %v3950, %v3949
      %v3962 = vpack.c.b16 %v3952, %v3951
      %v3963 = vpack.c.b16 %v3954, %v3953
      %v3964 = vpack.c.b16 %v3956, %v3955
      %3973 = vmatprep.subr.bf16.mxu0 0
      %3974 = vmatpush1.bf16.msra.mxu0 %v3957
      %3975 = vmatprep.subr.bf16.mxu0 0
      %3976 = vmatpush1.bf16.msra.mxu0 %v3958
      %3977 = vmatprep.subr.bf16.mxu0 0
      %3978 = vmatpush1.bf16.msra.mxu0 %v3959
      %3979 = vmatprep.subr.bf16.mxu0 0
      %3980 = vmatpush1.bf16.msra.mxu0 %v3960
      %3981 = vmatprep.subr.bf16.mxu0 0
      %3982 = vmatpush1.bf16.msra.mxu0 %v3961
      %3983 = vmatprep.subr.bf16.mxu0 0
      %3984 = vmatpush1.bf16.msra.mxu0 %v3962
      %3985 = vmatprep.subr.bf16.mxu0 0
      %3986 = vmatpush1.bf16.msra.mxu0 %v3963
      %3987 = vmatprep.subr.bf16.mxu0 0
      %3988 = vmatpush1.bf16.msra.mxu0 %v3964
      %3989 = vmatprep.subr.bf16.mxu0 0
      %3990 = vmatpush1.bf16.msra.mxu0 0
      %3991 = vmatprep.subr.bf16.mxu0 0
      %3992 = vmatpush1.bf16.msra.mxu0 0
      %3993 = vmatprep.subr.bf16.mxu0 0
      %3994 = vmatpush1.bf16.msra.mxu0 0
      %3995 = vmatprep.subr.bf16.mxu0 0
      %3996 = vmatpush1.bf16.msra.mxu0 0
      %3997 = vmatprep.subr.bf16.mxu0 0
      %3998 = vmatpush1.bf16.msra.mxu0 0
      %3999 = vmatprep.subr.bf16.mxu0 0
      %4000 = vmatpush1.bf16.msra.mxu0 0
      %4001 = vmatprep.subr.bf16.mxu0 0
      %4002 = vmatpush1.bf16.msra.mxu0 0
      %4003 = vmatprep.subr.bf16.mxu0 0
      %4004 = vmatpush1.bf16.msra.mxu0 0
      %4005 = vmatprep.mubr.bf16.mxu0 0
      %4006 = vmatmul.mubr.bf16.gmra.mrb[0].mxu0 %v3907
      %v4007 = vpop.f32.mrb[0].mxu0
      %v4008 = vadd.f32 0.0, %v4007
      %v4009 = vpop.f32.mrb[0].mxu0
      %v4010 = vpop.f32.mrb[0].mxu0
      %v4011 = vadd.f32 0.0, %v4010
      %v4012 = vpop.f32.mrb[0].mxu0
      %4013 = vmatprep.mubr.bf16.mxu0 0
      %4014 = vmatmul.mubr.bf16.gmra.mrb[0].mxu0 %v3909
      %v4015 = vpop.f32.mrb[0].mxu0
      %v4016 = vadd.f32 0.0, %v4015
      %v4017 = vpop.f32.mrb[0].mxu0
      %v4018 = vpop.f32.mrb[0].mxu0
      %v4019 = vadd.f32 0.0, %v4018
      %v4020 = vpop.f32.mrb[0].mxu0
      %4021 = vmatprep.mubr.bf16.mxu0 0
      %4022 = vmatmul.mubr.bf16.gmra.mrb[0].mxu0 %v3911
      %v4023 = vpop.f32.mrb[0].mxu0
      %v4024 = vadd.f32 0.0, %v4023
      %v4025 = vpop.f32.mrb[0].mxu0
      %v4026 = vpop.f32.mrb[0].mxu0
      %v4027 = vadd.f32 0.0, %v4026
      %v4028 = vpop.f32.mrb[0].mxu0
      %4029 = vmatprep.mubr.bf16.mxu0 0
      %4030 = vmatmul.mubr.bf16.gmra.mrb[0].mxu0 %v3913
      %v4031 = vpop.f32.mrb[0].mxu0
      %v4032 = vadd.f32 0.0, %v4031
      %v4033 = vpop.f32.mrb[0].mxu0
      %v4034 = vpop.f32.mrb[0].mxu0
      %v4035 = vadd.f32 0.0, %v4034
      %v4036 = vpop.f32.mrb[0].mxu0
      %4037 = vmatprep.mubr.bf16.mxu0 0
      %4038 = vmatmul.mubr.bf16.gmra.mrb[0].mxu0 %v3915
      %v4039 = vpop.f32.mrb[0].mxu0
      %v4040 = vadd.f32 0.0, %v4039
      %v4041 = vpop.f32.mrb[0].mxu0
      %v4042 = vpop.f32.mrb[0].mxu0
      %v4043 = vadd.f32 0.0, %v4042
      %v4044 = vpop.f32.mrb[0].mxu0
      %4045 = vmatprep.mubr.bf16.mxu0 0
      %4046 = vmatmul.mubr.bf16.gmra.mrb[0].mxu0 %v3917
      %v4047 = vpop.f32.mrb[0].mxu0
      %v4048 = vadd.f32 0.0, %v4047
      %v4049 = vpop.f32.mrb[0].mxu0
      %v4050 = vpop.f32.mrb[0].mxu0
      %v4051 = vadd.f32 0.0, %v4050
      %v4052 = vpop.f32.mrb[0].mxu0
      %4053 = vmatprep.mubr.bf16.mxu0 0
      %4054 = vmatmul.mubr.bf16.gmra.mrb[0].mxu0 %v3916
      %v4055 = vpop.f32.mrb[0].mxu0
      %v4056 = vadd.f32 0.0, %v4055
      %v4057 = vpop.f32.mrb[0].mxu0
      %v4058 = vpop.f32.mrb[0].mxu0
      %v4059 = vpop.f32.mrb[0].mxu0
      %4060 = vdwg.mxu0
      %v4061 = vadd.f32 %v3871, %v4008
      %v4062 = vadd.f32 %v3872, %v4011
      %v4063 = vadd.f32 %v3873, %v4016
      %v4064 = vadd.f32 %v3874, %v4019
      %v4065 = vadd.f32 %v3875, %v4024
      %v4066 = vadd.f32 %v3876, %v4027
      %v4067 = vadd.f32 %v3877, %v4032
      %v4068 = vadd.f32 %v3878, %v4035
      %v4069 = vadd.f32 %v3879, %v4040
      %v4070 = vadd.f32 %v3880, %v4043
      %v4071 = vadd.f32 %v3881, %v4048
      %v4072 = vadd.f32 %v3882, %v4051
      %v4073 = vadd.f32 %v3883, %v4056
      %v4074 = vld [vmem:[#allocation3 + $0x38] sm:$0xff]
      %s4075 = scalar_lea.vmem %s5, 448
      %v4076 = vld [vmem:[%s4075] sm:$0xf]
      %v4077 = vld [vmem:[%s4075 + $0x4] sm:$0xf]
      %v4078 = vld [vmem:[%s4075 + $0x8] sm:$0xf]
      %v4079 = vld [vmem:[%s4075 + $0xc] sm:$0xf]
      %v4080 = vld [vmem:[%s4075 + $0x10] sm:$0xf]
      %v4081 = vld [vmem:[%s4075 + $0x14] sm:$0xf]
      %v4082 = vld [vmem:[%s4075 + $0x18] sm:$0xf]
      %v4083 = vld [vmem:[%s4075 + $0x1c] sm:$0xf]
      %v4084 = vld [vmem:[%s4075 + $0x20] sm:$0xf]
      %v4085 = vld [vmem:[%s4075 + $0x24] sm:$0xf]
      %v4086 = vld [vmem:[%s4075 + $0x28] sm:$0xf]
      %v4087 = vld [vmem:[%s4075 + $0x2c] sm:$0xf]
      %v4088 = vld [vmem:[%s4075 + $0x30] sm:$0xf]
      %v4089 = vld [vmem:[%s4075 + $0x34] sm:$0xf]
      %v4090 = vld [vmem:[%s4075 + $0x38] sm:$0xf]
      %v4091 = vld [vmem:[%s4075 + $0x3c] sm:$0xf]
      %v4093 = vshrl.u32 %v3884, 16
      %v4095 = vrot.slane %v4093, 3
      %v4096 = vshll.u32 %v3884, 16
      %v4098 = vrot.slane %v4096, 4
      %v4099 = vor.u32 %v4095, %v4098
      %v4100 = vrot.slane %v3263, 3
      %v4101 = vrot.slane %v3266, 4
      %v4102 = vor.u32 %v4100, %v4101
      %v4103 = vsel %vm2104, %v4099, %v4102
      %v4104 = vrot.slane %v3272, 3
      %v4105 = vrot.slane %v3275, 4
      %v4106 = vor.u32 %v4104, %v4105
      %v4107 = vsel %vm2104, %v4102, %v4106
      %v4108 = vrot.slane %v3281, 3
      %v4109 = vrot.slane %v3284, 4
      %v4110 = vor.u32 %v4108, %v4109
      %v4111 = vsel %vm2104, %v4106, %v4110
      %v4112 = vrot.slane %v3290, 3
      %v4113 = vrot.slane %v3293, 4
      %v4114 = vor.u32 %v4112, %v4113
      %v4115 = vsel %vm2104, %v4110, %v4114
      %v4116 = vrot.slane %v3299, 3
      %v4117 = vrot.slane %v3302, 4
      %v4118 = vor.u32 %v4116, %v4117
      %v4119 = vsel %vm2104, %v4114, %v4118
      %v4121 = vshrl.u32 %v4074, 16
      %v4123 = vrot.slane %v4121, 3
      %v4124 = vshll.u32 %v4074, 16
      %v4126 = vrot.slane %v4124, 4
      %v4127 = vor.u32 %v4123, %v4126
      %v4128 = vsel %vm2104, %v4118, %v4127
      %v4152 = vunpack.c.l.b16 %v4076
      %v4153 = vunpack.c.l.b16 %v4077
      %v4154 = vunpack.c.l.b16 %v4078
      %v4155 = vunpack.c.l.b16 %v4079
      %v4156 = vunpack.c.l.b16 %v4080
      %v4157 = vunpack.c.l.b16 %v4081
      %v4158 = vunpack.c.l.b16 %v4082
      %v4159 = vunpack.c.l.b16 %v4083
      %v4160 = vunpack.c.l.b16 %v4084
      %v4161 = vunpack.c.l.b16 %v4085
      %v4162 = vunpack.c.l.b16 %v4086
      %v4163 = vunpack.c.l.b16 %v4087
      %v4164 = vunpack.c.l.b16 %v4088
      %v4165 = vunpack.c.l.b16 %v4089
      %v4166 = vunpack.c.l.b16 %v4090
      %v4167 = vunpack.c.l.b16 %v4091
      %v4168 = vpack.c.b16 %v4153, %v4152
      %v4169 = vpack.c.b16 %v4155, %v4154
      %v4170 = vpack.c.b16 %v4157, %v4156
      %v4171 = vpack.c.b16 %v4159, %v4158
      %v4172 = vpack.c.b16 %v4161, %v4160
      %v4173 = vpack.c.b16 %v4163, %v4162
      %v4174 = vpack.c.b16 %v4165, %v4164
      %v4175 = vpack.c.b16 %v4167, %v4166
      %4184 = vmatprep.subr.bf16.mxu0 0
      %4185 = vmatpush1.bf16.msra.mxu0 %v4168
      %4186 = vmatprep.subr.bf16.mxu0 0
      %4187 = vmatpush1.bf16.msra.mxu0 %v4169
      %4188 = vmatprep.subr.bf16.mxu0 0
      %4189 = vmatpush1.bf16.msra.mxu0 %v4170
      %4190 = vmatprep.subr.bf16.mxu0 0
      %4191 = vmatpush1.bf16.msra.mxu0 %v4171
      %4192 = vmatprep.subr.bf16.mxu0 0
      %4193 = vmatpush1.bf16.msra.mxu0 %v4172
      %4194 = vmatprep.subr.bf16.mxu0 0
      %4195 = vmatpush1.bf16.msra.mxu0 %v4173
      %4196 = vmatprep.subr.bf16.mxu0 0
      %4197 = vmatpush1.bf16.msra.mxu0 %v4174
      %4198 = vmatprep.subr.bf16.mxu0 0
      %4199 = vmatpush1.bf16.msra.mxu0 %v4175
      %4200 = vmatprep.subr.bf16.mxu0 0
      %4201 = vmatpush1.bf16.msra.mxu0 0
      %4202 = vmatprep.subr.bf16.mxu0 0
      %4203 = vmatpush1.bf16.msra.mxu0 0
      %4204 = vmatprep.subr.bf16.mxu0 0
      %4205 = vmatpush1.bf16.msra.mxu0 0
      %4206 = vmatprep.subr.bf16.mxu0 0
      %4207 = vmatpush1.bf16.msra.mxu0 0
      %4208 = vmatprep.subr.bf16.mxu0 0
      %4209 = vmatpush1.bf16.msra.mxu0 0
      %4210 = vmatprep.subr.bf16.mxu0 0
      %4211 = vmatpush1.bf16.msra.mxu0 0
      %4212 = vmatprep.subr.bf16.mxu0 0
      %4213 = vmatpush1.bf16.msra.mxu0 0
      %4214 = vmatprep.subr.bf16.mxu0 0
      %4215 = vmatpush1.bf16.msra.mxu0 0
      %4216 = vmatprep.mubr.bf16.mxu0 0
      %4217 = vmatmul.mubr.bf16.gmra.mrb[0].mxu0 %v4103
      %v4218 = vpop.f32.mrb[0].mxu0
      %v4219 = vadd.f32 0.0, %v4218
      %v4220 = vpop.f32.mrb[0].mxu0
      %v4221 = vpop.f32.mrb[0].mxu0
      %v4222 = vadd.f32 0.0, %v4221
      %v4223 = vpop.f32.mrb[0].mxu0
      %4224 = vmatprep.mubr.bf16.mxu0 0
      %4225 = vmatmul.mubr.bf16.gmra.mrb[0].mxu0 %v4107
      %v4226 = vpop.f32.mrb[0].mxu0
      %v4227 = vadd.f32 0.0, %v4226
      %v4228 = vpop.f32.mrb[0].mxu0
      %v4229 = vpop.f32.mrb[0].mxu0
      %v4230 = vadd.f32 0.0, %v4229
      %v4231 = vpop.f32.mrb[0].mxu0
      %4232 = vmatprep.mubr.bf16.mxu0 0
      %4233 = vmatmul.mubr.bf16.gmra.mrb[0].mxu0 %v4111
      %v4234 = vpop.f32.mrb[0].mxu0
      %v4235 = vadd.f32 0.0, %v4234
      %v4236 = vpop.f32.mrb[0].mxu0
      %v4237 = vpop.f32.mrb[0].mxu0
      %v4238 = vadd.f32 0.0, %v4237
      %v4239 = vpop.f32.mrb[0].mxu0
      %4240 = vmatprep.mubr.bf16.mxu0 0
      %4241 = vmatmul.mubr.bf16.gmra.mrb[0].mxu0 %v4115
      %v4242 = vpop.f32.mrb[0].mxu0
      %v4243 = vadd.f32 0.0, %v4242
      %v4244 = vpop.f32.mrb[0].mxu0
      %v4245 = vpop.f32.mrb[0].mxu0
      %v4246 = vadd.f32 0.0, %v4245
      %v4247 = vpop.f32.mrb[0].mxu0
      %4248 = vmatprep.mubr.bf16.mxu0 0
      %4249 = vmatmul.mubr.bf16.gmra.mrb[0].mxu0 %v4119
      %v4250 = vpop.f32.mrb[0].mxu0
      %v4251 = vadd.f32 0.0, %v4250
      %v4252 = vpop.f32.mrb[0].mxu0
      %v4253 = vpop.f32.mrb[0].mxu0
      %v4254 = vadd.f32 0.0, %v4253
      %v4255 = vpop.f32.mrb[0].mxu0
      %4256 = vmatprep.mubr.bf16.mxu0 0
      %4257 = vmatmul.mubr.bf16.gmra.mrb[0].mxu0 %v4128
      %v4258 = vpop.f32.mrb[0].mxu0
      %v4259 = vadd.f32 0.0, %v4258
      %v4260 = vpop.f32.mrb[0].mxu0
      %v4261 = vpop.f32.mrb[0].mxu0
      %v4262 = vadd.f32 0.0, %v4261
      %v4263 = vpop.f32.mrb[0].mxu0
      %4264 = vmatprep.mubr.bf16.mxu0 0
      %4265 = vmatmul.mubr.bf16.gmra.mrb[0].mxu0 %v4127
      %v4266 = vpop.f32.mrb[0].mxu0
      %v4267 = vadd.f32 0.0, %v4266
      %v4268 = vpop.f32.mrb[0].mxu0
      %v4269 = vpop.f32.mrb[0].mxu0
      %v4270 = vpop.f32.mrb[0].mxu0
      %4271 = vdwg.mxu0
      %v4272 = vadd.f32 %v4061, %v4219
      %v4273 = vadd.f32 %v4062, %v4222
      %v4274 = vadd.f32 %v4063, %v4227
      %v4275 = vadd.f32 %v4064, %v4230
      %v4276 = vadd.f32 %v4065, %v4235
      %v4277 = vadd.f32 %v4066, %v4238
      %v4278 = vadd.f32 %v4067, %v4243
      %v4279 = vadd.f32 %v4068, %v4246
      %v4280 = vadd.f32 %v4069, %v4251
      %v4281 = vadd.f32 %v4070, %v4254
      %v4282 = vadd.f32 %v4071, %v4259
      %v4283 = vadd.f32 %v4072, %v4262
      %v4284 = vadd.f32 %v4073, %v4267
      %v4285 = vld [vmem:[#allocation3 + $0x8] sm:$0xf0]
      %s4286 = scalar_lea.vmem %s5, 512
      %v4287 = vld [vmem:[%s4286] sm:$0xf]
      %v4288 = vld [vmem:[%s4286 + $0x4] sm:$0xf]
      %v4289 = vld [vmem:[%s4286 + $0x8] sm:$0xf]
      %v4290 = vld [vmem:[%s4286 + $0xc] sm:$0xf]
      %v4291 = vld [vmem:[%s4286 + $0x10] sm:$0xf]
      %v4292 = vld [vmem:[%s4286 + $0x14] sm:$0xf]
      %v4293 = vld [vmem:[%s4286 + $0x18] sm:$0xf]
      %v4294 = vld [vmem:[%s4286 + $0x1c] sm:$0xf]
      %v4295 = vld [vmem:[%s4286 + $0x20] sm:$0xf]
      %v4296 = vld [vmem:[%s4286 + $0x24] sm:$0xf]
      %v4297 = vld [vmem:[%s4286 + $0x28] sm:$0xf]
      %v4298 = vld [vmem:[%s4286 + $0x2c] sm:$0xf]
      %v4299 = vld [vmem:[%s4286 + $0x30] sm:$0xf]
      %v4300 = vld [vmem:[%s4286 + $0x34] sm:$0xf]
      %v4301 = vld [vmem:[%s4286 + $0x38] sm:$0xf]
      %v4302 = vld [vmem:[%s4286 + $0x3c] sm:$0xf]
      %v4305 = vrot.slane %v4285, 4
      %v4306 = vrot.slane %v3222, 4
      %v4307 = vsel %vm2318, %v4305, %v4306
      %v4308 = vrot.slane %v3223, 4
      %v4309 = vsel %vm2318, %v4306, %v4308
      %v4310 = vrot.slane %v3224, 4
      %v4311 = vsel %vm2318, %v4308, %v4310
      %v4312 = vrot.slane %v3225, 4
      %v4313 = vsel %vm2318, %v4310, %v4312
      %v4314 = vrot.slane %v3226, 4
      %v4315 = vsel %vm2318, %v4312, %v4314
      %v4316 = vrot.slane %v4074, 4
      %v4317 = vsel %vm2318, %v4314, %v4316
      %v4341 = vunpack.c.l.b16 %v4287
      %v4342 = vunpack.c.l.b16 %v4288
      %v4343 = vunpack.c.l.b16 %v4289
      %v4344 = vunpack.c.l.b16 %v4290
      %v4345 = vunpack.c.l.b16 %v4291
      %v4346 = vunpack.c.l.b16 %v4292
      %v4347 = vunpack.c.l.b16 %v4293
      %v4348 = vunpack.c.l.b16 %v4294
      %v4349 = vunpack.c.l.b16 %v4295
      %v4350 = vunpack.c.l.b16 %v4296
      %v4351 = vunpack.c.l.b16 %v4297
      %v4352 = vunpack.c.l.b16 %v4298
      %v4353 = vunpack.c.l.b16 %v4299
      %v4354 = vunpack.c.l.b16 %v4300
      %v4355 = vunpack.c.l.b16 %v4301
      %v4356 = vunpack.c.l.b16 %v4302
      %v4357 = vpack.c.b16 %v4342, %v4341
      %v4358 = vpack.c.b16 %v4344, %v4343
      %v4359 = vpack.c.b16 %v4346, %v4345
      %v4360 = vpack.c.b16 %v4348, %v4347
      %v4361 = vpack.c.b16 %v4350, %v4349
      %v4362 = vpack.c.b16 %v4352, %v4351
      %v4363 = vpack.c.b16 %v4354, %v4353
      %v4364 = vpack.c.b16 %v4356, %v4355
      %4373 = vmatprep.subr.bf16.mxu0 0
      %4374 = vmatpush1.bf16.msra.mxu0 %v4357
      %4375 = vmatprep.subr.bf16.mxu0 0
      %4376 = vmatpush1.bf16.msra.mxu0 %v4358
      %4377 = vmatprep.subr.bf16.mxu0 0
      %4378 = vmatpush1.bf16.msra.mxu0 %v4359
      %4379 = vmatprep.subr.bf16.mxu0 0
      %4380 = vmatpush1.bf16.msra.mxu0 %v4360
      %4381 = vmatprep.subr.bf16.mxu0 0
      %4382 = vmatpush1.bf16.msra.mxu0 %v4361
      %4383 = vmatprep.subr.bf16.mxu0 0
      %4384 = vmatpush1.bf16.msra.mxu0 %v4362
      %4385 = vmatprep.subr.bf16.mxu0 0
      %4386 = vmatpush1.bf16.msra.mxu0 %v4363
      %4387 = vmatprep.subr.bf16.mxu0 0
      %4388 = vmatpush1.bf16.msra.mxu0 %v4364
      %4389 = vmatprep.subr.bf16.mxu0 0
      %4390 = vmatpush1.bf16.msra.mxu0 0
      %4391 = vmatprep.subr.bf16.mxu0 0
      %4392 = vmatpush1.bf16.msra.mxu0 0
      %4393 = vmatprep.subr.bf16.mxu0 0
      %4394 = vmatpush1.bf16.msra.mxu0 0
      %4395 = vmatprep.subr.bf16.mxu0 0
      %4396 = vmatpush1.bf16.msra.mxu0 0
      %4397 = vmatprep.subr.bf16.mxu0 0
      %4398 = vmatpush1.bf16.msra.mxu0 0
      %4399 = vmatprep.subr.bf16.mxu0 0
      %4400 = vmatpush1.bf16.msra.mxu0 0
      %4401 = vmatprep.subr.bf16.mxu0 0
      %4402 = vmatpush1.bf16.msra.mxu0 0
      %4403 = vmatprep.subr.bf16.mxu0 0
      %4404 = vmatpush1.bf16.msra.mxu0 0
      %4405 = vmatprep.mubr.bf16.mxu0 0
      %4406 = vmatmul.mubr.bf16.gmra.mrb[0].mxu0 %v4307
      %v4407 = vpop.f32.mrb[0].mxu0
      %v4408 = vadd.f32 0.0, %v4407
      %v4409 = vpop.f32.mrb[0].mxu0
      %v4410 = vpop.f32.mrb[0].mxu0
      %v4411 = vadd.f32 0.0, %v4410
      %v4412 = vpop.f32.mrb[0].mxu0
      %4413 = vmatprep.mubr.bf16.mxu0 0
      %4414 = vmatmul.mubr.bf16.gmra.mrb[0].mxu0 %v4309
      %v4415 = vpop.f32.mrb[0].mxu0
      %v4416 = vadd.f32 0.0, %v4415
      %v4417 = vpop.f32.mrb[0].mxu0
      %v4418 = vpop.f32.mrb[0].mxu0
      %v4419 = vadd.f32 0.0, %v4418
      %v4420 = vpop.f32.mrb[0].mxu0
      %4421 = vmatprep.mubr.bf16.mxu0 0
      %4422 = vmatmul.mubr.bf16.gmra.mrb[0].mxu0 %v4311
      %v4423 = vpop.f32.mrb[0].mxu0
      %v4424 = vadd.f32 0.0, %v4423
      %v4425 = vpop.f32.mrb[0].mxu0
      %v4426 = vpop.f32.mrb[0].mxu0
      %v4427 = vadd.f32 0.0, %v4426
      %v4428 = vpop.f32.mrb[0].mxu0
      %4429 = vmatprep.mubr.bf16.mxu0 0
      %4430 = vmatmul.mubr.bf16.gmra.mrb[0].mxu0 %v4313
      %v4431 = vpop.f32.mrb[0].mxu0
      %v4432 = vadd.f32 0.0, %v4431
      %v4433 = vpop.f32.mrb[0].mxu0
      %v4434 = vpop.f32.mrb[0].mxu0
      %v4435 = vadd.f32 0.0, %v4434
      %v4436 = vpop.f32.mrb[0].mxu0
      %4437 = vmatprep.mubr.bf16.mxu0 0
      %4438 = vmatmul.mubr.bf16.gmra.mrb[0].mxu0 %v4315
      %v4439 = vpop.f32.mrb[0].mxu0
      %v4440 = vadd.f32 0.0, %v4439
      %v4441 = vpop.f32.mrb[0].mxu0
      %v4442 = vpop.f32.mrb[0].mxu0
      %v4443 = vadd.f32 0.0, %v4442
      %v4444 = vpop.f32.mrb[0].mxu0
      %4445 = vmatprep.mubr.bf16.mxu0 0
      %4446 = vmatmul.mubr.bf16.gmra.mrb[0].mxu0 %v4317
      %v4447 = vpop.f32.mrb[0].mxu0
      %v4448 = vadd.f32 0.0, %v4447
      %v4449 = vpop.f32.mrb[0].mxu0
      %v4450 = vpop.f32.mrb[0].mxu0
      %v4451 = vadd.f32 0.0, %v4450
      %v4452 = vpop.f32.mrb[0].mxu0
      %4453 = vmatprep.mubr.bf16.mxu0 0
      %4454 = vmatmul.mubr.bf16.gmra.mrb[0].mxu0 %v4316
      %v4455 = vpop.f32.mrb[0].mxu0
      %v4456 = vadd.f32 0.0, %v4455
      %v4457 = vpop.f32.mrb[0].mxu0
      %v4458 = vpop.f32.mrb[0].mxu0
      %v4459 = vpop.f32.mrb[0].mxu0
      %4460 = vdwg.mxu0
      %v4461 = vadd.f32 %v4272, %v4408
      %v4462 = vadd.f32 %v4273, %v4411
      %v4463 = vadd.f32 %v4274, %v4416
      %v4464 = vadd.f32 %v4275, %v4419
      %v4465 = vadd.f32 %v4276, %v4424
      %v4466 = vadd.f32 %v4277, %v4427
      %v4467 = vadd.f32 %v4278, %v4432
      %v4468 = vadd.f32 %v4279, %v4435
      %v4469 = vadd.f32 %v4280, %v4440
      %v4470 = vadd.f32 %v4281, %v4443
      %v4471 = vadd.f32 %v4282, %v4448
      %v4472 = vadd.f32 %v4283, %v4451
      %v4473 = vadd.f32 %v4284, %v4456
      %v4474 = vld [vmem:[%s6] sm:$0x1]
      %v4476 = vlaneseq
      %v4477 = vshrl.u32 %v4476, 7
      %v4478 = vsub.s32 0, %v4477
      %v4479 = vrot.slane %v4474, %v4478
      %v4481 = vadd.f32 %v4461, %v4479
      %v4482 = vadd.f32 %v4462, %v4479
      %v4483 = vadd.f32 %v4463, %v4479
      %v4484 = vadd.f32 %v4464, %v4479
      %v4485 = vadd.f32 %v4465, %v4479
      %v4486 = vadd.f32 %v4466, %v4479
      %v4487 = vadd.f32 %v4467, %v4479
      %v4488 = vadd.f32 %v4468, %v4479
      %v4489 = vadd.f32 %v4469, %v4479
      %v4490 = vadd.f32 %v4470, %v4479
      %v4491 = vadd.f32 %v4471, %v4479
      %v4492 = vadd.f32 %v4472, %v4479
      %v4493 = vadd.f32 %v4473, %v4479
      %vm4508 = vcmask 1043456
      %v4509 = vrot.slane %v613, 4
      %v4510 = vrot.slane %v614, 4
      %v4511 = vsel %vm4508, %v4509, %v4510
      %v4512 = vrot.slane %v615, 4
      %v4513 = vsel %vm4508, %v4510, %v4512
      %v4514 = vrot.slane %v616, 4
      %v4515 = vsel %vm4508, %v4512, %v4514
      %v4516 = vrot.slane %v617, 4
      %v4517 = vsel %vm4508, %v4514, %v4516
      %v4518 = vrot.slane %v618, 4
      %v4519 = vsel %vm4508, %v4516, %v4518
      %v4520 = vrot.slane %v619, 4
      %v4521 = vsel %vm4508, %v4518, %v4520
      %v4522 = vrot.slane %v620, 4
      %v4523 = vsel %vm4508, %v4520, %v4522
      %v4524 = vrot.slane %v621, 4
      %v4525 = vsel %vm4508, %v4522, %v4524
      %v4526 = vrot.slane %v622, 4
      %v4527 = vsel %vm4508, %v4524, %v4526
      %v4528 = vrot.slane %v623, 4
      %v4529 = vsel %vm4508, %v4526, %v4528
      %v4530 = vrot.slane %v624, 4
      %v4531 = vsel %vm4508, %v4528, %v4530
      %v4532 = vrot.slane %v625, 4
      %v4533 = vsel %vm4508, %v4530, %v4532
      %v4534 = vrot.slane %v626, 4
      %v4535 = vsel %vm4508, %v4532, %v4534
      %v4549 = vadd.f32 %v4481, %v4511
      %v4550 = vadd.f32 %v4482, %v4513
      %v4551 = vadd.f32 %v4483, %v4515
      %v4552 = vadd.f32 %v4484, %v4517
      %v4553 = vadd.f32 %v4485, %v4519
      %v4554 = vadd.f32 %v4486, %v4521
      %v4555 = vadd.f32 %v4487, %v4523
      %v4556 = vadd.f32 %v4488, %v4525
      %v4557 = vadd.f32 %v4489, %v4527
      %v4558 = vadd.f32 %v4490, %v4529
      %v4559 = vadd.f32 %v4491, %v4531
      %v4560 = vadd.f32 %v4492, %v4533
      %v4561 = vadd.f32 %v4493, %v4535
      %v4562 = vmax.f32 %v4549, 0.0
      %v4563 = vmax.f32 %v4550, 0.0
      %v4564 = vmax.f32 %v4551, 0.0
      %v4565 = vmax.f32 %v4552, 0.0
      %v4566 = vmax.f32 %v4553, 0.0
      %v4567 = vmax.f32 %v4554, 0.0
      %v4568 = vmax.f32 %v4555, 0.0
      %v4569 = vmax.f32 %v4556, 0.0
      %v4570 = vmax.f32 %v4557, 0.0
      %v4571 = vmax.f32 %v4558, 0.0
      %v4572 = vmax.f32 %v4559, 0.0
      %v4573 = vmax.f32 %v4560, 0.0
      %v4574 = vmax.f32 %v4561, 0.0
      %4575 = vst [vmem:[%s305] sm:$0xff] %v4562
      %4576 = vst [vmem:[%s305 + $0x8] sm:$0xff] %v4563
      %4577 = vst [vmem:[%s305 + $0x10] sm:$0xff] %v4564
      %4578 = vst [vmem:[%s305 + $0x18] sm:$0xff] %v4565
      %4579 = vst [vmem:[%s305 + $0x20] sm:$0xff] %v4566
      %4580 = vst [vmem:[%s305 + $0x28] sm:$0xff] %v4567
      %4581 = vst [vmem:[%s305 + $0x30] sm:$0xff] %v4568
      %4582 = vst [vmem:[%s305 + $0x38] sm:$0xff] %v4569
      %4583 = vst [vmem:[%s305 + $0x40] sm:$0xff] %v4570
      %4584 = vst [vmem:[%s305 + $0x48] sm:$0xff] %v4571
      %4585 = vst [vmem:[%s305 + $0x50] sm:$0xff] %v4572
      %4586 = vst [vmem:[%s305 + $0x58] sm:$0xff] %v4573
      %4587 = vst [vmem:[%s305 + $0x60] sm:$0xff] %v4574
      %p4588 = scmp.lt.s32.totalorder %s19, 1
      %s4589 = scalar_select %p4588, %s19, 1
      %s4590 = smul.addr %s4589, 13
      %s4591 = smul.addr %s4590, 8
      %s4592 = scalar_lea.vmem %s8, %s4591
      // Predicated region
      $region53: #{down_block_forward.1} parent=51 // pred_check
        %p4593 = pneg %p210
      $region54: #{down_block_forward.1} parent=51 // pred_check_branch
        %4595 = sbr.rel (%p4593) target = $region56
      $region55: #{down_block_forward.1} parent=51 // pred_region
        _
      $region56: #{down_block_forward.1} parent=51 // pred_fallthru
        _
    $region52: #{down_block_forward.1} parent=5 // pred_fallthru
      _
    %p4596 = scmp.le.s32.totalorder 2, %s14
    // Predicated region
    $region57: #{down_block_forward.1} parent=5 // pred_check
      %p4597 = pneg %p4596
    $region58: #{down_block_forward.1} parent=5 // pred_check_branch
      %4599 = sbr.rel (%p4597) target = $region60
    $region59: #{down_block_forward.1} parent=5 // pred_region
      %s4600 = ssub.s32 %s14, 2
      // Predicated region
      $region61: #{down_block_forward.1} parent=59 // pred_check
        %p4601 = pneg %p216
      $region62: #{down_block_forward.1} parent=59 // pred_check_branch
        %4603 = sbr.rel (%p4601) target = $region64
      $region63: #{down_block_forward.1} parent=59 // pred_region
        %p4604 = scmp.lt.s32.totalorder %s20, 1
        %s4605 = scalar_select %p4604, %s20, 1
        %s4606 = smul.addr %s4605, 13
        %s4607 = smul.addr %s4606, 8
        %s4608 = scalar_lea.vmem %s8, %s4607
      $region64: #{down_block_forward.1} parent=59 // pred_fallthru
        _
    $region60: #{down_block_forward.1} parent=5 // pred_fallthru
      _
  $region6: #{down_block_forward.1} parent=0 // loop_footer
    %s18 = sadd.s32 1, %s14
  $region7: #{down_block_forward.1} parent=0 // loop_footer_branch
    %13 = sbr.rel target = $region3
  $region8: #{down_block_forward.1} parent=0 // loop_exit
    _

</llo_original>
